<compile_context>
chip_gen: v6e
topology: v6e:2x2x1
jax: 0.10.0
libtpu: 0.0.40
codegen_flags: <defaults>
</compile_context>

<pallas_src>
import functools
import math

import jax
import jax.numpy as jnp
from jax.experimental import pallas as pl
from jax.experimental.pallas import tpu as pltpu


# --------------------------------------------------------------------------
# Kernel 1: fused input embedding + temporal conv + embedding adds + pos-enc.
# Tokens are ordered (b, s): row = b * S + s.  Grid is over b.
# --------------------------------------------------------------------------
def _embed_conv_kernel(x_ref, t_ref, rs_ref, wa_ref, pe_ref,
                       emb_wt_ref, emb_b_ref, conv_wt_ref, conv_b_ref,
                       week_wt_ref, week_b_ref, wa_wt_ref, wa_b_ref,
                       o_ref):
    S = x_ref.shape[0]
    b = pl.program_id(0)

    # input embedding: nn.Linear(input_dim, H)  (weight pre-transposed to (D_in, H))
    emb = jnp.dot(x_ref[...], emb_wt_ref[...],
                  preferred_element_type=jnp.float32) + emb_b_ref[...]

    # Conv1d(H, H, kernel=3, padding=1) along s, expressed with shift matrices so the
    # whole conv is matmuls (no strided loads, no masked partial stores):
    #   out(s) = x(s-1) @ W0^T + x(s) @ W1^T + x(s+1) @ W2^T + b
    r = jax.lax.broadcasted_iota(jnp.int32, (S, S), 0)
    c = jax.lax.broadcasted_iota(jnp.int32, (S, S), 1)
    sh_down = (r == c + 1).astype(jnp.float32)   # row s picks row s-1 (zero at s=0)
    sh_up = (r == c - 1).astype(jnp.float32)     # row s picks row s+1 (zero at s=S-1)

    y0 = jnp.dot(emb, conv_wt_ref[0], preferred_element_type=jnp.float32)
    y1 = jnp.dot(emb, conv_wt_ref[1], preferred_element_type=jnp.float32)
    y2 = jnp.dot(emb, conv_wt_ref[2], preferred_element_type=jnp.float32)
    conv = (jnp.dot(sh_down, y0, preferred_element_type=jnp.float32)
            + y1
            + jnp.dot(sh_up, y2, preferred_element_type=jnp.float32)
            + conv_b_ref[...])

    # time-aware week embedding FC (lookup done outside; FC fused here)
    t = jnp.dot(t_ref[...], week_wt_ref[...],
                preferred_element_type=jnp.float32) + week_b_ref[...]

    # per-batch rows: region embedding, week-ahead embedding (+ its FC), pos-enc pe[b]
    rs_row = rs_ref[pl.ds(b, 1), :]
    wa_row = wa_ref[pl.ds(b, 1), :]
    wa = jnp.dot(wa_row, wa_wt_ref[...],
                 preferred_element_type=jnp.float32) + wa_b_ref[...]
    pe_row = pe_ref[pl.ds(b, 1), :]

    # conv_out + time_emb + region_emb + week_ahead_emb + positional encoding
    o_ref[...] = conv + t + rs_row + wa + pe_row


def _embed_conv_call(p, x_t, t_lookup, rs, wa_lookup, pe_b, *, S, B, H, D_in):
    def full(shape):
        return pl.BlockSpec(shape, lambda b, n=len(shape): (0,) * n)

    return pl.pallas_call(
        _embed_conv_kernel,
        out_shape=jax.ShapeDtypeStruct((B * S, H), jnp.float32),
        grid=(B,),
        in_specs=[
            pl.BlockSpec((S, D_in), lambda b: (b, 0)),   # x tokens of batch b
            pl.BlockSpec((S, H), lambda b: (b, 0)),      # week-embedding lookups of batch b
            full((B, H)),                                # region embedding rows
            full((B, H)),                                # week-ahead embedding rows
            full((B, H)),                                # positional encoding rows pe[:B]
            full((D_in, H)), full((1, H)),               # input Linear (w^T, b)
            full((3, H, H)), full((1, H)),               # Conv1d taps (k, Cin, Cout), bias
            full((H, H)), full((1, H)),                  # time-embedding FC
            full((H, H)), full((1, H)),                  # week-ahead FC
        ],
        out_specs=pl.BlockSpec((S, H), lambda b: (b, 0)),
        compiler_params=pltpu.CompilerParams(dimension_semantics=("parallel",)),
    )(x_t, t_lookup, rs, wa_lookup, pe_b,
      p["emb_wt"], p["emb_b"], p["conv_wt"], p["conv_b"],
      p["week_fc_wt"], p["week_fc_b"], p["wa_fc_wt"], p["wa_fc_b"])


# --------------------------------------------------------------------------
# Kernel 2: fully fused nn.TransformerEncoderLayer (post-norm, relu, eval).
# Tokens (M, H) = (B*S, H) ordered (b, s); attention runs over b within each s.
# --------------------------------------------------------------------------
def _encoder_layer_kernel(tok_ref, wq_ref, bq_ref, wk_ref, bk_ref, wv_ref, bv_ref,
                          wo_ref, bo_ref, w1_ref, b1_ref, w2_ref, b2_ref,
                          ln1g_ref, ln1b_ref, ln2g_ref, ln2b_ref,
                          o_ref, *, num_heads, seq_groups, eps):
    x = tok_ref[...]                                   # (M, H) f32
    M, H = x.shape
    hd = H // num_heads
    scale = 1.0 / math.sqrt(hd)

    xb = x.astype(jnp.bfloat16)
    q = (jnp.dot(xb, wq_ref[...], preferred_element_type=jnp.float32) + bq_ref[...]) * scale
    k = jnp.dot(xb, wk_ref[...], preferred_element_type=jnp.float32) + bk_ref[...]
    v = jnp.dot(xb, wv_ref[...], preferred_element_type=jnp.float32) + bv_ref[...]
    kb = k.astype(jnp.bfloat16)

    # Attention group mask: row = b*S + s, tokens attend within the same s (= row % S).
    ri = jax.lax.broadcasted_iota(jnp.int32, (M, M), 0)
    ci = jax.lax.broadcasted_iota(jnp.int32, (M, M), 1)
    same_group = (ri % seq_groups) == (ci % seq_groups)

    # All heads computed in-kernel; head selection via lane masks (no reshapes/slices).
    lane = jax.lax.broadcasted_iota(jnp.int32, (1, H), 1)
    attn = jnp.zeros((M, H), jnp.float32)
    for h in range(num_heads):
        head_mask = (lane >= h * hd) & (lane < (h + 1) * hd)
        qh = jnp.where(head_mask, q, 0.0).astype(jnp.bfloat16)
        s = jnp.dot(qh, kb.T, preferred_element_type=jnp.float32)      # head-h scores
        s = jnp.where(same_group, s, -1e30)
        m = jnp.max(s, axis=-1, keepdims=True)
        p = jnp.exp(s - m)
        p = p * pl.reciprocal(jnp.sum(p, axis=-1, keepdims=True), approx=True)
        vh = jnp.where(head_mask, v, 0.0).astype(jnp.bfloat16)
        attn = attn + jnp.dot(p.astype(jnp.bfloat16), vh,
                              preferred_element_type=jnp.float32)

    a = jnp.dot(attn.astype(jnp.bfloat16), wo_ref[...],
                preferred_element_type=jnp.float32) + bo_ref[...]

    # residual + LayerNorm1 (f32)
    h1 = x + a
    mu = jnp.mean(h1, axis=-1, keepdims=True)
    var = jnp.mean(jnp.square(h1 - mu), axis=-1, keepdims=True)
    h1 = (h1 - mu) * jax.lax.rsqrt(var + eps) * ln1g_ref[...] + ln1b_ref[...]

    # feed-forward: Linear -> ReLU -> Linear
    f = jnp.dot(h1.astype(jnp.bfloat16), w1_ref[...],
                preferred_element_type=jnp.float32) + b1_ref[...]
    f = jnp.maximum(f, 0.0)
    f = jnp.dot(f.astype(jnp.bfloat16), w2_ref[...],
                preferred_element_type=jnp.float32) + b2_ref[...]

    # residual + LayerNorm2 (f32)
    h2 = h1 + f
    mu2 = jnp.mean(h2, axis=-1, keepdims=True)
    var2 = jnp.mean(jnp.square(h2 - mu2), axis=-1, keepdims=True)
    o_ref[...] = (h2 - mu2) * jax.lax.rsqrt(var2 + eps) * ln2g_ref[...] + ln2b_ref[...]


def _encoder_layer_call(lp, tok, *, num_heads, seq_groups):
    M, H = tok.shape
    F = lp["w1"].shape[1]

    def full(shape):
        return pl.BlockSpec(shape, lambda i, n=len(shape): (0,) * n)

    kernel = functools.partial(_encoder_layer_kernel, num_heads=num_heads,
                               seq_groups=seq_groups, eps=1e-5)
    return pl.pallas_call(
        kernel,
        out_shape=jax.ShapeDtypeStruct((M, H), jnp.float32),
        grid=(1,),
        in_specs=[
            full((M, H)),
            full((H, H)), full((1, H)),      # q projection
            full((H, H)), full((1, H)),      # k projection
            full((H, H)), full((1, H)),      # v projection
            full((H, H)), full((1, H)),      # out projection
            full((H, F)), full((1, F)),      # FFN linear1
            full((F, H)), full((1, H)),      # FFN linear2
            full((1, H)), full((1, H)),      # LayerNorm1 gamma/beta
            full((1, H)), full((1, H)),      # LayerNorm2 gamma/beta
        ],
        out_specs=full((M, H)),
        compiler_params=pltpu.CompilerParams(dimension_semantics=("arbitrary",)),
    )(tok, lp["wq"], lp["bq"], lp["wk"], lp["bk"], lp["wv"], lp["bv"],
      lp["wo"], lp["bo"], lp["w1"], lp["b1"], lp["w2"], lp["b2"],
      lp["ln1_g"], lp["ln1_b"], lp["ln2_g"], lp["ln2_b"])


# --------------------------------------------------------------------------
# Parameters (pre-transposed / pre-cast once; kernel-ready layouts)
# --------------------------------------------------------------------------
def init_params(key, input_dim, hidden_dim, num_layers, num_heads,
                num_regions, num_aheads=4, dim_ff=2048, max_len=64):
    H = hidden_dim

    def nrm(k, shape, scale=0.05, dtype=jnp.float32):
        return (scale * jax.random.normal(k, shape, dtype=jnp.float32)).astype(dtype)

    keys = iter(jax.random.split(key, 16 + 16 * num_layers))
    p = {
        # nn.Linear(input_dim, H): weight stored pre-transposed as (K, N)
        "emb_wt": nrm(next(keys), (input_dim, H)),
        "emb_b": nrm(next(keys), (1, H)),
        # nn.Conv1d(H, H, 3, padding=1): torch weight (Cout, Cin, 3) stored as (3, Cin, Cout)
        "conv_wt": nrm(next(keys), (3, H, H)),
        "conv_b": nrm(next(keys), (1, H)),
        "region_emb": nrm(next(keys), (num_regions, H)),
        "week_emb": nrm(next(keys), (53 + 1, H)),
        "week_fc_wt": nrm(next(keys), (H, H)),
        "week_fc_b": nrm(next(keys), (1, H)),
        "wa_emb": nrm(next(keys), (num_aheads + 1, H)),
        "wa_fc_wt": nrm(next(keys), (H, H)),
        "wa_fc_b": nrm(next(keys), (1, H)),
    }

    # sinusoidal positional encoding buffer (same formula as the PyTorch module)
    position = jnp.arange(max_len, dtype=jnp.float32)[:, None]
    div_term = jnp.exp(jnp.arange(0, H, 2, dtype=jnp.float32) * (-math.log(10000.0) / H))
    pe = jnp.zeros((max_len, H), dtype=jnp.float32)
    pe = pe.at[:, 0::2].set(jnp.sin(position * div_term))
    pe = pe.at[:, 1::2].set(jnp.cos(position * div_term))
    p["pe"] = pe

    layers = []
    for _ in range(num_layers):
        layers.append({
            # packed in_proj split into q/k/v, pre-transposed to (H, H); bf16 MXU operands
            "wq": nrm(next(keys), (H, H), dtype=jnp.bfloat16),
            "bq": nrm(next(keys), (1, H)),
            "wk": nrm(next(keys), (H, H), dtype=jnp.bfloat16),
            "bk": nrm(next(keys), (1, H)),
            "wv": nrm(next(keys), (H, H), dtype=jnp.bfloat16),
            "bv": nrm(next(keys), (1, H)),
            "wo": nrm(next(keys), (H, H), dtype=jnp.bfloat16),
            "bo": nrm(next(keys), (1, H)),
            "w1": nrm(next(keys), (H, dim_ff), dtype=jnp.bfloat16),
            "b1": nrm(next(keys), (1, dim_ff)),
            "w2": nrm(next(keys), (dim_ff, H), dtype=jnp.bfloat16),
            "b2": nrm(next(keys), (1, H)),
            "ln1_g": jnp.ones((1, H), jnp.float32),
            "ln1_b": jnp.zeros((1, H), jnp.float32),
            "ln2_g": jnp.ones((1, H), jnp.float32),
            "ln2_b": jnp.zeros((1, H), jnp.float32),
        })
    p["layers"] = layers
    return p


# --------------------------------------------------------------------------
# Forward pass
# --------------------------------------------------------------------------
def transformer_encoder_forward(params, x, region_ids, week_ids, week_ahead_id,
                                *, num_heads):
    S, B, D_in = x.shape
    H = params["emb_wt"].shape[1]
    assert H % num_heads == 0

    # tokens in (b, s) order == (L=B, N=S) seen by the seq-first encoder
    x_t = jnp.transpose(x, (1, 0, 2)).reshape(B * S, D_in)
    # embedding table gathers (XLA glue)
    t_lookup = jnp.take(params["week_emb"], jnp.transpose(week_ids).reshape(-1), axis=0)
    rs = jnp.take(params["region_emb"], region_ids, axis=0)                 # (B, H)
    wa_lookup = jnp.take(params["wa_emb"], week_ahead_id, axis=0)           # (B, H)
    pe_b = params["pe"][:B]                                                 # (B, H)

    # fused prologue: Linear + Conv1d + embedding adds + positional encoding
    h = _embed_conv_call(params, x_t, t_lookup, rs, wa_lookup, pe_b,
                         S=S, B=B, H=H, D_in=D_in)                          # (B*S, H)

    # fused transformer encoder layers (sequence axis = B, batch axis = S)
    for lp in params["layers"]:
        h = _encoder_layer_call(lp, h, num_heads=num_heads, seq_groups=S)

    # (B, S, H) -> (S, B, H)
    return jnp.transpose(h.reshape(B, S, H), (1, 0, 2))


# --------------------------------------------------------------------------
# main
# --------------------------------------------------------------------------
if __name__ == "__main__":
    S, B = 8, 2
    input_dim, hidden_dim = 6, 32
    num_layers, num_heads = 2, 4
    num_regions, num_aheads = 10, 4

    key = jax.random.PRNGKey(0)
    kx, kr, kw, ka, kparam = jax.random.split(key, 5)

    x = jax.random.normal(kx, (S, B, input_dim), dtype=jnp.float32)
    region_ids = jax.random.randint(kr, (B,), 0, num_regions)
    week_ids = jax.random.randint(kw, (S, B), 0, 54)
    week_ahead_id = jax.random.randint(ka, (B,), 0, num_aheads + 1)

    params = init_params(kparam, input_dim, hidden_dim, num_layers, num_heads,
                         num_regions, num_aheads)

    fwd = jax.jit(functools.partial(transformer_encoder_forward, num_heads=num_heads))
    out = jax.block_until_ready(fwd(params, x, region_ids, week_ids, week_ahead_id))

    assert out.shape == (S, B, hidden_dim), out.shape
    assert bool(jnp.all(jnp.isfinite(out)))
    print("KERNEL_OK")
</pallas_src>

<mosaic_0001>
module attributes {stable_mosaic.version = 11 : i64} {
  func.func @_embed_conv_kernel(%arg0: i32, %arg1: memref<8x6xf32, #tpu.memory_space<vmem>>, %arg2: memref<8x32xf32, #tpu.memory_space<vmem>>, %arg3: memref<2x32xf32, #tpu.memory_space<vmem>>, %arg4: memref<2x32xf32, #tpu.memory_space<vmem>>, %arg5: memref<2x32xf32, #tpu.memory_space<vmem>>, %arg6: memref<6x32xf32, #tpu.memory_space<vmem>>, %arg7: memref<1x32xf32, #tpu.memory_space<vmem>>, %arg8: memref<3x32x32xf32, #tpu.memory_space<vmem>>, %arg9: memref<1x32xf32, #tpu.memory_space<vmem>>, %arg10: memref<32x32xf32, #tpu.memory_space<vmem>>, %arg11: memref<1x32xf32, #tpu.memory_space<vmem>>, %arg12: memref<32x32xf32, #tpu.memory_space<vmem>>, %arg13: memref<1x32xf32, #tpu.memory_space<vmem>>, %arg14: memref<8x32xf32, #tpu.memory_space<vmem>>) attributes {dimension_semantics = [#tpu.dimension_semantics<parallel>], iteration_bounds = array<i64: 2>, scalar_prefetch = 0 : i64, scratch_operands = 0 : i64, tpu.core_type = #tpu.core_type<tc>, window_params = [{transform_indices = @transform_0, window_bounds = array<i64: 8, 6>}, {transform_indices = @transform_1, window_bounds = array<i64: 8, 32>}, {pipeline_mode = #tpu.pipeline_mode<synchronous>, transform_indices = @transform_2, window_bounds = array<i64: 2, 32>}, {pipeline_mode = #tpu.pipeline_mode<synchronous>, transform_indices = @transform_3, window_bounds = array<i64: 2, 32>}, {pipeline_mode = #tpu.pipeline_mode<synchronous>, transform_indices = @transform_4, window_bounds = array<i64: 2, 32>}, {pipeline_mode = #tpu.pipeline_mode<synchronous>, transform_indices = @transform_5, window_bounds = array<i64: 6, 32>}, {pipeline_mode = #tpu.pipeline_mode<synchronous>, transform_indices = @transform_6, window_bounds = array<i64: 1, 32>}, {pipeline_mode = #tpu.pipeline_mode<synchronous>, transform_indices = @transform_7, window_bounds = array<i64: 3, 32, 32>}, {pipeline_mode = #tpu.pipeline_mode<synchronous>, transform_indices = @transform_8, window_bounds = array<i64: 1, 32>}, {pipeline_mode = #tpu.pipeline_mode<synchronous>, transform_indices = @transform_9, window_bounds = array<i64: 32, 32>}, {pipeline_mode = #tpu.pipeline_mode<synchronous>, transform_indices = @transform_10, window_bounds = array<i64: 1, 32>}, {pipeline_mode = #tpu.pipeline_mode<synchronous>, transform_indices = @transform_11, window_bounds = array<i64: 32, 32>}, {pipeline_mode = #tpu.pipeline_mode<synchronous>, transform_indices = @transform_12, window_bounds = array<i64: 1, 32>}, {transform_indices = @transform_13, window_bounds = array<i64: 8, 32>}]} {
    %c0 = arith.constant 0 : index
    %c0_0 = arith.constant 0 : index
    %0 = vector.load %arg1[%c0, %c0_0] : memref<8x6xf32, #tpu.memory_space<vmem>>, vector<8x6xf32>
    %c0_1 = arith.constant 0 : index
    %c0_2 = arith.constant 0 : index
    %1 = vector.load %arg6[%c0_1, %c0_2] : memref<6x32xf32, #tpu.memory_space<vmem>>, vector<6x32xf32>
    %cst = arith.constant dense<0.000000e+00> : vector<8x32xf32>
    %2 = tpu.matmul %0, %1, %cst {dimension_numbers = #tpu.dot_dimension_numbers<[1], [0], [0], [1], [0, 0, 1, 1], [], []>} : vector<8x6xf32>, vector<6x32xf32>, vector<8x32xf32> -> vector<8x32xf32>
    %c0_3 = arith.constant 0 : index
    %c0_4 = arith.constant 0 : index
    %3 = vector.load %arg7[%c0_3, %c0_4] : memref<1x32xf32, #tpu.memory_space<vmem>>, vector<1x32xf32>
    %4 = vector.broadcast %3 : vector<1x32xf32> to vector<8x32xf32>
    %5 = arith.addf %2, %4 : vector<8x32xf32>
    %6 = tpu.iota {dimensions = array<i32: 0>} : vector<8x8xi32>
    %7 = tpu.iota {dimensions = array<i32: 1>} : vector<8x8xi32>
    %c1_i32 = arith.constant 1 : i32
    %8 = vector.broadcast %c1_i32 : i32 to vector<8x8xi32>
    %9 = arith.addi %7, %8 : vector<8x8xi32>
    %10 = arith.cmpi eq, %6, %9 : vector<8x8xi32>
    %11 = arith.extui %10 : vector<8x8xi1> to vector<8x8xi32>
    %12 = arith.sitofp %11 : vector<8x8xi32> to vector<8x8xf32>
    %c1_i32_5 = arith.constant 1 : i32
    %13 = vector.broadcast %c1_i32_5 : i32 to vector<8x8xi32>
    %14 = arith.subi %7, %13 : vector<8x8xi32>
    %15 = arith.cmpi eq, %6, %14 : vector<8x8xi32>
    %16 = arith.extui %15 : vector<8x8xi1> to vector<8x8xi32>
    %17 = arith.sitofp %16 : vector<8x8xi32> to vector<8x8xf32>
    %c0_6 = arith.constant 0 : index
    %c0_7 = arith.constant 0 : index
    %c0_8 = arith.constant 0 : index
    %18 = vector.load %arg8[%c0_6, %c0_7, %c0_8] : memref<3x32x32xf32, #tpu.memory_space<vmem>>, vector<1x32x32xf32>
    %19 = vector.shape_cast %18 : vector<1x32x32xf32> to vector<32x32xf32>
    %cst_9 = arith.constant dense<0.000000e+00> : vector<8x32xf32>
    %20 = tpu.matmul %5, %19, %cst_9 {dimension_numbers = #tpu.dot_dimension_numbers<[1], [0], [0], [1], [0, 0, 1, 1], [], []>} : vector<8x32xf32>, vector<32x32xf32>, vector<8x32xf32> -> vector<8x32xf32>
    %c1 = arith.constant 1 : index
    %c0_10 = arith.constant 0 : index
    %c0_11 = arith.constant 0 : index
    %21 = vector.load %arg8[%c1, %c0_10, %c0_11] : memref<3x32x32xf32, #tpu.memory_space<vmem>>, vector<1x32x32xf32>
    %22 = vector.shape_cast %21 : vector<1x32x32xf32> to vector<32x32xf32>
    %cst_12 = arith.constant dense<0.000000e+00> : vector<8x32xf32>
    %23 = tpu.matmul %5, %22, %cst_12 {dimension_numbers = #tpu.dot_dimension_numbers<[1], [0], [0], [1], [0, 0, 1, 1], [], []>} : vector<8x32xf32>, vector<32x32xf32>, vector<8x32xf32> -> vector<8x32xf32>
    %c2 = arith.constant 2 : index
    %c0_13 = arith.constant 0 : index
    %c0_14 = arith.constant 0 : index
    %24 = vector.load %arg8[%c2, %c0_13, %c0_14] : memref<3x32x32xf32, #tpu.memory_space<vmem>>, vector<1x32x32xf32>
    %25 = vector.shape_cast %24 : vector<1x32x32xf32> to vector<32x32xf32>
    %cst_15 = arith.constant dense<0.000000e+00> : vector<8x32xf32>
    %26 = tpu.matmul %5, %25, %cst_15 {dimension_numbers = #tpu.dot_dimension_numbers<[1], [0], [0], [1], [0, 0, 1, 1], [], []>} : vector<8x32xf32>, vector<32x32xf32>, vector<8x32xf32> -> vector<8x32xf32>
    %cst_16 = arith.constant dense<0.000000e+00> : vector<8x32xf32>
    %27 = tpu.matmul %12, %20, %cst_16 {dimension_numbers = #tpu.dot_dimension_numbers<[1], [0], [0], [1], [0, 0, 1, 1], [], []>} : vector<8x8xf32>, vector<8x32xf32>, vector<8x32xf32> -> vector<8x32xf32>
    %28 = arith.addf %27, %23 : vector<8x32xf32>
    %cst_17 = arith.constant dense<0.000000e+00> : vector<8x32xf32>
    %29 = tpu.matmul %17, %26, %cst_17 {dimension_numbers = #tpu.dot_dimension_numbers<[1], [0], [0], [1], [0, 0, 1, 1], [], []>} : vector<8x8xf32>, vector<8x32xf32>, vector<8x32xf32> -> vector<8x32xf32>
    %30 = arith.addf %28, %29 : vector<8x32xf32>
    %c0_18 = arith.constant 0 : index
    %c0_19 = arith.constant 0 : index
    %31 = vector.load %arg9[%c0_18, %c0_19] : memref<1x32xf32, #tpu.memory_space<vmem>>, vector<1x32xf32>
    %32 = vector.broadcast %31 : vector<1x32xf32> to vector<8x32xf32>
    %33 = arith.addf %30, %32 : vector<8x32xf32>
    %c0_20 = arith.constant 0 : index
    %c0_21 = arith.constant 0 : index
    %34 = vector.load %arg2[%c0_20, %c0_21] : memref<8x32xf32, #tpu.memory_space<vmem>>, vector<8x32xf32>
    %c0_22 = arith.constant 0 : index
    %c0_23 = arith.constant 0 : index
    %35 = vector.load %arg10[%c0_22, %c0_23] : memref<32x32xf32, #tpu.memory_space<vmem>>, vector<32x32xf32>
    %cst_24 = arith.constant dense<0.000000e+00> : vector<8x32xf32>
    %36 = tpu.matmul %34, %35, %cst_24 {dimension_numbers = #tpu.dot_dimension_numbers<[1], [0], [0], [1], [0, 0, 1, 1], [], []>} : vector<8x32xf32>, vector<32x32xf32>, vector<8x32xf32> -> vector<8x32xf32>
    %c0_25 = arith.constant 0 : index
    %c0_26 = arith.constant 0 : index
    %37 = vector.load %arg11[%c0_25, %c0_26] : memref<1x32xf32, #tpu.memory_space<vmem>>, vector<1x32xf32>
    %38 = vector.broadcast %37 : vector<1x32xf32> to vector<8x32xf32>
    %39 = arith.addf %36, %38 : vector<8x32xf32>
    %40 = arith.index_cast %arg0 : i32 to index
    %c0_27 = arith.constant 0 : index
    %41 = vector.load %arg3[%40, %c0_27] : memref<2x32xf32, #tpu.memory_space<vmem>>, vector<1x32xf32>
    %42 = arith.index_cast %arg0 : i32 to index
    %c0_28 = arith.constant 0 : index
    %43 = vector.load %arg4[%42, %c0_28] : memref<2x32xf32, #tpu.memory_space<vmem>>, vector<1x32xf32>
    %c0_29 = arith.constant 0 : index
    %c0_30 = arith.constant 0 : index
    %44 = vector.load %arg12[%c0_29, %c0_30] : memref<32x32xf32, #tpu.memory_space<vmem>>, vector<32x32xf32>
    %cst_31 = arith.constant dense<0.000000e+00> : vector<1x32xf32>
    %45 = tpu.matmul %43, %44, %cst_31 {dimension_numbers = #tpu.dot_dimension_numbers<[1], [0], [0], [1], [0, 0, 1, 1], [], []>} : vector<1x32xf32>, vector<32x32xf32>, vector<1x32xf32> -> vector<1x32xf32>
    %c0_32 = arith.constant 0 : index
    %c0_33 = arith.constant 0 : index
    %46 = vector.load %arg13[%c0_32, %c0_33] : memref<1x32xf32, #tpu.memory_space<vmem>>, vector<1x32xf32>
    %47 = arith.addf %45, %46 : vector<1x32xf32>
    %48 = arith.index_cast %arg0 : i32 to index
    %c0_34 = arith.constant 0 : index
    %49 = vector.load %arg5[%48, %c0_34] : memref<2x32xf32, #tpu.memory_space<vmem>>, vector<1x32xf32>
    %50 = arith.addf %33, %39 : vector<8x32xf32>
    %51 = vector.broadcast %41 : vector<1x32xf32> to vector<8x32xf32>
    %52 = arith.addf %50, %51 : vector<8x32xf32>
    %53 = vector.broadcast %47 : vector<1x32xf32> to vector<8x32xf32>
    %54 = arith.addf %52, %53 : vector<8x32xf32>
    %55 = vector.broadcast %49 : vector<1x32xf32> to vector<8x32xf32>
    %56 = arith.addf %54, %55 : vector<8x32xf32>
    %c0_35 = arith.constant 0 : index
    %c0_36 = arith.constant 0 : index
    %57 = vector.load %arg14[%c0_35, %c0_36] : memref<8x32xf32, #tpu.memory_space<vmem>>, vector<8x32xf32>
    tpu.vector_store %arg14[%c0_35, %c0_36], %56 {strides = array<i32>} : memref<8x32xf32, #tpu.memory_space<vmem>>, vector<8x32xf32>,
    return
  }
  func.func @transform_0(%arg0: i32) -> (i32, i32) {
    %c0_i32 = arith.constant 0 : i32
    %c0_i32_0 = arith.constant 0 : i32
    return %arg0, %c0_i32 : i32, i32
  }
  func.func @transform_1(%arg0: i32) -> (i32, i32) {
    %c0_i32 = arith.constant 0 : i32
    %c0_i32_0 = arith.constant 0 : i32
    return %arg0, %c0_i32 : i32, i32
  }
  func.func @transform_2(%arg0: i32) -> (i32, i32) {
    %c0_i32 = arith.constant 0 : i32
    %c0_i32_0 = arith.constant 0 : i32
    %c0_i32_1 = arith.constant 0 : i32
    return %c0_i32, %c0_i32_0 : i32, i32
  }
  func.func @transform_3(%arg0: i32) -> (i32, i32) {
    %c0_i32 = arith.constant 0 : i32
    %c0_i32_0 = arith.constant 0 : i32
    %c0_i32_1 = arith.constant 0 : i32
    return %c0_i32, %c0_i32_0 : i32, i32
  }
  func.func @transform_4(%arg0: i32) -> (i32, i32) {
    %c0_i32 = arith.constant 0 : i32
    %c0_i32_0 = arith.constant 0 : i32
    %c0_i32_1 = arith.constant 0 : i32
    return %c0_i32, %c0_i32_0 : i32, i32
  }
  func.func @transform_5(%arg0: i32) -> (i32, i32) {
    %c0_i32 = arith.constant 0 : i32
    %c0_i32_0 = arith.constant 0 : i32
    %c0_i32_1 = arith.constant 0 : i32
    return %c0_i32, %c0_i32_0 : i32, i32
  }
  func.func @transform_6(%arg0: i32) -> (i32, i32) {
    %c0_i32 = arith.constant 0 : i32
    %c0_i32_0 = arith.constant 0 : i32
    %c0_i32_1 = arith.constant 0 : i32
    return %c0_i32, %c0_i32_0 : i32, i32
  }
  func.func @transform_7(%arg0: i32) -> (i32, i32, i32) {
    %c0_i32 = arith.constant 0 : i32
    %c0_i32_0 = arith.constant 0 : i32
    %c0_i32_1 = arith.constant 0 : i32
    %c0_i32_2 = arith.constant 0 : i32
    return %c0_i32, %c0_i32_0, %c0_i32_1 : i32, i32, i32
  }
  func.func @transform_8(%arg0: i32) -> (i32, i32) {
    %c0_i32 = arith.constant 0 : i32
    %c0_i32_0 = arith.constant 0 : i32
    %c0_i32_1 = arith.constant 0 : i32
    return %c0_i32, %c0_i32_0 : i32, i32
  }
  func.func @transform_9(%arg0: i32) -> (i32, i32) {
    %c0_i32 = arith.constant 0 : i32
    %c0_i32_0 = arith.constant 0 : i32
    %c0_i32_1 = arith.constant 0 : i32
    return %c0_i32, %c0_i32_0 : i32, i32
  }
  func.func @transform_10(%arg0: i32) -> (i32, i32) {
    %c0_i32 = arith.constant 0 : i32
    %c0_i32_0 = arith.constant 0 : i32
    %c0_i32_1 = arith.constant 0 : i32
    return %c0_i32, %c0_i32_0 : i32, i32
  }
  func.func @transform_11(%arg0: i32) -> (i32, i32) {
    %c0_i32 = arith.constant 0 : i32
    %c0_i32_0 = arith.constant 0 : i32
    %c0_i32_1 = arith.constant 0 : i32
    return %c0_i32, %c0_i32_0 : i32, i32
  }
  func.func @transform_12(%arg0: i32) -> (i32, i32) {
    %c0_i32 = arith.constant 0 : i32
    %c0_i32_0 = arith.constant 0 : i32
    %c0_i32_1 = arith.constant 0 : i32
    return %c0_i32, %c0_i32_0 : i32, i32
  }
  func.func @transform_13(%arg0: i32) -> (i32, i32) {
    %c0_i32 = arith.constant 0 : i32
    %c0_i32_0 = arith.constant 0 : i32
    return %arg0, %c0_i32 : i32, i32
  }
}

module attributes {stable_mosaic.version = 11 : i64} {
  func.func @_encoder_layer_kernel(%arg0: i32, %arg1: memref<16x32xf32, #tpu.memory_space<vmem>>, %arg2: memref<32x32xbf16, #tpu.memory_space<vmem>>, %arg3: memref<1x32xf32, #tpu.memory_space<vmem>>, %arg4: memref<32x32xbf16, #tpu.memory_space<vmem>>, %arg5: memref<1x32xf32, #tpu.memory_space<vmem>>, %arg6: memref<32x32xbf16, #tpu.memory_space<vmem>>, %arg7: memref<1x32xf32, #tpu.memory_space<vmem>>, %arg8: memref<32x32xbf16, #tpu.memory_space<vmem>>, %arg9: memref<1x32xf32, #tpu.memory_space<vmem>>, %arg10: memref<32x2048xbf16, #tpu.memory_space<vmem>>, %arg11: memref<1x2048xf32, #tpu.memory_space<vmem>>, %arg12: memref<2048x32xbf16, #tpu.memory_space<vmem>>, %arg13: memref<1x32xf32, #tpu.memory_space<vmem>>, %arg14: memref<1x32xf32, #tpu.memory_space<vmem>>, %arg15: memref<1x32xf32, #tpu.memory_space<vmem>>, %arg16: memref<1x32xf32, #tpu.memory_space<vmem>>, %arg17: memref<1x32xf32, #tpu.memory_space<vmem>>, %arg18: memref<16x32xf32, #tpu.memory_space<vmem>>) attributes {dimension_semantics = [#tpu.dimension_semantics<arbitrary>], iteration_bounds = array<i64: 1>, scalar_prefetch = 0 : i64, scratch_operands = 0 : i64, tpu.core_type = #tpu.core_type<tc>, window_params = [{pipeline_mode = #tpu.pipeline_mode<synchronous>, transform_indices = @transform_0, window_bounds = array<i64: 16, 32>}, {pipeline_mode = #tpu.pipeline_mode<synchronous>, transform_indices = @transform_1, window_bounds = array<i64: 32, 32>}, {pipeline_mode = #tpu.pipeline_mode<synchronous>, transform_indices = @transform_2, window_bounds = array<i64: 1, 32>}, {pipeline_mode = #tpu.pipeline_mode<synchronous>, transform_indices = @transform_3, window_bounds = array<i64: 32, 32>}, {pipeline_mode = #tpu.pipeline_mode<synchronous>, transform_indices = @transform_4, window_bounds = array<i64: 1, 32>}, {pipeline_mode = #tpu.pipeline_mode<synchronous>, transform_indices = @transform_5, window_bounds = array<i64: 32, 32>}, {pipeline_mode = #tpu.pipeline_mode<synchronous>, transform_indices = @transform_6, window_bounds = array<i64: 1, 32>}, {pipeline_mode = #tpu.pipeline_mode<synchronous>, transform_indices = @transform_7, window_bounds = array<i64: 32, 32>}, {pipeline_mode = #tpu.pipeline_mode<synchronous>, transform_indices = @transform_8, window_bounds = array<i64: 1, 32>}, {pipeline_mode = #tpu.pipeline_mode<synchronous>, transform_indices = @transform_9, window_bounds = array<i64: 32, 2048>}, {pipeline_mode = #tpu.pipeline_mode<synchronous>, transform_indices = @transform_10, window_bounds = array<i64: 1, 2048>}, {pipeline_mode = #tpu.pipeline_mode<synchronous>, transform_indices = @transform_11, window_bounds = array<i64: 2048, 32>}, {pipeline_mode = #tpu.pipeline_mode<synchronous>, transform_indices = @transform_12, window_bounds = array<i64: 1, 32>}, {pipeline_mode = #tpu.pipeline_mode<synchronous>, transform_indices = @transform_13, window_bounds = array<i64: 1, 32>}, {pipeline_mode = #tpu.pipeline_mode<synchronous>, transform_indices = @transform_14, window_bounds = array<i64: 1, 32>}, {pipeline_mode = #tpu.pipeline_mode<synchronous>, transform_indices = @transform_15, window_bounds = array<i64: 1, 32>}, {pipeline_mode = #tpu.pipeline_mode<synchronous>, transform_indices = @transform_16, window_bounds = array<i64: 1, 32>}, {pipeline_mode = #tpu.pipeline_mode<synchronous>, transform_indices = @transform_17, window_bounds = array<i64: 16, 32>}]} {
    %c0 = arith.constant 0 : index
    %c0_0 = arith.constant 0 : index
    %0 = vector.load %arg1[%c0, %c0_0] : memref<16x32xf32, #tpu.memory_space<vmem>>, vector<16x32xf32>
    %1 = arith.truncf %0 : vector<16x32xf32> to vector<16x32xbf16>
    %c0_1 = arith.constant 0 : index
    %c0_2 = arith.constant 0 : index
    %2 = vector.load %arg2[%c0_1, %c0_2] : memref<32x32xbf16, #tpu.memory_space<vmem>>, vector<32x32xbf16>
    %cst = arith.constant dense<0.000000e+00> : vector<16x32xf32>
    %3 = tpu.matmul %1, %2, %cst {dimension_numbers = #tpu.dot_dimension_numbers<[1], [0], [0], [1], [0, 0, 1, 1], [], []>} : vector<16x32xbf16>, vector<32x32xbf16>, vector<16x32xf32> -> vector<16x32xf32>
    %c0_3 = arith.constant 0 : index
    %c0_4 = arith.constant 0 : index
    %4 = vector.load %arg3[%c0_3, %c0_4] : memref<1x32xf32, #tpu.memory_space<vmem>>, vector<1x32xf32>
    %5 = vector.broadcast %4 : vector<1x32xf32> to vector<16x32xf32>
    %6 = arith.addf %3, %5 : vector<16x32xf32>
    %cst_5 = arith.constant 0.353553385 : f32
    %7 = vector.broadcast %cst_5 : f32 to vector<16x32xf32>
    %8 = arith.mulf %6, %7 : vector<16x32xf32>
    %c0_6 = arith.constant 0 : index
    %c0_7 = arith.constant 0 : index
    %9 = vector.load %arg4[%c0_6, %c0_7] : memref<32x32xbf16, #tpu.memory_space<vmem>>, vector<32x32xbf16>
    %cst_8 = arith.constant dense<0.000000e+00> : vector<16x32xf32>
    %10 = tpu.matmul %1, %9, %cst_8 {dimension_numbers = #tpu.dot_dimension_numbers<[1], [0], [0], [1], [0, 0, 1, 1], [], []>} : vector<16x32xbf16>, vector<32x32xbf16>, vector<16x32xf32> -> vector<16x32xf32>
    %c0_9 = arith.constant 0 : index
    %c0_10 = arith.constant 0 : index
    %11 = vector.load %arg5[%c0_9, %c0_10] : memref<1x32xf32, #tpu.memory_space<vmem>>, vector<1x32xf32>
    %12 = vector.broadcast %11 : vector<1x32xf32> to vector<16x32xf32>
    %13 = arith.addf %10, %12 : vector<16x32xf32>
    %c0_11 = arith.constant 0 : index
    %c0_12 = arith.constant 0 : index
    %14 = vector.load %arg6[%c0_11, %c0_12] : memref<32x32xbf16, #tpu.memory_space<vmem>>, vector<32x32xbf16>
    %cst_13 = arith.constant dense<0.000000e+00> : vector<16x32xf32>
    %15 = tpu.matmul %1, %14, %cst_13 {dimension_numbers = #tpu.dot_dimension_numbers<[1], [0], [0], [1], [0, 0, 1, 1], [], []>} : vector<16x32xbf16>, vector<32x32xbf16>, vector<16x32xf32> -> vector<16x32xf32>
    %c0_14 = arith.constant 0 : index
    %c0_15 = arith.constant 0 : index
    %16 = vector.load %arg7[%c0_14, %c0_15] : memref<1x32xf32, #tpu.memory_space<vmem>>, vector<1x32xf32>
    %17 = vector.broadcast %16 : vector<1x32xf32> to vector<16x32xf32>
    %18 = arith.addf %15, %17 : vector<16x32xf32>
    %19 = arith.truncf %13 : vector<16x32xf32> to vector<16x32xbf16>
    %20 = tpu.iota {dimensions = array<i32: 0>} : vector<16x16xi32>
    %21 = tpu.iota {dimensions = array<i32: 1>} : vector<16x16xi32>
    %c8_i32 = arith.constant 8 : i32
    %c0_i32 = arith.constant 0 : i32
    %22 = arith.cmpi eq, %c8_i32, %c0_i32 : i32
    %c1_i32 = arith.constant 1 : i32
    %23 = arith.select %22, %c1_i32, %c8_i32 : i32
    %24 = vector.broadcast %23 : i32 to vector<16x16xi32>
    %25 = arith.remsi %20, %24 : vector<16x16xi32>
    %c0_i32_16 = arith.constant 0 : i32
    %26 = vector.broadcast %c0_i32_16 : i32 to vector<16x16xi32>
    %27 = arith.cmpi ne, %25, %26 : vector<16x16xi32>
    %c0_i32_17 = arith.constant 0 : i32
    %28 = vector.broadcast %c0_i32_17 : i32 to vector<16x16xi32>
    %29 = arith.cmpi slt, %25, %28 : vector<16x16xi32>
    %c0_i32_18 = arith.constant 0 : i32
    %30 = arith.cmpi slt, %23, %c0_i32_18 : i32
    %31 = vector.broadcast %30 : i1 to vector<16x16xi1>
    %32 = vector.broadcast %31 : vector<16x16xi1> to vector<16x16xi1>
    %33 = arith.xori %29, %32 : vector<16x16xi1>
    %34 = arith.andi %33, %27 : vector<16x16xi1>
    %35 = vector.broadcast %23 : i32 to vector<16x16xi32>
    %36 = arith.addi %25, %35 : vector<16x16xi32>
    %37 = arith.select %34, %36, %25 : vector<16x16xi1>, vector<16x16xi32>
    %c8_i32_19 = arith.constant 8 : i32
    %c0_i32_20 = arith.constant 0 : i32
    %38 = arith.cmpi eq, %c8_i32_19, %c0_i32_20 : i32
    %c1_i32_21 = arith.constant 1 : i32
    %39 = arith.select %38, %c1_i32_21, %c8_i32_19 : i32
    %40 = vector.broadcast %39 : i32 to vector<16x16xi32>
    %41 = arith.remsi %21, %40 : vector<16x16xi32>
    %c0_i32_22 = arith.constant 0 : i32
    %42 = vector.broadcast %c0_i32_22 : i32 to vector<16x16xi32>
    %43 = arith.cmpi ne, %41, %42 : vector<16x16xi32>
    %c0_i32_23 = arith.constant 0 : i32
    %44 = vector.broadcast %c0_i32_23 : i32 to vector<16x16xi32>
    %45 = arith.cmpi slt, %41, %44 : vector<16x16xi32>
    %c0_i32_24 = arith.constant 0 : i32
    %46 = arith.cmpi slt, %39, %c0_i32_24 : i32
    %47 = vector.broadcast %46 : i1 to vector<16x16xi1>
    %48 = vector.broadcast %47 : vector<16x16xi1> to vector<16x16xi1>
    %49 = arith.xori %45, %48 : vector<16x16xi1>
    %50 = arith.andi %49, %43 : vector<16x16xi1>
    %51 = vector.broadcast %39 : i32 to vector<16x16xi32>
    %52 = arith.addi %41, %51 : vector<16x16xi32>
    %53 = arith.select %50, %52, %41 : vector<16x16xi1>, vector<16x16xi32>
    %54 = arith.cmpi eq, %37, %53 : vector<16x16xi32>
    %55 = tpu.iota {dimensions = array<i32: 1>} : vector<1x32xi32>
    %cst_25 = arith.constant 0.000000e+00 : f32
    %56 = vector.broadcast %cst_25 : f32 to vector<16x32xf32>
    %c0_i32_26 = arith.constant 0 : i32
    %57 = vector.broadcast %c0_i32_26 : i32 to vector<1x32xi32>
    %58 = arith.cmpi sge, %55, %57 : vector<1x32xi32>
    %c8_i32_27 = arith.constant 8 : i32
    %59 = vector.broadcast %c8_i32_27 : i32 to vector<1x32xi32>
    %60 = arith.cmpi slt, %55, %59 : vector<1x32xi32>
    %61 = arith.andi %58, %60 : vector<1x32xi1>
    %cst_28 = arith.constant 0.000000e+00 : f32
    %62 = vector.shape_cast %61 : vector<1x32xi1> to vector<1x32xi1>
    %63 = vector.broadcast %62 : vector<1x32xi1> to vector<16x32xi1>
    %64 = vector.broadcast %cst_28 : f32 to vector<16x32xf32>
    %65 = arith.select %63, %8, %64 : vector<16x32xi1>, vector<16x32xf32>
    %66 = arith.truncf %65 : vector<16x32xf32> to vector<16x32xbf16>
    %67 = tpu.transpose %19, [1, 0] : vector<16x32xbf16> -> vector<32x16xbf16>
    %cst_29 = arith.constant dense<0.000000e+00> : vector<16x16xf32>
    %68 = tpu.matmul %66, %67, %cst_29 {dimension_numbers = #tpu.dot_dimension_numbers<[1], [0], [0], [1], [0, 0, 1, 1], [], []>} : vector<16x32xbf16>, vector<32x16xbf16>, vector<16x16xf32> -> vector<16x16xf32>
    %cst_30 = arith.constant -1.000000e+30 : f32
    %69 = vector.broadcast %cst_30 : f32 to vector<16x16xf32>
    %70 = arith.select %54, %68, %69 : vector<16x16xi1>, vector<16x16xf32>
    %cst_31 = arith.constant dense<0xFF800000> : vector<16xf32>
    %71 = vector.multi_reduction <maximumf>, %70, %cst_31 [1] : vector<16x16xf32> to vector<16xf32>
    %72 = vector.shape_cast %71 : vector<16xf32> to vector<16x1xf32>
    %73 = vector.broadcast %72 : vector<16x1xf32> to vector<16x16xf32>
    %74 = arith.subf %70, %73 : vector<16x16xf32>
    %75 = math.exp %74 : vector<16x16xf32>
    %cst_32 = arith.constant dense<0.000000e+00> : vector<16xf32>
    %76 = vector.multi_reduction <add>, %75, %cst_32 [1] : vector<16x16xf32> to vector<16xf32>
    %77 = vector.shape_cast %76 : vector<16xf32> to vector<16x1xf32>
    %78 = tpu.reciprocal %77 {approx = true} : vector<16x1xf32> -> vector<16x1xf32>
    %79 = vector.broadcast %78 : vector<16x1xf32> to vector<16x16xf32>
    %80 = arith.mulf %75, %79 : vector<16x16xf32>
    %cst_33 = arith.constant 0.000000e+00 : f32
    %81 = vector.shape_cast %61 : vector<1x32xi1> to vector<1x32xi1>
    %82 = vector.broadcast %81 : vector<1x32xi1> to vector<16x32xi1>
    %83 = vector.broadcast %cst_33 : f32 to vector<16x32xf32>
    %84 = arith.select %82, %18, %83 : vector<16x32xi1>, vector<16x32xf32>
    %85 = arith.truncf %84 : vector<16x32xf32> to vector<16x32xbf16>
    %86 = arith.truncf %80 : vector<16x16xf32> to vector<16x16xbf16>
    %cst_34 = arith.constant dense<0.000000e+00> : vector<16x32xf32>
    %87 = tpu.matmul %86, %85, %cst_34 {dimension_numbers = #tpu.dot_dimension_numbers<[1], [0], [0], [1], [0, 0, 1, 1], [], []>} : vector<16x16xbf16>, vector<16x32xbf16>, vector<16x32xf32> -> vector<16x32xf32>
    %88 = arith.addf %56, %87 : vector<16x32xf32>
    %c8_i32_35 = arith.constant 8 : i32
    %89 = vector.broadcast %c8_i32_35 : i32 to vector<1x32xi32>
    %90 = arith.cmpi sge, %55, %89 : vector<1x32xi32>
    %c16_i32 = arith.constant 16 : i32
    %91 = vector.broadcast %c16_i32 : i32 to vector<1x32xi32>
    %92 = arith.cmpi slt, %55, %91 : vector<1x32xi32>
    %93 = arith.andi %90, %92 : vector<1x32xi1>
    %cst_36 = arith.constant 0.000000e+00 : f32
    %94 = vector.shape_cast %93 : vector<1x32xi1> to vector<1x32xi1>
    %95 = vector.broadcast %94 : vector<1x32xi1> to vector<16x32xi1>
    %96 = vector.broadcast %cst_36 : f32 to vector<16x32xf32>
    %97 = arith.select %95, %8, %96 : vector<16x32xi1>, vector<16x32xf32>
    %98 = arith.truncf %97 : vector<16x32xf32> to vector<16x32xbf16>
    %99 = tpu.transpose %19, [1, 0] : vector<16x32xbf16> -> vector<32x16xbf16>
    %cst_37 = arith.constant dense<0.000000e+00> : vector<16x16xf32>
    %100 = tpu.matmul %98, %99, %cst_37 {dimension_numbers = #tpu.dot_dimension_numbers<[1], [0], [0], [1], [0, 0, 1, 1], [], []>} : vector<16x32xbf16>, vector<32x16xbf16>, vector<16x16xf32> -> vector<16x16xf32>
    %cst_38 = arith.constant -1.000000e+30 : f32
    %101 = vector.broadcast %cst_38 : f32 to vector<16x16xf32>
    %102 = arith.select %54, %100, %101 : vector<16x16xi1>, vector<16x16xf32>
    %cst_39 = arith.constant dense<0xFF800000> : vector<16xf32>
    %103 = vector.multi_reduction <maximumf>, %102, %cst_39 [1] : vector<16x16xf32> to vector<16xf32>
    %104 = vector.shape_cast %103 : vector<16xf32> to vector<16x1xf32>
    %105 = vector.broadcast %104 : vector<16x1xf32> to vector<16x16xf32>
    %106 = arith.subf %102, %105 : vector<16x16xf32>
    %107 = math.exp %106 : vector<16x16xf32>
    %cst_40 = arith.constant dense<0.000000e+00> : vector<16xf32>
    %108 = vector.multi_reduction <add>, %107, %cst_40 [1] : vector<16x16xf32> to vector<16xf32>
    %109 = vector.shape_cast %108 : vector<16xf32> to vector<16x1xf32>
    %110 = tpu.reciprocal %109 {approx = true} : vector<16x1xf32> -> vector<16x1xf32>
    %111 = vector.broadcast %110 : vector<16x1xf32> to vector<16x16xf32>
    %112 = arith.mulf %107, %111 : vector<16x16xf32>
    %cst_41 = arith.constant 0.000000e+00 : f32
    %113 = vector.shape_cast %93 : vector<1x32xi1> to vector<1x32xi1>
    %114 = vector.broadcast %113 : vector<1x32xi1> to vector<16x32xi1>
    %115 = vector.broadcast %cst_41 : f32 to vector<16x32xf32>
    %116 = arith.select %114, %18, %115 : vector<16x32xi1>, vector<16x32xf32>
    %117 = arith.truncf %116 : vector<16x32xf32> to vector<16x32xbf16>
    %118 = arith.truncf %112 : vector<16x16xf32> to vector<16x16xbf16>
    %cst_42 = arith.constant dense<0.000000e+00> : vector<16x32xf32>
    %119 = tpu.matmul %118, %117, %cst_42 {dimension_numbers = #tpu.dot_dimension_numbers<[1], [0], [0], [1], [0, 0, 1, 1], [], []>} : vector<16x16xbf16>, vector<16x32xbf16>, vector<16x32xf32> -> vector<16x32xf32>
    %120 = arith.addf %88, %119 : vector<16x32xf32>
    %c16_i32_43 = arith.constant 16 : i32
    %121 = vector.broadcast %c16_i32_43 : i32 to vector<1x32xi32>
    %122 = arith.cmpi sge, %55, %121 : vector<1x32xi32>
    %c24_i32 = arith.constant 24 : i32
    %123 = vector.broadcast %c24_i32 : i32 to vector<1x32xi32>
    %124 = arith.cmpi slt, %55, %123 : vector<1x32xi32>
    %125 = arith.andi %122, %124 : vector<1x32xi1>
    %cst_44 = arith.constant 0.000000e+00 : f32
    %126 = vector.shape_cast %125 : vector<1x32xi1> to vector<1x32xi1>
    %127 = vector.broadcast %126 : vector<1x32xi1> to vector<16x32xi1>
    %128 = vector.broadcast %cst_44 : f32 to vector<16x32xf32>
    %129 = arith.select %127, %8, %128 : vector<16x32xi1>, vector<16x32xf32>
    %130 = arith.truncf %129 : vector<16x32xf32> to vector<16x32xbf16>
    %131 = tpu.transpose %19, [1, 0] : vector<16x32xbf16> -> vector<32x16xbf16>
    %cst_45 = arith.constant dense<0.000000e+00> : vector<16x16xf32>
    %132 = tpu.matmul %130, %131, %cst_45 {dimension_numbers = #tpu.dot_dimension_numbers<[1], [0], [0], [1], [0, 0, 1, 1], [], []>} : vector<16x32xbf16>, vector<32x16xbf16>, vector<16x16xf32> -> vector<16x16xf32>
    %cst_46 = arith.constant -1.000000e+30 : f32
    %133 = vector.broadcast %cst_46 : f32 to vector<16x16xf32>
    %134 = arith.select %54, %132, %133 : vector<16x16xi1>, vector<16x16xf32>
    %cst_47 = arith.constant dense<0xFF800000> : vector<16xf32>
    %135 = vector.multi_reduction <maximumf>, %134, %cst_47 [1] : vector<16x16xf32> to vector<16xf32>
    %136 = vector.shape_cast %135 : vector<16xf32> to vector<16x1xf32>
    %137 = vector.broadcast %136 : vector<16x1xf32> to vector<16x16xf32>
    %138 = arith.subf %134, %137 : vector<16x16xf32>
    %139 = math.exp %138 : vector<16x16xf32>
    %cst_48 = arith.constant dense<0.000000e+00> : vector<16xf32>
    %140 = vector.multi_reduction <add>, %139, %cst_48 [1] : vector<16x16xf32> to vector<16xf32>
    %141 = vector.shape_cast %140 : vector<16xf32> to vector<16x1xf32>
    %142 = tpu.reciprocal %141 {approx = true} : vector<16x1xf32> -> vector<16x1xf32>
    %143 = vector.broadcast %142 : vector<16x1xf32> to vector<16x16xf32>
    %144 = arith.mulf %139, %143 : vector<16x16xf32>
    %cst_49 = arith.constant 0.000000e+00 : f32
    %145 = vector.shape_cast %125 : vector<1x32xi1> to vector<1x32xi1>
    %146 = vector.broadcast %145 : vector<1x32xi1> to vector<16x32xi1>
    %147 = vector.broadcast %cst_49 : f32 to vector<16x32xf32>
    %148 = arith.select %146, %18, %147 : vector<16x32xi1>, vector<16x32xf32>
    %149 = arith.truncf %148 : vector<16x32xf32> to vector<16x32xbf16>
    %150 = arith.truncf %144 : vector<16x16xf32> to vector<16x16xbf16>
    %cst_50 = arith.constant dense<0.000000e+00> : vector<16x32xf32>
    %151 = tpu.matmul %150, %149, %cst_50 {dimension_numbers = #tpu.dot_dimension_numbers<[1], [0], [0], [1], [0, 0, 1, 1], [], []>} : vector<16x16xbf16>, vector<16x32xbf16>, vector<16x32xf32> -> vector<16x32xf32>
    %152 = arith.addf %120, %151 : vector<16x32xf32>
    %c24_i32_51 = arith.constant 24 : i32
    %153 = vector.broadcast %c24_i32_51 : i32 to vector<1x32xi32>
    %154 = arith.cmpi sge, %55, %153 : vector<1x32xi32>
    %c32_i32 = arith.constant 32 : i32
    %155 = vector.broadcast %c32_i32 : i32 to vector<1x32xi32>
    %156 = arith.cmpi slt, %55, %155 : vector<1x32xi32>
    %157 = arith.andi %154, %156 : vector<1x32xi1>
    %cst_52 = arith.constant 0.000000e+00 : f32
    %158 = vector.shape_cast %157 : vector<1x32xi1> to vector<1x32xi1>
    %159 = vector.broadcast %158 : vector<1x32xi1> to vector<16x32xi1>
    %160 = vector.broadcast %cst_52 : f32 to vector<16x32xf32>
    %161 = arith.select %159, %8, %160 : vector<16x32xi1>, vector<16x32xf32>
    %162 = arith.truncf %161 : vector<16x32xf32> to vector<16x32xbf16>
    %163 = tpu.transpose %19, [1, 0] : vector<16x32xbf16> -> vector<32x16xbf16>
    %cst_53 = arith.constant dense<0.000000e+00> : vector<16x16xf32>
    %164 = tpu.matmul %162, %163, %cst_53 {dimension_numbers = #tpu.dot_dimension_numbers<[1], [0], [0], [1], [0, 0, 1, 1], [], []>} : vector<16x32xbf16>, vector<32x16xbf16>, vector<16x16xf32> -> vector<16x16xf32>
    %cst_54 = arith.constant -1.000000e+30 : f32
    %165 = vector.broadcast %cst_54 : f32 to vector<16x16xf32>
    %166 = arith.select %54, %164, %165 : vector<16x16xi1>, vector<16x16xf32>
    %cst_55 = arith.constant dense<0xFF800000> : vector<16xf32>
    %167 = vector.multi_reduction <maximumf>, %166, %cst_55 [1] : vector<16x16xf32> to vector<16xf32>
    %168 = vector.shape_cast %167 : vector<16xf32> to vector<16x1xf32>
    %169 = vector.broadcast %168 : vector<16x1xf32> to vector<16x16xf32>
    %170 = arith.subf %166, %169 : vector<16x16xf32>
    %171 = math.exp %170 : vector<16x16xf32>
    %cst_56 = arith.constant dense<0.000000e+00> : vector<16xf32>
    %172 = vector.multi_reduction <add>, %171, %cst_56 [1] : vector<16x16xf32> to vector<16xf32>
    %173 = vector.shape_cast %172 : vector<16xf32> to vector<16x1xf32>
    %174 = tpu.reciprocal %173 {approx = true} : vector<16x1xf32> -> vector<16x1xf32>
    %175 = vector.broadcast %174 : vector<16x1xf32> to vector<16x16xf32>
    %176 = arith.mulf %171, %175 : vector<16x16xf32>
    %cst_57 = arith.constant 0.000000e+00 : f32
    %177 = vector.shape_cast %157 : vector<1x32xi1> to vector<1x32xi1>
    %178 = vector.broadcast %177 : vector<1x32xi1> to vector<16x32xi1>
    %179 = vector.broadcast %cst_57 : f32 to vector<16x32xf32>
    %180 = arith.select %178, %18, %179 : vector<16x32xi1>, vector<16x32xf32>
    %181 = arith.truncf %180 : vector<16x32xf32> to vector<16x32xbf16>
    %182 = arith.truncf %176 : vector<16x16xf32> to vector<16x16xbf16>
    %cst_58 = arith.constant dense<0.000000e+00> : vector<16x32xf32>
    %183 = tpu.matmul %182, %181, %cst_58 {dimension_numbers = #tpu.dot_dimension_numbers<[1], [0], [0], [1], [0, 0, 1, 1], [], []>} : vector<16x16xbf16>, vector<16x32xbf16>, vector<16x32xf32> -> vector<16x32xf32>
    %184 = arith.addf %152, %183 : vector<16x32xf32>
    %185 = arith.truncf %184 : vector<16x32xf32> to vector<16x32xbf16>
    %c0_59 = arith.constant 0 : index
    %c0_60 = arith.constant 0 : index
    %186 = vector.load %arg8[%c0_59, %c0_60] : memref<32x32xbf16, #tpu.memory_space<vmem>>, vector<32x32xbf16>
    %cst_61 = arith.constant dense<0.000000e+00> : vector<16x32xf32>
    %187 = tpu.matmul %185, %186, %cst_61 {dimension_numbers = #tpu.dot_dimension_numbers<[1], [0], [0], [1], [0, 0, 1, 1], [], []>} : vector<16x32xbf16>, vector<32x32xbf16>, vector<16x32xf32> -> vector<16x32xf32>
    %c0_62 = arith.constant 0 : index
    %c0_63 = arith.constant 0 : index
    %188 = vector.load %arg9[%c0_62, %c0_63] : memref<1x32xf32, #tpu.memory_space<vmem>>, vector<1x32xf32>
    %189 = vector.broadcast %188 : vector<1x32xf32> to vector<16x32xf32>
    %190 = arith.addf %187, %189 : vector<16x32xf32>
    %191 = arith.addf %0, %190 : vector<16x32xf32>
    %cst_64 = arith.constant dense<0.000000e+00> : vector<16xf32>
    %192 = vector.multi_reduction <add>, %191, %cst_64 [1] : vector<16x32xf32> to vector<16xf32>
    %193 = vector.shape_cast %192 : vector<16xf32> to vector<16x1xf32>
    %cst_65 = arith.constant 3.200000e+01 : f32
    %194 = vector.broadcast %cst_65 : f32 to vector<16x1xf32>
    %195 = arith.divf %193, %194 : vector<16x1xf32>
    %196 = vector.broadcast %195 : vector<16x1xf32> to vector<16x32xf32>
    %197 = arith.subf %191, %196 : vector<16x32xf32>
    %198 = arith.mulf %197, %197 : vector<16x32xf32>
    %cst_66 = arith.constant dense<0.000000e+00> : vector<16xf32>
    %199 = vector.multi_reduction <add>, %198, %cst_66 [1] : vector<16x32xf32> to vector<16xf32>
    %200 = vector.shape_cast %199 : vector<16xf32> to vector<16x1xf32>
    %cst_67 = arith.constant 3.200000e+01 : f32
    %201 = vector.broadcast %cst_67 : f32 to vector<16x1xf32>
    %202 = arith.divf %200, %201 : vector<16x1xf32>
    %203 = vector.broadcast %195 : vector<16x1xf32> to vector<16x32xf32>
    %204 = arith.subf %191, %203 : vector<16x32xf32>
    %cst_68 = arith.constant 9.99999974E-6 : f32
    %205 = vector.broadcast %cst_68 : f32 to vector<16x1xf32>
    %206 = arith.addf %202, %205 : vector<16x1xf32>
    %207 = math.rsqrt %206 : vector<16x1xf32>
    %208 = vector.broadcast %207 : vector<16x1xf32> to vector<16x32xf32>
    %209 = arith.mulf %204, %208 : vector<16x32xf32>
    %c0_69 = arith.constant 0 : index
    %c0_70 = arith.constant 0 : index
    %210 = vector.load %arg14[%c0_69, %c0_70] : memref<1x32xf32, #tpu.memory_space<vmem>>, vector<1x32xf32>
    %211 = vector.broadcast %210 : vector<1x32xf32> to vector<16x32xf32>
    %212 = arith.mulf %209, %211 : vector<16x32xf32>
    %c0_71 = arith.constant 0 : index
    %c0_72 = arith.constant 0 : index
    %213 = vector.load %arg15[%c0_71, %c0_72] : memref<1x32xf32, #tpu.memory_space<vmem>>, vector<1x32xf32>
    %214 = vector.broadcast %213 : vector<1x32xf32> to vector<16x32xf32>
    %215 = arith.addf %212, %214 : vector<16x32xf32>
    %216 = arith.truncf %215 : vector<16x32xf32> to vector<16x32xbf16>
    %c0_73 = arith.constant 0 : index
    %c0_74 = arith.constant 0 : index
    %217 = vector.load %arg10[%c0_73, %c0_74] : memref<32x2048xbf16, #tpu.memory_space<vmem>>, vector<32x2048xbf16>
    %cst_75 = arith.constant dense<0.000000e+00> : vector<16x2048xf32>
    %218 = tpu.matmul %216, %217, %cst_75 {dimension_numbers = #tpu.dot_dimension_numbers<[1], [0], [0], [1], [0, 0, 1, 1], [], []>} : vector<16x32xbf16>, vector<32x2048xbf16>, vector<16x2048xf32> -> vector<16x2048xf32>
    %c0_76 = arith.constant 0 : index
    %c0_77 = arith.constant 0 : index
    %219 = vector.load %arg11[%c0_76, %c0_77] : memref<1x2048xf32, #tpu.memory_space<vmem>>, vector<1x2048xf32>
    %220 = vector.broadcast %219 : vector<1x2048xf32> to vector<16x2048xf32>
    %221 = arith.addf %218, %220 : vector<16x2048xf32>
    %cst_78 = arith.constant 0.000000e+00 : f32
    %222 = vector.broadcast %cst_78 : f32 to vector<16x2048xf32>
    %223 = arith.maximumf %221, %222 : vector<16x2048xf32>
    %224 = arith.truncf %223 : vector<16x2048xf32> to vector<16x2048xbf16>
    %c0_79 = arith.constant 0 : index
    %c0_80 = arith.constant 0 : index
    %225 = vector.load %arg12[%c0_79, %c0_80] : memref<2048x32xbf16, #tpu.memory_space<vmem>>, vector<2048x32xbf16>
    %cst_81 = arith.constant dense<0.000000e+00> : vector<16x32xf32>
    %226 = tpu.matmul %224, %225, %cst_81 {dimension_numbers = #tpu.dot_dimension_numbers<[1], [0], [0], [1], [0, 0, 1, 1], [], []>} : vector<16x2048xbf16>, vector<2048x32xbf16>, vector<16x32xf32> -> vector<16x32xf32>
    %c0_82 = arith.constant 0 : index
    %c0_83 = arith.constant 0 : index
    %227 = vector.load %arg13[%c0_82, %c0_83] : memref<1x32xf32, #tpu.memory_space<vmem>>, vector<1x32xf32>
    %228 = vector.broadcast %227 : vector<1x32xf32> to vector<16x32xf32>
    %229 = arith.addf %226, %228 : vector<16x32xf32>
    %230 = arith.addf %215, %229 : vector<16x32xf32>
    %cst_84 = arith.constant dense<0.000000e+00> : vector<16xf32>
    %231 = vector.multi_reduction <add>, %230, %cst_84 [1] : vector<16x32xf32> to vector<16xf32>
    %232 = vector.shape_cast %231 : vector<16xf32> to vector<16x1xf32>
    %cst_85 = arith.constant 3.200000e+01 : f32
    %233 = vector.broadcast %cst_85 : f32 to vector<16x1xf32>
    %234 = arith.divf %232, %233 : vector<16x1xf32>
    %235 = vector.broadcast %234 : vector<16x1xf32> to vector<16x32xf32>
    %236 = arith.subf %230, %235 : vector<16x32xf32>
    %237 = arith.mulf %236, %236 : vector<16x32xf32>
    %cst_86 = arith.constant dense<0.000000e+00> : vector<16xf32>
    %238 = vector.multi_reduction <add>, %237, %cst_86 [1] : vector<16x32xf32> to vector<16xf32>
    %239 = vector.shape_cast %238 : vector<16xf32> to vector<16x1xf32>
    %cst_87 = arith.constant 3.200000e+01 : f32
    %240 = vector.broadcast %cst_87 : f32 to vector<16x1xf32>
    %241 = arith.divf %239, %240 : vector<16x1xf32>
    %242 = vector.broadcast %234 : vector<16x1xf32> to vector<16x32xf32>
    %243 = arith.subf %230, %242 : vector<16x32xf32>
    %cst_88 = arith.constant 9.99999974E-6 : f32
    %244 = vector.broadcast %cst_88 : f32 to vector<16x1xf32>
    %245 = arith.addf %241, %244 : vector<16x1xf32>
    %246 = math.rsqrt %245 : vector<16x1xf32>
    %247 = vector.broadcast %246 : vector<16x1xf32> to vector<16x32xf32>
    %248 = arith.mulf %243, %247 : vector<16x32xf32>
    %c0_89 = arith.constant 0 : index
    %c0_90 = arith.constant 0 : index
    %249 = vector.load %arg16[%c0_89, %c0_90] : memref<1x32xf32, #tpu.memory_space<vmem>>, vector<1x32xf32>
    %250 = vector.broadcast %249 : vector<1x32xf32> to vector<16x32xf32>
    %251 = arith.mulf %248, %250 : vector<16x32xf32>
    %c0_91 = arith.constant 0 : index
    %c0_92 = arith.constant 0 : index
    %252 = vector.load %arg17[%c0_91, %c0_92] : memref<1x32xf32, #tpu.memory_space<vmem>>, vector<1x32xf32>
    %253 = vector.broadcast %252 : vector<1x32xf32> to vector<16x32xf32>
    %254 = arith.addf %251, %253 : vector<16x32xf32>
    %c0_93 = arith.constant 0 : index
    %c0_94 = arith.constant 0 : index
    %255 = vector.load %arg18[%c0_93, %c0_94] : memref<16x32xf32, #tpu.memory_space<vmem>>, vector<16x32xf32>
    tpu.vector_store %arg18[%c0_93, %c0_94], %254 {strides = array<i32>} : memref<16x32xf32, #tpu.memory_space<vmem>>, vector<16x32xf32>,
    return
  }
  func.func @transform_0(%arg0: i32) -> (i32, i32) {
    %c0_i32 = arith.constant 0 : i32
    %c0_i32_0 = arith.constant 0 : i32
    %c0_i32_1 = arith.constant 0 : i32
    return %c0_i32, %c0_i32_0 : i32, i32
  }
  func.func @transform_1(%arg0: i32) -> (i32, i32) {
    %c0_i32 = arith.constant 0 : i32
    %c0_i32_0 = arith.constant 0 : i32
    %c0_i32_1 = arith.constant 0 : i32
    return %c0_i32, %c0_i32_0 : i32, i32
  }
  func.func @transform_2(%arg0: i32) -> (i32, i32) {
    %c0_i32 = arith.constant 0 : i32
    %c0_i32_0 = arith.constant 0 : i32
    %c0_i32_1 = arith.constant 0 : i32
    return %c0_i32, %c0_i32_0 : i32, i32
  }
  func.func @transform_3(%arg0: i32) -> (i32, i32) {
    %c0_i32 = arith.constant 0 : i32
    %c0_i32_0 = arith.constant 0 : i32
    %c0_i32_1 = arith.constant 0 : i32
    return %c0_i32, %c0_i32_0 : i32, i32
  }
  func.func @transform_4(%arg0: i32) -> (i32, i32) {
    %c0_i32 = arith.constant 0 : i32
    %c0_i32_0 = arith.constant 0 : i32
    %c0_i32_1 = arith.constant 0 : i32
    return %c0_i32, %c0_i32_0 : i32, i32
  }
  func.func @transform_5(%arg0: i32) -> (i32, i32) {
    %c0_i32 = arith.constant 0 : i32
    %c0_i32_0 = arith.constant 0 : i32
    %c0_i32_1 = arith.constant 0 : i32
    return %c0_i32, %c0_i32_0 : i32, i32
  }
  func.func @transform_6(%arg0: i32) -> (i32, i32) {
    %c0_i32 = arith.constant 0 : i32
    %c0_i32_0 = arith.constant 0 : i32
    %c0_i32_1 = arith.constant 0 : i32
    return %c0_i32, %c0_i32_0 : i32, i32
  }
  func.func @transform_7(%arg0: i32) -> (i32, i32) {
    %c0_i32 = arith.constant 0 : i32
    %c0_i32_0 = arith.constant 0 : i32
    %c0_i32_1 = arith.constant 0 : i32
    return %c0_i32, %c0_i32_0 : i32, i32
  }
  func.func @transform_8(%arg0: i32) -> (i32, i32) {
    %c0_i32 = arith.constant 0 : i32
    %c0_i32_0 = arith.constant 0 : i32
    %c0_i32_1 = arith.constant 0 : i32
    return %c0_i32, %c0_i32_0 : i32, i32
  }
  func.func @transform_9(%arg0: i32) -> (i32, i32) {
    %c0_i32 = arith.constant 0 : i32
    %c0_i32_0 = arith.constant 0 : i32
    %c0_i32_1 = arith.constant 0 : i32
    return %c0_i32, %c0_i32_0 : i32, i32
  }
  func.func @transform_10(%arg0: i32) -> (i32, i32) {
    %c0_i32 = arith.constant 0 : i32
    %c0_i32_0 = arith.constant 0 : i32
    %c0_i32_1 = arith.constant 0 : i32
    return %c0_i32, %c0_i32_0 : i32, i32
  }
  func.func @transform_11(%arg0: i32) -> (i32, i32) {
    %c0_i32 = arith.constant 0 : i32
    %c0_i32_0 = arith.constant 0 : i32
    %c0_i32_1 = arith.constant 0 : i32
    return %c0_i32, %c0_i32_0 : i32, i32
  }
  func.func @transform_12(%arg0: i32) -> (i32, i32) {
    %c0_i32 = arith.constant 0 : i32
    %c0_i32_0 = arith.constant 0 : i32
    %c0_i32_1 = arith.constant 0 : i32
    return %c0_i32, %c0_i32_0 : i32, i32
  }
  func.func @transform_13(%arg0: i32) -> (i32, i32) {
    %c0_i32 = arith.constant 0 : i32
    %c0_i32_0 = arith.constant 0 : i32
    %c0_i32_1 = arith.constant 0 : i32
    return %c0_i32, %c0_i32_0 : i32, i32
  }
  func.func @transform_14(%arg0: i32) -> (i32, i32) {
    %c0_i32 = arith.constant 0 : i32
    %c0_i32_0 = arith.constant 0 : i32
    %c0_i32_1 = arith.constant 0 : i32
    return %c0_i32, %c0_i32_0 : i32, i32
  }
  func.func @transform_15(%arg0: i32) -> (i32, i32) {
    %c0_i32 = arith.constant 0 : i32
    %c0_i32_0 = arith.constant 0 : i32
    %c0_i32_1 = arith.constant 0 : i32
    return %c0_i32, %c0_i32_0 : i32, i32
  }
  func.func @transform_16(%arg0: i32) -> (i32, i32) {
    %c0_i32 = arith.constant 0 : i32
    %c0_i32_0 = arith.constant 0 : i32
    %c0_i32_1 = arith.constant 0 : i32
    return %c0_i32, %c0_i32_0 : i32, i32
  }
  func.func @transform_17(%arg0: i32) -> (i32, i32) {
    %c0_i32 = arith.constant 0 : i32
    %c0_i32_0 = arith.constant 0 : i32
    %c0_i32_1 = arith.constant 0 : i32
    return %c0_i32, %c0_i32_0 : i32, i32
  }
}

</mosaic_0001>

<llo_original>
// kernel: transformer_encoder_forward.3
$region0: #{transformer_encoder_forward.3}
  #allocation0 [shape = 'u32[]', space=smem, size = 0x4, offset = 0x4, fixed_abs, tag = 'smem constant byte address 0x4 - core index']
  #allocation1 [shape = 'u32[144,128]{1,0:T(1,128)}', space=vmem, size = 0x12000, scoped, tag = 'internal scratch']
  %s0 = inlined_call_operand.vmem [shape: f32[16,6], index: 0, kind: input, shape index: {}]
  %s1 = inlined_call_operand.vmem [shape: f32[16,32], index: 1, kind: input, shape index: {}]
  %s2 = inlined_call_operand.vmem [shape: f32[2,32], index: 2, kind: input, shape index: {}]
  %s3 = inlined_call_operand.vmem [shape: f32[2,32], index: 3, kind: input, shape index: {}]
  %s4 = inlined_call_operand.vmem [shape: f32[2,32], index: 4, kind: input, shape index: {}]
  %s5 = inlined_call_operand.vmem [shape: f32[6,32], index: 5, kind: input, shape index: {}]
  %s6 = inlined_call_operand.vmem [shape: f32[1,32], index: 6, kind: input, shape index: {}]
  %s7 = inlined_call_operand.vmem [shape: f32[3,32,32], index: 7, kind: input, shape index: {}]
  %s8 = inlined_call_operand.vmem [shape: f32[1,32], index: 8, kind: input, shape index: {}]
  %s9 = inlined_call_operand.vmem [shape: f32[32,32], index: 9, kind: input, shape index: {}]
  %s10 = inlined_call_operand.vmem [shape: f32[1,32], index: 10, kind: input, shape index: {}]
  %s11 = inlined_call_operand.vmem [shape: f32[32,32], index: 11, kind: input, shape index: {}]
  %s12 = inlined_call_operand.vmem [shape: f32[1,32], index: 12, kind: input, shape index: {}]
  %s13 = inlined_call_operand.vmem [shape: f32[16,32], index: 13, kind: output, shape index: {}]
  %s14 = sld [smem:[#allocation0]]
  $region85: #{transformer_encoder_forward.3} parent=0
    _
  %s16 = ssub.s32 1, %s14
  %s17 = scalar_select 0, %s16, %s14
  loop: start=0, step=1, limit=4
  $region2: #{transformer_encoder_forward.3} parent=0 // loop_pre_header
    _
  $region3: #{transformer_encoder_forward.3} parent=0 // loop_header
    %s19 = sphi 0, %s23
    %p20 = scmp.ge.s32.totalorder %s19, 4
    %s29 = sphi 0, %s31
    %s32 = sphi 0, %s29
    %s33 = sphi 0, %s32
    %s49 = sphi 0, %s33
    %s55 = sphi 0, %s57
    %s58 = sphi 0, %s55
    %s59 = sphi 0, %s58
    %s75 = sphi 0, %s59
    %s79 = sphi 0, %s79
    %s81 = sphi 0, %s79
    %s82 = sphi 0, %s81
    %s96 = sphi 0, %s82
    %s100 = sphi 0, %s100
    %s102 = sphi 0, %s100
    %s103 = sphi 0, %s102
    %s117 = sphi 0, %s103
    %s121 = sphi 0, %s121
    %s123 = sphi 0, %s121
    %s124 = sphi 0, %s123
    %s138 = sphi 0, %s124
    %s142 = sphi 0, %s142
    %s144 = sphi 0, %s142
    %s145 = sphi 0, %s144
    %s159 = sphi 0, %s145
    %s163 = sphi 0, %s163
    %s165 = sphi 0, %s163
    %s166 = sphi 0, %s165
    %s180 = sphi 0, %s166
    %s184 = sphi 0, %s184
    %s186 = sphi 0, %s184
    %s187 = sphi 0, %s186
    %s201 = sphi 0, %s187
    %s205 = sphi 0, %s205
    %s207 = sphi 0, %s205
    %s208 = sphi 0, %s207
    %s222 = sphi 0, %s208
    %s226 = sphi 0, %s226
    %s228 = sphi 0, %s226
    %s229 = sphi 0, %s228
    %s243 = sphi 0, %s229
    %s247 = sphi 0, %s247
    %s249 = sphi 0, %s247
    %s250 = sphi 0, %s249
    %s264 = sphi 0, %s250
    %s268 = sphi 0, %s268
    %s270 = sphi 0, %s268
    %s271 = sphi 0, %s270
    %s285 = sphi 0, %s271
    %s289 = sphi 0, %s289
    %s291 = sphi 0, %s289
    %s292 = sphi 0, %s291
    %s306 = sphi 0, %s292
    %s312 = sphi 0, %s314
    %s315 = sphi 0, %s312
    %s316 = sphi 0, %s315
    %s332 = sphi 0, %s316
  $region4: #{transformer_encoder_forward.3} parent=0 // loop_header_branch
    %22 = sbr.rel (%p20) target = $region8
  $region5: #{transformer_encoder_forward.3} parent=0 // loop_body
    %s24 = ssub.s32 %s19, 1
    %s25 = ssub.s32 %s19, 2
    %s26 = sadd.s32 %s19, 1
    %s27 = ssub.s32 %s19, %s26
    %p28 = scmp.eq.s32.totalorder %s27, 0
    %s30 = sadd.s32 %s29, 1
    %s31 = scalar_select %p28, %s29, %s30
    %p34 = pneg %p28
    %p35 = scmp.eq.s32.totalorder %s19, 1
    %p36 = por %p34, %p35
    %p37 = scmp.ne.s32.totalorder %s29, %s32
    %p38 = scmp.eq.s32.totalorder %s19, 0
    %p39 = por %p37, %p38
    %p40 = scmp.ne.s32.totalorder %s29, %s32
    %p41 = scmp.eq.s32.totalorder %s24, 1
    %p42 = por %p40, %p41
    %p43 = scmp.ne.s32.totalorder %s32, %s33
    %p44 = scmp.eq.s32.totalorder %s24, 0
    %p45 = por %p43, %p44
    %p46 = scmp.ne.s32.totalorder %s32, %s33
    %p47 = scmp.eq.s32.totalorder %s25, 1
    %p48 = por %p46, %p47
    %p50 = scmp.ne.s32.totalorder %s33, %s49
    %p51 = scmp.eq.s32.totalorder %s25, 0
    %p52 = por %p50, %p51
    %s53 = ssub.s32 %s19, %s26
    %p54 = scmp.eq.s32.totalorder %s53, 0
    %s56 = sadd.s32 %s55, 1
    %s57 = scalar_select %p54, %s55, %s56
    %p60 = pneg %p54
    %p61 = scmp.eq.s32.totalorder %s19, 1
    %p62 = por %p60, %p61
    %p63 = scmp.ne.s32.totalorder %s55, %s58
    %p64 = scmp.eq.s32.totalorder %s19, 0
    %p65 = por %p63, %p64
    %p66 = scmp.ne.s32.totalorder %s55, %s58
    %p67 = scmp.eq.s32.totalorder %s24, 1
    %p68 = por %p66, %p67
    %p69 = scmp.ne.s32.totalorder %s58, %s59
    %p70 = scmp.eq.s32.totalorder %s24, 0
    %p71 = por %p69, %p70
    %p72 = scmp.ne.s32.totalorder %s58, %s59
    %p73 = scmp.eq.s32.totalorder %s25, 1
    %p74 = por %p72, %p73
    %p76 = scmp.ne.s32.totalorder %s59, %s75
    %p77 = scmp.eq.s32.totalorder %s25, 0
    %p78 = por %p76, %p77
    %s80 = sadd.s32 %s79, 1
    %p83 = scmp.eq.s32.totalorder %s19, 1
    %p84 = scmp.ne.s32.totalorder %s79, %s81
    %p85 = scmp.eq.s32.totalorder %s19, 0
    %p86 = por %p84, %p85
    %p87 = scmp.ne.s32.totalorder %s79, %s81
    %p88 = scmp.eq.s32.totalorder %s24, 1
    %p89 = por %p87, %p88
    %p90 = scmp.ne.s32.totalorder %s81, %s82
    %p91 = scmp.eq.s32.totalorder %s24, 0
    %p92 = por %p90, %p91
    %p93 = scmp.ne.s32.totalorder %s81, %s82
    %p94 = scmp.eq.s32.totalorder %s25, 1
    %p95 = por %p93, %p94
    %p97 = scmp.ne.s32.totalorder %s82, %s96
    %p98 = scmp.eq.s32.totalorder %s25, 0
    %p99 = por %p97, %p98
    %s101 = sadd.s32 %s100, 1
    %p104 = scmp.eq.s32.totalorder %s19, 1
    %p105 = scmp.ne.s32.totalorder %s100, %s102
    %p106 = scmp.eq.s32.totalorder %s19, 0
    %p107 = por %p105, %p106
    %p108 = scmp.ne.s32.totalorder %s100, %s102
    %p109 = scmp.eq.s32.totalorder %s24, 1
    %p110 = por %p108, %p109
    %p111 = scmp.ne.s32.totalorder %s102, %s103
    %p112 = scmp.eq.s32.totalorder %s24, 0
    %p113 = por %p111, %p112
    %p114 = scmp.ne.s32.totalorder %s102, %s103
    %p115 = scmp.eq.s32.totalorder %s25, 1
    %p116 = por %p114, %p115
    %p118 = scmp.ne.s32.totalorder %s103, %s117
    %p119 = scmp.eq.s32.totalorder %s25, 0
    %p120 = por %p118, %p119
    %s122 = sadd.s32 %s121, 1
    %p125 = scmp.eq.s32.totalorder %s19, 1
    %p126 = scmp.ne.s32.totalorder %s121, %s123
    %p127 = scmp.eq.s32.totalorder %s19, 0
    %p128 = por %p126, %p127
    %p129 = scmp.ne.s32.totalorder %s121, %s123
    %p130 = scmp.eq.s32.totalorder %s24, 1
    %p131 = por %p129, %p130
    %p132 = scmp.ne.s32.totalorder %s123, %s124
    %p133 = scmp.eq.s32.totalorder %s24, 0
    %p134 = por %p132, %p133
    %p135 = scmp.ne.s32.totalorder %s123, %s124
    %p136 = scmp.eq.s32.totalorder %s25, 1
    %p137 = por %p135, %p136
    %p139 = scmp.ne.s32.totalorder %s124, %s138
    %p140 = scmp.eq.s32.totalorder %s25, 0
    %p141 = por %p139, %p140
    %s143 = sadd.s32 %s142, 1
    %p146 = scmp.eq.s32.totalorder %s19, 1
    %p147 = scmp.ne.s32.totalorder %s142, %s144
    %p148 = scmp.eq.s32.totalorder %s19, 0
    %p149 = por %p147, %p148
    %p150 = scmp.ne.s32.totalorder %s142, %s144
    %p151 = scmp.eq.s32.totalorder %s24, 1
    %p152 = por %p150, %p151
    %p153 = scmp.ne.s32.totalorder %s144, %s145
    %p154 = scmp.eq.s32.totalorder %s24, 0
    %p155 = por %p153, %p154
    %p156 = scmp.ne.s32.totalorder %s144, %s145
    %p157 = scmp.eq.s32.totalorder %s25, 1
    %p158 = por %p156, %p157
    %p160 = scmp.ne.s32.totalorder %s145, %s159
    %p161 = scmp.eq.s32.totalorder %s25, 0
    %p162 = por %p160, %p161
    %s164 = sadd.s32 %s163, 1
    %p167 = scmp.eq.s32.totalorder %s19, 1
    %p168 = scmp.ne.s32.totalorder %s163, %s165
    %p169 = scmp.eq.s32.totalorder %s19, 0
    %p170 = por %p168, %p169
    %p171 = scmp.ne.s32.totalorder %s163, %s165
    %p172 = scmp.eq.s32.totalorder %s24, 1
    %p173 = por %p171, %p172
    %p174 = scmp.ne.s32.totalorder %s165, %s166
    %p175 = scmp.eq.s32.totalorder %s24, 0
    %p176 = por %p174, %p175
    %p177 = scmp.ne.s32.totalorder %s165, %s166
    %p178 = scmp.eq.s32.totalorder %s25, 1
    %p179 = por %p177, %p178
    %p181 = scmp.ne.s32.totalorder %s166, %s180
    %p182 = scmp.eq.s32.totalorder %s25, 0
    %p183 = por %p181, %p182
    %s185 = sadd.s32 %s184, 1
    %p188 = scmp.eq.s32.totalorder %s19, 1
    %p189 = scmp.ne.s32.totalorder %s184, %s186
    %p190 = scmp.eq.s32.totalorder %s19, 0
    %p191 = por %p189, %p190
    %p192 = scmp.ne.s32.totalorder %s184, %s186
    %p193 = scmp.eq.s32.totalorder %s24, 1
    %p194 = por %p192, %p193
    %p195 = scmp.ne.s32.totalorder %s186, %s187
    %p196 = scmp.eq.s32.totalorder %s24, 0
    %p197 = por %p195, %p196
    %p198 = scmp.ne.s32.totalorder %s186, %s187
    %p199 = scmp.eq.s32.totalorder %s25, 1
    %p200 = por %p198, %p199
    %p202 = scmp.ne.s32.totalorder %s187, %s201
    %p203 = scmp.eq.s32.totalorder %s25, 0
    %p204 = por %p202, %p203
    %s206 = sadd.s32 %s205, 1
    %p209 = scmp.eq.s32.totalorder %s19, 1
    %p210 = scmp.ne.s32.totalorder %s205, %s207
    %p211 = scmp.eq.s32.totalorder %s19, 0
    %p212 = por %p210, %p211
    %p213 = scmp.ne.s32.totalorder %s205, %s207
    %p214 = scmp.eq.s32.totalorder %s24, 1
    %p215 = por %p213, %p214
    %p216 = scmp.ne.s32.totalorder %s207, %s208
    %p217 = scmp.eq.s32.totalorder %s24, 0
    %p218 = por %p216, %p217
    %p219 = scmp.ne.s32.totalorder %s207, %s208
    %p220 = scmp.eq.s32.totalorder %s25, 1
    %p221 = por %p219, %p220
    %p223 = scmp.ne.s32.totalorder %s208, %s222
    %p224 = scmp.eq.s32.totalorder %s25, 0
    %p225 = por %p223, %p224
    %s227 = sadd.s32 %s226, 1
    %p230 = scmp.eq.s32.totalorder %s19, 1
    %p231 = scmp.ne.s32.totalorder %s226, %s228
    %p232 = scmp.eq.s32.totalorder %s19, 0
    %p233 = por %p231, %p232
    %p234 = scmp.ne.s32.totalorder %s226, %s228
    %p235 = scmp.eq.s32.totalorder %s24, 1
    %p236 = por %p234, %p235
    %p237 = scmp.ne.s32.totalorder %s228, %s229
    %p238 = scmp.eq.s32.totalorder %s24, 0
    %p239 = por %p237, %p238
    %p240 = scmp.ne.s32.totalorder %s228, %s229
    %p241 = scmp.eq.s32.totalorder %s25, 1
    %p242 = por %p240, %p241
    %p244 = scmp.ne.s32.totalorder %s229, %s243
    %p245 = scmp.eq.s32.totalorder %s25, 0
    %p246 = por %p244, %p245
    %s248 = sadd.s32 %s247, 1
    %p251 = scmp.eq.s32.totalorder %s19, 1
    %p252 = scmp.ne.s32.totalorder %s247, %s249
    %p253 = scmp.eq.s32.totalorder %s19, 0
    %p254 = por %p252, %p253
    %p255 = scmp.ne.s32.totalorder %s247, %s249
    %p256 = scmp.eq.s32.totalorder %s24, 1
    %p257 = por %p255, %p256
    %p258 = scmp.ne.s32.totalorder %s249, %s250
    %p259 = scmp.eq.s32.totalorder %s24, 0
    %p260 = por %p258, %p259
    %p261 = scmp.ne.s32.totalorder %s249, %s250
    %p262 = scmp.eq.s32.totalorder %s25, 1
    %p263 = por %p261, %p262
    %p265 = scmp.ne.s32.totalorder %s250, %s264
    %p266 = scmp.eq.s32.totalorder %s25, 0
    %p267 = por %p265, %p266
    %s269 = sadd.s32 %s268, 1
    %p272 = scmp.eq.s32.totalorder %s19, 1
    %p273 = scmp.ne.s32.totalorder %s268, %s270
    %p274 = scmp.eq.s32.totalorder %s19, 0
    %p275 = por %p273, %p274
    %p276 = scmp.ne.s32.totalorder %s268, %s270
    %p277 = scmp.eq.s32.totalorder %s24, 1
    %p278 = por %p276, %p277
    %p279 = scmp.ne.s32.totalorder %s270, %s271
    %p280 = scmp.eq.s32.totalorder %s24, 0
    %p281 = por %p279, %p280
    %p282 = scmp.ne.s32.totalorder %s270, %s271
    %p283 = scmp.eq.s32.totalorder %s25, 1
    %p284 = por %p282, %p283
    %p286 = scmp.ne.s32.totalorder %s271, %s285
    %p287 = scmp.eq.s32.totalorder %s25, 0
    %p288 = por %p286, %p287
    %s290 = sadd.s32 %s289, 1
    %p293 = scmp.eq.s32.totalorder %s19, 1
    %p294 = scmp.ne.s32.totalorder %s289, %s291
    %p295 = scmp.eq.s32.totalorder %s19, 0
    %p296 = por %p294, %p295
    %p297 = scmp.ne.s32.totalorder %s289, %s291
    %p298 = scmp.eq.s32.totalorder %s24, 1
    %p299 = por %p297, %p298
    %p300 = scmp.ne.s32.totalorder %s291, %s292
    %p301 = scmp.eq.s32.totalorder %s24, 0
    %p302 = por %p300, %p301
    %p303 = scmp.ne.s32.totalorder %s291, %s292
    %p304 = scmp.eq.s32.totalorder %s25, 1
    %p305 = por %p303, %p304
    %p307 = scmp.ne.s32.totalorder %s292, %s306
    %p308 = scmp.eq.s32.totalorder %s25, 0
    %p309 = por %p307, %p308
    %s310 = ssub.s32 %s19, %s26
    %p311 = scmp.eq.s32.totalorder %s310, 0
    %s313 = sadd.s32 %s312, 1
    %s314 = scalar_select %p311, %s312, %s313
    %p317 = pneg %p311
    %p318 = scmp.eq.s32.totalorder %s19, 1
    %p319 = por %p317, %p318
    %p320 = scmp.ne.s32.totalorder %s312, %s315
    %p321 = scmp.eq.s32.totalorder %s19, 0
    %p322 = por %p320, %p321
    %p323 = scmp.ne.s32.totalorder %s312, %s315
    %p324 = scmp.eq.s32.totalorder %s24, 1
    %p325 = por %p323, %p324
    %p326 = scmp.ne.s32.totalorder %s315, %s316
    %p327 = scmp.eq.s32.totalorder %s24, 0
    %p328 = por %p326, %p327
    %p329 = scmp.ne.s32.totalorder %s315, %s316
    %p330 = scmp.eq.s32.totalorder %s25, 1
    %p331 = por %p329, %p330
    %p333 = scmp.ne.s32.totalorder %s316, %s332
    %p334 = scmp.eq.s32.totalorder %s25, 0
    %p335 = por %p333, %p334
    %p336 = scmp.le.s32.totalorder 1, %s19
    %p337 = scmp.lt.s32.totalorder %s19, 3
    %p338 = pnand %p336, %p337
    %p339 = pneg %p338
    // Predicated region
    $region9: #{transformer_encoder_forward.3} parent=5 // pred_check
      _
    $region10: #{transformer_encoder_forward.3} parent=5 // pred_check_branch
      %341 = sbr.rel (%p338) target = $region12
    $region11: #{transformer_encoder_forward.3} parent=5 // pred_region
      %s342 = ssub.s32 %s19, 1
      // Predicated region
      $region13: #{transformer_encoder_forward.3} parent=11 // pred_check
        %p343 = pneg %p92
      $region14: #{transformer_encoder_forward.3} parent=11 // pred_check_branch
        %345 = sbr.rel (%p343) target = $region16
      $region15: #{transformer_encoder_forward.3} parent=11 // pred_region
        _
      $region16: #{transformer_encoder_forward.3} parent=11 // pred_fallthru
        _
      // Predicated region
      $region17: #{transformer_encoder_forward.3} parent=11 // pred_check
        %p346 = pneg %p113
      $region18: #{transformer_encoder_forward.3} parent=11 // pred_check_branch
        %348 = sbr.rel (%p346) target = $region20
      $region19: #{transformer_encoder_forward.3} parent=11 // pred_region
        _
      $region20: #{transformer_encoder_forward.3} parent=11 // pred_fallthru
        _
      // Predicated region
      $region21: #{transformer_encoder_forward.3} parent=11 // pred_check
        %p349 = pneg %p134
      $region22: #{transformer_encoder_forward.3} parent=11 // pred_check_branch
        %351 = sbr.rel (%p349) target = $region24
      $region23: #{transformer_encoder_forward.3} parent=11 // pred_region
        _
      $region24: #{transformer_encoder_forward.3} parent=11 // pred_fallthru
        _
      // Predicated region
      $region25: #{transformer_encoder_forward.3} parent=11 // pred_check
        %p352 = pneg %p155
      $region26: #{transformer_encoder_forward.3} parent=11 // pred_check_branch
        %354 = sbr.rel (%p352) target = $region28
      $region27: #{transformer_encoder_forward.3} parent=11 // pred_region
        _
      $region28: #{transformer_encoder_forward.3} parent=11 // pred_fallthru
        _
      // Predicated region
      $region29: #{transformer_encoder_forward.3} parent=11 // pred_check
        %p355 = pneg %p176
      $region30: #{transformer_encoder_forward.3} parent=11 // pred_check_branch
        %357 = sbr.rel (%p355) target = $region32
      $region31: #{transformer_encoder_forward.3} parent=11 // pred_region
        _
      $region32: #{transformer_encoder_forward.3} parent=11 // pred_fallthru
        _
      // Predicated region
      $region33: #{transformer_encoder_forward.3} parent=11 // pred_check
        %p358 = pneg %p197
      $region34: #{transformer_encoder_forward.3} parent=11 // pred_check_branch
        %360 = sbr.rel (%p358) target = $region36
      $region35: #{transformer_encoder_forward.3} parent=11 // pred_region
        _
      $region36: #{transformer_encoder_forward.3} parent=11 // pred_fallthru
        _
      // Predicated region
      $region37: #{transformer_encoder_forward.3} parent=11 // pred_check
        %p361 = pneg %p218
      $region38: #{transformer_encoder_forward.3} parent=11 // pred_check_branch
        %363 = sbr.rel (%p361) target = $region40
      $region39: #{transformer_encoder_forward.3} parent=11 // pred_region
        _
      $region40: #{transformer_encoder_forward.3} parent=11 // pred_fallthru
        _
      // Predicated region
      $region41: #{transformer_encoder_forward.3} parent=11 // pred_check
        %p364 = pneg %p239
      $region42: #{transformer_encoder_forward.3} parent=11 // pred_check_branch
        %366 = sbr.rel (%p364) target = $region44
      $region43: #{transformer_encoder_forward.3} parent=11 // pred_region
        _
      $region44: #{transformer_encoder_forward.3} parent=11 // pred_fallthru
        _
      // Predicated region
      $region45: #{transformer_encoder_forward.3} parent=11 // pred_check
        %p367 = pneg %p260
      $region46: #{transformer_encoder_forward.3} parent=11 // pred_check_branch
        %369 = sbr.rel (%p367) target = $region48
      $region47: #{transformer_encoder_forward.3} parent=11 // pred_region
        _
      $region48: #{transformer_encoder_forward.3} parent=11 // pred_fallthru
        _
      // Predicated region
      $region49: #{transformer_encoder_forward.3} parent=11 // pred_check
        %p370 = pneg %p281
      $region50: #{transformer_encoder_forward.3} parent=11 // pred_check_branch
        %372 = sbr.rel (%p370) target = $region52
      $region51: #{transformer_encoder_forward.3} parent=11 // pred_region
        _
      $region52: #{transformer_encoder_forward.3} parent=11 // pred_fallthru
        _
      // Predicated region
      $region53: #{transformer_encoder_forward.3} parent=11 // pred_check
        %p373 = pneg %p302
      $region54: #{transformer_encoder_forward.3} parent=11 // pred_check_branch
        %375 = sbr.rel (%p373) target = $region56
      $region55: #{transformer_encoder_forward.3} parent=11 // pred_region
        _
      $region56: #{transformer_encoder_forward.3} parent=11 // pred_fallthru
        _
    $region12: #{transformer_encoder_forward.3} parent=5 // pred_fallthru
      _
    %p376 = scmp.lt.s32.totalorder %s19, 2
    // Predicated region
    $region57: #{transformer_encoder_forward.3} parent=5 // pred_check
      %p377 = pneg %p376
    $region58: #{transformer_encoder_forward.3} parent=5 // pred_check_branch
      %379 = sbr.rel (%p377) target = $region60
    $region59: #{transformer_encoder_forward.3} parent=5 // pred_region
      // Predicated region
      $region61: #{transformer_encoder_forward.3} parent=59 // pred_check
        %p380 = pneg %p39
      $region62: #{transformer_encoder_forward.3} parent=59 // pred_check_branch
        %382 = sbr.rel (%p380) target = $region64
      $region63: #{transformer_encoder_forward.3} parent=59 // pred_region
        %p383 = scmp.lt.s32.totalorder %s19, 1
        %s384 = scalar_select %p383, %s19, 1
        %s385 = smul.addr %s384, 8
        %s386 = scalar_lea.vmem %s0, %s385
      $region64: #{transformer_encoder_forward.3} parent=59 // pred_fallthru
        _
      // Predicated region
      $region65: #{transformer_encoder_forward.3} parent=59 // pred_check
        %p387 = pneg %p65
      $region66: #{transformer_encoder_forward.3} parent=59 // pred_check_branch
        %389 = sbr.rel (%p387) target = $region68
      $region67: #{transformer_encoder_forward.3} parent=59 // pred_region
        %p390 = scmp.lt.s32.totalorder %s19, 1
        %s391 = scalar_select %p390, %s19, 1
        %s392 = smul.addr %s391, 8
        %s393 = scalar_lea.vmem %s1, %s392
      $region68: #{transformer_encoder_forward.3} parent=59 // pred_fallthru
        _
    $region60: #{transformer_encoder_forward.3} parent=5 // pred_fallthru
      _
    %p394 = scmp.le.s32.totalorder 1, %s19
    %p395 = scmp.lt.s32.totalorder %s19, 3
    %p396 = pnand %p394, %p395
    %p397 = pneg %p396
    // Predicated region
    $region69: #{transformer_encoder_forward.3} parent=5 // pred_check
      _
    $region70: #{transformer_encoder_forward.3} parent=5 // pred_check_branch
      %399 = sbr.rel (%p396) target = $region72
    $region71: #{transformer_encoder_forward.3} parent=5 // pred_region
      %s400 = ssub.s32 %s19, 1
      %p401 = scmp.lt.s32.totalorder %s24, 1
      %s402 = scalar_select %p401, %s24, 1
      %s403 = smul.addr %s402, 8
      %s404 = scalar_lea.vmem %s0, %s403
      %p405 = pneg %p45
      %p406 = pneg %p42
      %p407 = scmp.lt.s32.totalorder %s24, 1
      %s408 = scalar_select %p407, %s24, 1
      %s409 = smul.addr %s408, 8
      %s410 = scalar_lea.vmem %s1, %s409
      %p411 = pneg %p71
      %p412 = pneg %p68
      %p413 = pneg %p92
      %p414 = pneg %p89
      %p415 = pneg %p113
      %p416 = pneg %p110
      %p417 = pneg %p134
      %p418 = pneg %p131
      %p419 = pneg %p155
      %p420 = pneg %p152
      %p421 = pneg %p176
      %p422 = pneg %p173
      %p423 = pneg %p197
      %p424 = pneg %p194
      %p425 = pneg %p218
      %p426 = pneg %p215
      %p427 = pneg %p239
      %p428 = pneg %p236
      %p429 = pneg %p260
      %p430 = pneg %p257
      %p431 = pneg %p281
      %p432 = pneg %p278
      %p433 = pneg %p302
      %p434 = pneg %p299
      %p435 = pneg %p328
      %p436 = pneg %p325
      %p437 = scmp.lt.s32.totalorder %s24, 1
      %s438 = scalar_select %p437, %s24, 1
      %s439 = smul.addr %s438, 8
      %s440 = scalar_lea.vmem %s13, %s439
      %p441 = scmp.lt.s32.totalorder %s24, 1
      %s442 = scalar_select %p441, %s24, 1
      %s443 = smul.addr %s442, 8
      %s444 = scalar_lea.vmem %s0, %s443
      %p445 = scmp.lt.s32.totalorder %s24, 1
      %s446 = scalar_select %p445, %s24, 1
      %s447 = smul.addr %s446, 8
      %s448 = scalar_lea.vmem %s1, %s447
      %p449 = scmp.lt.s32.totalorder %s24, 1
      %s450 = scalar_select %p449, %s24, 1
      %s451 = smul.addr %s450, 8
      %s452 = scalar_lea.vmem %s13, %s451
      %v453 = vld [vmem:[%s444] sm:$0xff]
      %v454 = vld [vmem:[%s5] sm:$0x3f]
      %v455 = vld [vmem:[%s6] sm:$0x1]
      %v457 = vlaneseq
      %v458 = vshrl.u32 %v457, 7
      %v459 = vsub.s32 0, %v458
      %v460 = vrot.slane %v455, %v459
      %vm462 = vcmask 48128
      %v464 = vsel %vm462, %v453, 0
      %vm466 = vcmask 1045504
      %v468 = vsel %vm466, %v454, 0
      %470 = vmatprep.subr.mxu0 0.0
      %471 = vmatpush1.msra.mxu0 0.0
      %472 = vmatprep.subr.mxu0 0.0
      %473 = vmatpush1.msra.mxu0 0.0
      %474 = vmatprep.subr.mxu0 0.0
      %475 = vmatpush1.msra.mxu0 0.0
      %476 = vmatprep.subr.mxu0 0.0
      %477 = vmatpush1.msra.mxu0 0.0
      %478 = vmatprep.subr.mxu0 0.0
      %479 = vmatpush1.msra.mxu0 0.0
      %480 = vmatprep.subr.mxu0 0.0
      %481 = vmatpush1.msra.mxu0 0.0
      %482 = vmatprep.subr.mxu0 0.0
      %483 = vmatpush1.msra.mxu0 0.0
      %484 = vmatprep.subr.mxu0 0.0
      %485 = vmatpush1.msra.mxu0 0.0
      %486 = vmatprep.subr.mxu0 0.0
      %487 = vmatpush1.msra.mxu0 0.0
      %488 = vmatprep.subr.mxu0 0.0
      %489 = vmatpush1.msra.mxu0 0.0
      %490 = vmatprep.subr.mxu0 0.0
      %491 = vmatpush1.msra.mxu0 0.0
      %492 = vmatprep.subr.mxu0 0.0
      %493 = vmatpush1.msra.mxu0 0.0
      %494 = vmatprep.subr.mxu0 0.0
      %495 = vmatpush1.msra.mxu0 0.0
      %496 = vmatprep.subr.mxu0 0.0
      %497 = vmatpush1.msra.mxu0 0.0
      %498 = vmatprep.subr.mxu0 0.0
      %499 = vmatpush1.msra.mxu0 0.0
      %500 = vmatprep.subr.mxu0 0.0
      %501 = vmatpush1.msra.mxu0 %v468
      %502 = vmatprep.subr.mxu0 0.0
      %503 = vmatpush2.msra.mxu0 0.0
      %504 = vmatprep.subr.mxu0 0.0
      %505 = vmatpush2.msra.mxu0 0.0
      %506 = vmatprep.subr.mxu0 0.0
      %507 = vmatpush2.msra.mxu0 0.0
      %508 = vmatprep.subr.mxu0 0.0
      %509 = vmatpush2.msra.mxu0 0.0
      %510 = vmatprep.subr.mxu0 0.0
      %511 = vmatpush2.msra.mxu0 0.0
      %512 = vmatprep.subr.mxu0 0.0
      %513 = vmatpush2.msra.mxu0 0.0
      %514 = vmatprep.subr.mxu0 0.0
      %515 = vmatpush2.msra.mxu0 0.0
      %516 = vmatprep.subr.mxu0 0.0
      %517 = vmatpush2.msra.mxu0 0.0
      %518 = vmatprep.subr.mxu0 0.0
      %519 = vmatpush2.msra.mxu0 0.0
      %520 = vmatprep.subr.mxu0 0.0
      %521 = vmatpush2.msra.mxu0 0.0
      %522 = vmatprep.subr.mxu0 0.0
      %523 = vmatpush2.msra.mxu0 0.0
      %524 = vmatprep.subr.mxu0 0.0
      %525 = vmatpush2.msra.mxu0 0.0
      %526 = vmatprep.subr.mxu0 0.0
      %527 = vmatpush2.msra.mxu0 0.0
      %528 = vmatprep.subr.mxu0 0.0
      %529 = vmatpush2.msra.mxu0 0.0
      %530 = vmatprep.subr.mxu0 0.0
      %531 = vmatpush2.msra.mxu0 0.0
      %532 = vmatprep.subr.mxu0 0.0
      %533 = vmatpush2.msra.mxu0 0.0
      %534 = vmatprep.mubr.f32.mxu0 0.0
      %535 = vmatmul.mubr.f32.gmra.mxu0 %v464
      %v536 = vpop.f32.mrf.mxu0
      %v537 = vadd.f32 %v460, %v536
      %v538 = vpop.f32.mrf.mxu0
      %539 = vdwg.mxu0
      %v540 = vlaneseq
      %v541 = vshrl.u32 %v540, 7
      %v542 = vlaneseq
      %v543 = vand.u32 %v542, 127
      %v544 = vadd.s32 %v543, 1
      %vm545 = vcmp.eq.s32.totalorder %v541, %v544
      %v546 = vsel %vm545, 1, 0
      %v547 = vcvt.s32.f32 %v546
      %v548 = vsub.s32 %v543, 1
      %vm549 = vcmp.eq.s32.totalorder %v541, %v548
      %v550 = vsel %vm549, 1, 0
      %v551 = vcvt.s32.f32 %v550
      %v552 = vld [vmem:[%s7] sm:$0xff]
      %v553 = vld [vmem:[%s7 + $0x8] sm:$0xff]
      %v554 = vld [vmem:[%s7 + $0x10] sm:$0xff]
      %v555 = vld [vmem:[%s7 + $0x18] sm:$0xff]
      %vm556 = vcmask 261120
      %v558 = vsel %vm556, %v537, 0
      %560 = vmatprep.subr.mxu0 0.0
      %561 = vmatpush1.msra.mxu0 0.0
      %562 = vmatprep.subr.mxu0 0.0
      %563 = vmatpush1.msra.mxu0 0.0
      %564 = vmatprep.subr.mxu0 0.0
      %565 = vmatpush1.msra.mxu0 0.0
      %566 = vmatprep.subr.mxu0 0.0
      %567 = vmatpush1.msra.mxu0 0.0
      %568 = vmatprep.subr.mxu0 0.0
      %569 = vmatpush1.msra.mxu0 0.0
      %570 = vmatprep.subr.mxu0 0.0
      %571 = vmatpush1.msra.mxu0 0.0
      %572 = vmatprep.subr.mxu0 0.0
      %573 = vmatpush1.msra.mxu0 0.0
      %574 = vmatprep.subr.mxu0 0.0
      %575 = vmatpush1.msra.mxu0 0.0
      %576 = vmatprep.subr.mxu0 0.0
      %577 = vmatpush1.msra.mxu0 0.0
      %578 = vmatprep.subr.mxu0 0.0
      %579 = vmatpush1.msra.mxu0 0.0
      %580 = vmatprep.subr.mxu0 0.0
      %581 = vmatpush1.msra.mxu0 0.0
      %582 = vmatprep.subr.mxu0 0.0
      %583 = vmatpush1.msra.mxu0 0.0
      %584 = vmatprep.subr.mxu0 0.0
      %585 = vmatpush1.msra.mxu0 %v555
      %586 = vmatprep.subr.mxu0 0.0
      %587 = vmatpush1.msra.mxu0 %v554
      %588 = vmatprep.subr.mxu0 0.0
      %589 = vmatpush1.msra.mxu0 %v553
      %590 = vmatprep.subr.mxu0 0.0
      %591 = vmatpush1.msra.mxu0 %v552
      %592 = vmatprep.subr.mxu0 0.0
      %593 = vmatpush2.msra.mxu0 0.0
      %594 = vmatprep.subr.mxu0 0.0
      %595 = vmatpush2.msra.mxu0 0.0
      %596 = vmatprep.subr.mxu0 0.0
      %597 = vmatpush2.msra.mxu0 0.0
      %598 = vmatprep.subr.mxu0 0.0
      %599 = vmatpush2.msra.mxu0 0.0
      %600 = vmatprep.subr.mxu0 0.0
      %601 = vmatpush2.msra.mxu0 0.0
      %602 = vmatprep.subr.mxu0 0.0
      %603 = vmatpush2.msra.mxu0 0.0
      %604 = vmatprep.subr.mxu0 0.0
      %605 = vmatpush2.msra.mxu0 0.0
      %606 = vmatprep.subr.mxu0 0.0
      %607 = vmatpush2.msra.mxu0 0.0
      %608 = vmatprep.subr.mxu0 0.0
      %609 = vmatpush2.msra.mxu0 0.0
      %610 = vmatprep.subr.mxu0 0.0
      %611 = vmatpush2.msra.mxu0 0.0
      %612 = vmatprep.subr.mxu0 0.0
      %613 = vmatpush2.msra.mxu0 0.0
      %614 = vmatprep.subr.mxu0 0.0
      %615 = vmatpush2.msra.mxu0 0.0
      %616 = vmatprep.subr.mxu0 0.0
      %617 = vmatpush2.msra.mxu0 0.0
      %618 = vmatprep.subr.mxu0 0.0
      %619 = vmatpush2.msra.mxu0 0.0
      %620 = vmatprep.subr.mxu0 0.0
      %621 = vmatpush2.msra.mxu0 0.0
      %622 = vmatprep.subr.mxu0 0.0
      %623 = vmatpush2.msra.mxu0 0.0
      %624 = vmatprep.mubr.f32.mxu0 0.0
      %625 = vmatmul.mubr.f32.gmra.mxu0 %v558
      %v626 = vpop.f32.mrf.mxu0
      %v627 = vadd.f32 0.0, %v626
      %v628 = vpop.f32.mrf.mxu0
      %629 = vdwg.mxu0
      %s630 = scalar_lea.vmem %s7, 32
      %v631 = vld [vmem:[%s630] sm:$0xff]
      %v632 = vld [vmem:[%s630 + $0x8] sm:$0xff]
      %v633 = vld [vmem:[%s630 + $0x10] sm:$0xff]
      %v634 = vld [vmem:[%s630 + $0x18] sm:$0xff]
      %635 = vmatprep.subr.mxu0 0.0
      %636 = vmatpush1.msra.mxu0 0.0
      %637 = vmatprep.subr.mxu0 0.0
      %638 = vmatpush1.msra.mxu0 0.0
      %639 = vmatprep.subr.mxu0 0.0
      %640 = vmatpush1.msra.mxu0 0.0
      %641 = vmatprep.subr.mxu0 0.0
      %642 = vmatpush1.msra.mxu0 0.0
      %643 = vmatprep.subr.mxu0 0.0
      %644 = vmatpush1.msra.mxu0 0.0
      %645 = vmatprep.subr.mxu0 0.0
      %646 = vmatpush1.msra.mxu0 0.0
      %647 = vmatprep.subr.mxu0 0.0
      %648 = vmatpush1.msra.mxu0 0.0
      %649 = vmatprep.subr.mxu0 0.0
      %650 = vmatpush1.msra.mxu0 0.0
      %651 = vmatprep.subr.mxu0 0.0
      %652 = vmatpush1.msra.mxu0 0.0
      %653 = vmatprep.subr.mxu0 0.0
      %654 = vmatpush1.msra.mxu0 0.0
      %655 = vmatprep.subr.mxu0 0.0
      %656 = vmatpush1.msra.mxu0 0.0
      %657 = vmatprep.subr.mxu0 0.0
      %658 = vmatpush1.msra.mxu0 0.0
      %659 = vmatprep.subr.mxu0 0.0
      %660 = vmatpush1.msra.mxu0 %v634
      %661 = vmatprep.subr.mxu0 0.0
      %662 = vmatpush1.msra.mxu0 %v633
      %663 = vmatprep.subr.mxu0 0.0
      %664 = vmatpush1.msra.mxu0 %v632
      %665 = vmatprep.subr.mxu0 0.0
      %666 = vmatpush1.msra.mxu0 %v631
      %667 = vmatprep.subr.mxu0 0.0
      %668 = vmatpush2.msra.mxu0 0.0
      %669 = vmatprep.subr.mxu0 0.0
      %670 = vmatpush2.msra.mxu0 0.0
      %671 = vmatprep.subr.mxu0 0.0
      %672 = vmatpush2.msra.mxu0 0.0
      %673 = vmatprep.subr.mxu0 0.0
      %674 = vmatpush2.msra.mxu0 0.0
      %675 = vmatprep.subr.mxu0 0.0
      %676 = vmatpush2.msra.mxu0 0.0
      %677 = vmatprep.subr.mxu0 0.0
      %678 = vmatpush2.msra.mxu0 0.0
      %679 = vmatprep.subr.mxu0 0.0
      %680 = vmatpush2.msra.mxu0 0.0
      %681 = vmatprep.subr.mxu0 0.0
      %682 = vmatpush2.msra.mxu0 0.0
      %683 = vmatprep.subr.mxu0 0.0
      %684 = vmatpush2.msra.mxu0 0.0
      %685 = vmatprep.subr.mxu0 0.0
      %686 = vmatpush2.msra.mxu0 0.0
      %687 = vmatprep.subr.mxu0 0.0
      %688 = vmatpush2.msra.mxu0 0.0
      %689 = vmatprep.subr.mxu0 0.0
      %690 = vmatpush2.msra.mxu0 0.0
      %691 = vmatprep.subr.mxu0 0.0
      %692 = vmatpush2.msra.mxu0 0.0
      %693 = vmatprep.subr.mxu0 0.0
      %694 = vmatpush2.msra.mxu0 0.0
      %695 = vmatprep.subr.mxu0 0.0
      %696 = vmatpush2.msra.mxu0 0.0
      %697 = vmatprep.subr.mxu0 0.0
      %698 = vmatpush2.msra.mxu0 0.0
      %699 = vmatprep.mubr.f32.mxu0 0.0
      %700 = vmatmul.mubr.f32.gmra.mxu0 %v558
      %v701 = vpop.f32.mrf.mxu0
      %v702 = vadd.f32 0.0, %v701
      %v703 = vpop.f32.mrf.mxu0
      %704 = vdwg.mxu0
      %s705 = scalar_lea.vmem %s7, 64
      %v706 = vld [vmem:[%s705] sm:$0xff]
      %v707 = vld [vmem:[%s705 + $0x8] sm:$0xff]
      %v708 = vld [vmem:[%s705 + $0x10] sm:$0xff]
      %v709 = vld [vmem:[%s705 + $0x18] sm:$0xff]
      %710 = vmatprep.subr.mxu0 0.0
      %711 = vmatpush1.msra.mxu0 0.0
      %712 = vmatprep.subr.mxu0 0.0
      %713 = vmatpush1.msra.mxu0 0.0
      %714 = vmatprep.subr.mxu0 0.0
      %715 = vmatpush1.msra.mxu0 0.0
      %716 = vmatprep.subr.mxu0 0.0
      %717 = vmatpush1.msra.mxu0 0.0
      %718 = vmatprep.subr.mxu0 0.0
      %719 = vmatpush1.msra.mxu0 0.0
      %720 = vmatprep.subr.mxu0 0.0
      %721 = vmatpush1.msra.mxu0 0.0
      %722 = vmatprep.subr.mxu0 0.0
      %723 = vmatpush1.msra.mxu0 0.0
      %724 = vmatprep.subr.mxu0 0.0
      %725 = vmatpush1.msra.mxu0 0.0
      %726 = vmatprep.subr.mxu0 0.0
      %727 = vmatpush1.msra.mxu0 0.0
      %728 = vmatprep.subr.mxu0 0.0
      %729 = vmatpush1.msra.mxu0 0.0
      %730 = vmatprep.subr.mxu0 0.0
      %731 = vmatpush1.msra.mxu0 0.0
      %732 = vmatprep.subr.mxu0 0.0
      %733 = vmatpush1.msra.mxu0 0.0
      %734 = vmatprep.subr.mxu0 0.0
      %735 = vmatpush1.msra.mxu0 %v709
      %736 = vmatprep.subr.mxu0 0.0
      %737 = vmatpush1.msra.mxu0 %v708
      %738 = vmatprep.subr.mxu0 0.0
      %739 = vmatpush1.msra.mxu0 %v707
      %740 = vmatprep.subr.mxu0 0.0
      %741 = vmatpush1.msra.mxu0 %v706
      %742 = vmatprep.subr.mxu0 0.0
      %743 = vmatpush2.msra.mxu0 0.0
      %744 = vmatprep.subr.mxu0 0.0
      %745 = vmatpush2.msra.mxu0 0.0
      %746 = vmatprep.subr.mxu0 0.0
      %747 = vmatpush2.msra.mxu0 0.0
      %748 = vmatprep.subr.mxu0 0.0
      %749 = vmatpush2.msra.mxu0 0.0
      %750 = vmatprep.subr.mxu0 0.0
      %751 = vmatpush2.msra.mxu0 0.0
      %752 = vmatprep.subr.mxu0 0.0
      %753 = vmatpush2.msra.mxu0 0.0
      %754 = vmatprep.subr.mxu0 0.0
      %755 = vmatpush2.msra.mxu0 0.0
      %756 = vmatprep.subr.mxu0 0.0
      %757 = vmatpush2.msra.mxu0 0.0
      %758 = vmatprep.subr.mxu0 0.0
      %759 = vmatpush2.msra.mxu0 0.0
      %760 = vmatprep.subr.mxu0 0.0
      %761 = vmatpush2.msra.mxu0 0.0
      %762 = vmatprep.subr.mxu0 0.0
      %763 = vmatpush2.msra.mxu0 0.0
      %764 = vmatprep.subr.mxu0 0.0
      %765 = vmatpush2.msra.mxu0 0.0
      %766 = vmatprep.subr.mxu0 0.0
      %767 = vmatpush2.msra.mxu0 0.0
      %768 = vmatprep.subr.mxu0 0.0
      %769 = vmatpush2.msra.mxu0 0.0
      %770 = vmatprep.subr.mxu0 0.0
      %771 = vmatpush2.msra.mxu0 0.0
      %772 = vmatprep.subr.mxu0 0.0
      %773 = vmatpush2.msra.mxu0 0.0
      %774 = vmatprep.mubr.f32.mxu0 0.0
      %775 = vmatmul.mubr.f32.gmra.mxu0 %v558
      %v776 = vpop.f32.mrf.mxu0
      %v777 = vadd.f32 0.0, %v776
      %v778 = vpop.f32.mrf.mxu0
      %779 = vdwg.mxu0
      %vm780 = vcmask 64512
      %v782 = vsel %vm780, %v547, 0
      %784 = vmatprep.subr.mxu0 0.0
      %785 = vmatpush1.msra.mxu0 0.0
      %786 = vmatprep.subr.mxu0 0.0
      %787 = vmatpush1.msra.mxu0 0.0
      %788 = vmatprep.subr.mxu0 0.0
      %789 = vmatpush1.msra.mxu0 0.0
      %790 = vmatprep.subr.mxu0 0.0
      %791 = vmatpush1.msra.mxu0 0.0
      %792 = vmatprep.subr.mxu0 0.0
      %793 = vmatpush1.msra.mxu0 0.0
      %794 = vmatprep.subr.mxu0 0.0
      %795 = vmatpush1.msra.mxu0 0.0
      %796 = vmatprep.subr.mxu0 0.0
      %797 = vmatpush1.msra.mxu0 0.0
      %798 = vmatprep.subr.mxu0 0.0
      %799 = vmatpush1.msra.mxu0 0.0
      %800 = vmatprep.subr.mxu0 0.0
      %801 = vmatpush1.msra.mxu0 0.0
      %802 = vmatprep.subr.mxu0 0.0
      %803 = vmatpush1.msra.mxu0 0.0
      %804 = vmatprep.subr.mxu0 0.0
      %805 = vmatpush1.msra.mxu0 0.0
      %806 = vmatprep.subr.mxu0 0.0
      %807 = vmatpush1.msra.mxu0 0.0
      %808 = vmatprep.subr.mxu0 0.0
      %809 = vmatpush1.msra.mxu0 0.0
      %810 = vmatprep.subr.mxu0 0.0
      %811 = vmatpush1.msra.mxu0 0.0
      %812 = vmatprep.subr.mxu0 0.0
      %813 = vmatpush1.msra.mxu0 0.0
      %814 = vmatprep.subr.mxu0 0.0
      %815 = vmatpush1.msra.mxu0 %v627
      %816 = vmatprep.subr.mxu0 0.0
      %817 = vmatpush2.msra.mxu0 0.0
      %818 = vmatprep.subr.mxu0 0.0
      %819 = vmatpush2.msra.mxu0 0.0
      %820 = vmatprep.subr.mxu0 0.0
      %821 = vmatpush2.msra.mxu0 0.0
      %822 = vmatprep.subr.mxu0 0.0
      %823 = vmatpush2.msra.mxu0 0.0
      %824 = vmatprep.subr.mxu0 0.0
      %825 = vmatpush2.msra.mxu0 0.0
      %826 = vmatprep.subr.mxu0 0.0
      %827 = vmatpush2.msra.mxu0 0.0
      %828 = vmatprep.subr.mxu0 0.0
      %829 = vmatpush2.msra.mxu0 0.0
      %830 = vmatprep.subr.mxu0 0.0
      %831 = vmatpush2.msra.mxu0 0.0
      %832 = vmatprep.subr.mxu0 0.0
      %833 = vmatpush2.msra.mxu0 0.0
      %834 = vmatprep.subr.mxu0 0.0
      %835 = vmatpush2.msra.mxu0 0.0
      %836 = vmatprep.subr.mxu0 0.0
      %837 = vmatpush2.msra.mxu0 0.0
      %838 = vmatprep.subr.mxu0 0.0
      %839 = vmatpush2.msra.mxu0 0.0
      %840 = vmatprep.subr.mxu0 0.0
      %841 = vmatpush2.msra.mxu0 0.0
      %842 = vmatprep.subr.mxu0 0.0
      %843 = vmatpush2.msra.mxu0 0.0
      %844 = vmatprep.subr.mxu0 0.0
      %845 = vmatpush2.msra.mxu0 0.0
      %846 = vmatprep.subr.mxu0 0.0
      %847 = vmatpush2.msra.mxu0 0.0
      %848 = vmatprep.mubr.f32.mxu0 0.0
      %849 = vmatmul.mubr.f32.gmra.mxu0 %v782
      %v850 = vpop.f32.mrf.mxu0
      %v851 = vadd.f32 %v702, %v850
      %v852 = vpop.f32.mrf.mxu0
      %853 = vdwg.mxu0
      %v855 = vsel %vm780, %v551, 0
      %857 = vmatprep.subr.mxu0 0.0
      %858 = vmatpush1.msra.mxu0 0.0
      %859 = vmatprep.subr.mxu0 0.0
      %860 = vmatpush1.msra.mxu0 0.0
      %861 = vmatprep.subr.mxu0 0.0
      %862 = vmatpush1.msra.mxu0 0.0
      %863 = vmatprep.subr.mxu0 0.0
      %864 = vmatpush1.msra.mxu0 0.0
      %865 = vmatprep.subr.mxu0 0.0
      %866 = vmatpush1.msra.mxu0 0.0
      %867 = vmatprep.subr.mxu0 0.0
      %868 = vmatpush1.msra.mxu0 0.0
      %869 = vmatprep.subr.mxu0 0.0
      %870 = vmatpush1.msra.mxu0 0.0
      %871 = vmatprep.subr.mxu0 0.0
      %872 = vmatpush1.msra.mxu0 0.0
      %873 = vmatprep.subr.mxu0 0.0
      %874 = vmatpush1.msra.mxu0 0.0
      %875 = vmatprep.subr.mxu0 0.0
      %876 = vmatpush1.msra.mxu0 0.0
      %877 = vmatprep.subr.mxu0 0.0
      %878 = vmatpush1.msra.mxu0 0.0
      %879 = vmatprep.subr.mxu0 0.0
      %880 = vmatpush1.msra.mxu0 0.0
      %881 = vmatprep.subr.mxu0 0.0
      %882 = vmatpush1.msra.mxu0 0.0
      %883 = vmatprep.subr.mxu0 0.0
      %884 = vmatpush1.msra.mxu0 0.0
      %885 = vmatprep.subr.mxu0 0.0
      %886 = vmatpush1.msra.mxu0 0.0
      %887 = vmatprep.subr.mxu0 0.0
      %888 = vmatpush1.msra.mxu0 %v777
      %889 = vmatprep.subr.mxu0 0.0
      %890 = vmatpush2.msra.mxu0 0.0
      %891 = vmatprep.subr.mxu0 0.0
      %892 = vmatpush2.msra.mxu0 0.0
      %893 = vmatprep.subr.mxu0 0.0
      %894 = vmatpush2.msra.mxu0 0.0
      %895 = vmatprep.subr.mxu0 0.0
      %896 = vmatpush2.msra.mxu0 0.0
      %897 = vmatprep.subr.mxu0 0.0
      %898 = vmatpush2.msra.mxu0 0.0
      %899 = vmatprep.subr.mxu0 0.0
      %900 = vmatpush2.msra.mxu0 0.0
      %901 = vmatprep.subr.mxu0 0.0
      %902 = vmatpush2.msra.mxu0 0.0
      %903 = vmatprep.subr.mxu0 0.0
      %904 = vmatpush2.msra.mxu0 0.0
      %905 = vmatprep.subr.mxu0 0.0
      %906 = vmatpush2.msra.mxu0 0.0
      %907 = vmatprep.subr.mxu0 0.0
      %908 = vmatpush2.msra.mxu0 0.0
      %909 = vmatprep.subr.mxu0 0.0
      %910 = vmatpush2.msra.mxu0 0.0
      %911 = vmatprep.subr.mxu0 0.0
      %912 = vmatpush2.msra.mxu0 0.0
      %913 = vmatprep.subr.mxu0 0.0
      %914 = vmatpush2.msra.mxu0 0.0
      %915 = vmatprep.subr.mxu0 0.0
      %916 = vmatpush2.msra.mxu0 0.0
      %917 = vmatprep.subr.mxu0 0.0
      %918 = vmatpush2.msra.mxu0 0.0
      %919 = vmatprep.subr.mxu0 0.0
      %920 = vmatpush2.msra.mxu0 0.0
      %921 = vmatprep.mubr.f32.mxu0 0.0
      %922 = vmatmul.mubr.f32.gmra.mxu0 %v855
      %v923 = vpop.f32.mrf.mxu0
      %v924 = vadd.f32 0.0, %v923
      %v925 = vpop.f32.mrf.mxu0
      %926 = vdwg.mxu0
      %v927 = vadd.f32 %v851, %v924
      %v928 = vld [vmem:[%s8] sm:$0x1]
      %v930 = vlaneseq
      %v931 = vshrl.u32 %v930, 7
      %v932 = vsub.s32 0, %v931
      %v933 = vrot.slane %v928, %v932
      %v935 = vadd.f32 %v927, %v933
      %v936 = vld [vmem:[%s448] sm:$0xff]
      %v937 = vld [vmem:[%s9] sm:$0xff]
      %v938 = vld [vmem:[%s9 + $0x8] sm:$0xff]
      %v939 = vld [vmem:[%s9 + $0x10] sm:$0xff]
      %v940 = vld [vmem:[%s9 + $0x18] sm:$0xff]
      %v941 = vld [vmem:[%s10] sm:$0x1]
      %v943 = vlaneseq
      %v944 = vshrl.u32 %v943, 7
      %v945 = vsub.s32 0, %v944
      %v946 = vrot.slane %v941, %v945
      %v949 = vsel %vm556, %v936, 0
      %951 = vmatprep.subr.mxu0 0.0
      %952 = vmatpush1.msra.mxu0 0.0
      %953 = vmatprep.subr.mxu0 0.0
      %954 = vmatpush1.msra.mxu0 0.0
      %955 = vmatprep.subr.mxu0 0.0
      %956 = vmatpush1.msra.mxu0 0.0
      %957 = vmatprep.subr.mxu0 0.0
      %958 = vmatpush1.msra.mxu0 0.0
      %959 = vmatprep.subr.mxu0 0.0
      %960 = vmatpush1.msra.mxu0 0.0
      %961 = vmatprep.subr.mxu0 0.0
      %962 = vmatpush1.msra.mxu0 0.0
      %963 = vmatprep.subr.mxu0 0.0
      %964 = vmatpush1.msra.mxu0 0.0
      %965 = vmatprep.subr.mxu0 0.0
      %966 = vmatpush1.msra.mxu0 0.0
      %967 = vmatprep.subr.mxu0 0.0
      %968 = vmatpush1.msra.mxu0 0.0
      %969 = vmatprep.subr.mxu0 0.0
      %970 = vmatpush1.msra.mxu0 0.0
      %971 = vmatprep.subr.mxu0 0.0
      %972 = vmatpush1.msra.mxu0 0.0
      %973 = vmatprep.subr.mxu0 0.0
      %974 = vmatpush1.msra.mxu0 0.0
      %975 = vmatprep.subr.mxu0 0.0
      %976 = vmatpush1.msra.mxu0 %v940
      %977 = vmatprep.subr.mxu0 0.0
      %978 = vmatpush1.msra.mxu0 %v939
      %979 = vmatprep.subr.mxu0 0.0
      %980 = vmatpush1.msra.mxu0 %v938
      %981 = vmatprep.subr.mxu0 0.0
      %982 = vmatpush1.msra.mxu0 %v937
      %983 = vmatprep.subr.mxu0 0.0
      %984 = vmatpush2.msra.mxu0 0.0
      %985 = vmatprep.subr.mxu0 0.0
      %986 = vmatpush2.msra.mxu0 0.0
      %987 = vmatprep.subr.mxu0 0.0
      %988 = vmatpush2.msra.mxu0 0.0
      %989 = vmatprep.subr.mxu0 0.0
      %990 = vmatpush2.msra.mxu0 0.0
      %991 = vmatprep.subr.mxu0 0.0
      %992 = vmatpush2.msra.mxu0 0.0
      %993 = vmatprep.subr.mxu0 0.0
      %994 = vmatpush2.msra.mxu0 0.0
      %995 = vmatprep.subr.mxu0 0.0
      %996 = vmatpush2.msra.mxu0 0.0
      %997 = vmatprep.subr.mxu0 0.0
      %998 = vmatpush2.msra.mxu0 0.0
      %999 = vmatprep.subr.mxu0 0.0
      %1000 = vmatpush2.msra.mxu0 0.0
      %1001 = vmatprep.subr.mxu0 0.0
      %1002 = vmatpush2.msra.mxu0 0.0
      %1003 = vmatprep.subr.mxu0 0.0
      %1004 = vmatpush2.msra.mxu0 0.0
      %1005 = vmatprep.subr.mxu0 0.0
      %1006 = vmatpush2.msra.mxu0 0.0
      %1007 = vmatprep.subr.mxu0 0.0
      %1008 = vmatpush2.msra.mxu0 0.0
      %1009 = vmatprep.subr.mxu0 0.0
      %1010 = vmatpush2.msra.mxu0 0.0
      %1011 = vmatprep.subr.mxu0 0.0
      %1012 = vmatpush2.msra.mxu0 0.0
      %1013 = vmatprep.subr.mxu0 0.0
      %1014 = vmatpush2.msra.mxu0 0.0
      %1015 = vmatprep.mubr.f32.mxu0 0.0
      %1016 = vmatmul.mubr.f32.gmra.mxu0 %v949
      %v1017 = vpop.f32.mrf.mxu0
      %v1018 = vadd.f32 %v946, %v1017
      %v1019 = vpop.f32.mrf.mxu0
      %1020 = vdwg.mxu0
      %s1021 = scalar_lea.vmem %s2, %s24
      %v1022 = vld [vmem:[%s1021] sm:$0x1]
      %s1023 = scalar_lea.vmem %s3, %s24
      %v1024 = vld [vmem:[%s1023] sm:$0x1]
      %v1025 = vld [vmem:[%s11] sm:$0xff]
      %v1026 = vld [vmem:[%s11 + $0x8] sm:$0xff]
      %v1027 = vld [vmem:[%s11 + $0x10] sm:$0xff]
      %v1028 = vld [vmem:[%s11 + $0x18] sm:$0xff]
      %v1029 = vld [vmem:[%s12] sm:$0x1]
      %v1031 = vsel %vm556, %v1024, 0
      %1033 = vmatprep.subr.mxu0 0.0
      %1034 = vmatpush1.msra.mxu0 0.0
      %1035 = vmatprep.subr.mxu0 0.0
      %1036 = vmatpush1.msra.mxu0 0.0
      %1037 = vmatprep.subr.mxu0 0.0
      %1038 = vmatpush1.msra.mxu0 0.0
      %1039 = vmatprep.subr.mxu0 0.0
      %1040 = vmatpush1.msra.mxu0 0.0
      %1041 = vmatprep.subr.mxu0 0.0
      %1042 = vmatpush1.msra.mxu0 0.0
      %1043 = vmatprep.subr.mxu0 0.0
      %1044 = vmatpush1.msra.mxu0 0.0
      %1045 = vmatprep.subr.mxu0 0.0
      %1046 = vmatpush1.msra.mxu0 0.0
      %1047 = vmatprep.subr.mxu0 0.0
      %1048 = vmatpush1.msra.mxu0 0.0
      %1049 = vmatprep.subr.mxu0 0.0
      %1050 = vmatpush1.msra.mxu0 0.0
      %1051 = vmatprep.subr.mxu0 0.0
      %1052 = vmatpush1.msra.mxu0 0.0
      %1053 = vmatprep.subr.mxu0 0.0
      %1054 = vmatpush1.msra.mxu0 0.0
      %1055 = vmatprep.subr.mxu0 0.0
      %1056 = vmatpush1.msra.mxu0 0.0
      %1057 = vmatprep.subr.mxu0 0.0
      %1058 = vmatpush1.msra.mxu0 %v1028
      %1059 = vmatprep.subr.mxu0 0.0
      %1060 = vmatpush1.msra.mxu0 %v1027
      %1061 = vmatprep.subr.mxu0 0.0
      %1062 = vmatpush1.msra.mxu0 %v1026
      %1063 = vmatprep.subr.mxu0 0.0
      %1064 = vmatpush1.msra.mxu0 %v1025
      %1065 = vmatprep.subr.mxu0 0.0
      %1066 = vmatpush2.msra.mxu0 0.0
      %1067 = vmatprep.subr.mxu0 0.0
      %1068 = vmatpush2.msra.mxu0 0.0
      %1069 = vmatprep.subr.mxu0 0.0
      %1070 = vmatpush2.msra.mxu0 0.0
      %1071 = vmatprep.subr.mxu0 0.0
      %1072 = vmatpush2.msra.mxu0 0.0
      %1073 = vmatprep.subr.mxu0 0.0
      %1074 = vmatpush2.msra.mxu0 0.0
      %1075 = vmatprep.subr.mxu0 0.0
      %1076 = vmatpush2.msra.mxu0 0.0
      %1077 = vmatprep.subr.mxu0 0.0
      %1078 = vmatpush2.msra.mxu0 0.0
      %1079 = vmatprep.subr.mxu0 0.0
      %1080 = vmatpush2.msra.mxu0 0.0
      %1081 = vmatprep.subr.mxu0 0.0
      %1082 = vmatpush2.msra.mxu0 0.0
      %1083 = vmatprep.subr.mxu0 0.0
      %1084 = vmatpush2.msra.mxu0 0.0
      %1085 = vmatprep.subr.mxu0 0.0
      %1086 = vmatpush2.msra.mxu0 0.0
      %1087 = vmatprep.subr.mxu0 0.0
      %1088 = vmatpush2.msra.mxu0 0.0
      %1089 = vmatprep.subr.mxu0 0.0
      %1090 = vmatpush2.msra.mxu0 0.0
      %1091 = vmatprep.subr.mxu0 0.0
      %1092 = vmatpush2.msra.mxu0 0.0
      %1093 = vmatprep.subr.mxu0 0.0
      %1094 = vmatpush2.msra.mxu0 0.0
      %1095 = vmatprep.subr.mxu0 0.0
      %1096 = vmatpush2.msra.mxu0 0.0
      %1097 = vmatprep.mubr.f32.mxu0 0.0
      %1098 = vmatmul.mubr.f32.gmra.mxu0 %v1031
      %v1099 = vpop.f32.mrf.mxu0
      %v1100 = vadd.f32 %v1029, %v1099
      %v1101 = vpop.f32.mrf.mxu0
      %1102 = vdwg.mxu0
      %s1103 = scalar_lea.vmem %s4, %s24
      %v1104 = vld [vmem:[%s1103] sm:$0x1]
      %v1105 = vadd.f32 %v935, %v1018
      %v1106 = vlaneseq
      %v1107 = vshrl.u32 %v1106, 7
      %v1108 = vsub.s32 0, %v1107
      %v1109 = vrot.slane %v1022, %v1108
      %v1110 = vadd.f32 %v1105, %v1109
      %v1111 = vlaneseq
      %v1112 = vshrl.u32 %v1111, 7
      %v1113 = vsub.s32 0, %v1112
      %v1114 = vrot.slane %v1100, %v1113
      %v1115 = vadd.f32 %v1110, %v1114
      %v1116 = vlaneseq
      %v1117 = vshrl.u32 %v1116, 7
      %v1118 = vsub.s32 0, %v1117
      %v1119 = vrot.slane %v1104, %v1118
      %v1120 = vadd.f32 %v1115, %v1119
      %1121 = vst.msk [vmem:[%s452] sm:$0xff] %vm556, %v1120
      %p1122 = scmp.lt.s32.totalorder %s24, 1
      %s1123 = scalar_select %p1122, %s24, 1
      %s1124 = smul.addr %s1123, 8
      %s1125 = scalar_lea.vmem %s13, %s1124
      // Predicated region
      $region73: #{transformer_encoder_forward.3} parent=71 // pred_check
        %p1126 = pneg %p325
      $region74: #{transformer_encoder_forward.3} parent=71 // pred_check_branch
        %1128 = sbr.rel (%p1126) target = $region76
      $region75: #{transformer_encoder_forward.3} parent=71 // pred_region
        _
      $region76: #{transformer_encoder_forward.3} parent=71 // pred_fallthru
        _
    $region72: #{transformer_encoder_forward.3} parent=5 // pred_fallthru
      _
    %p1129 = scmp.le.s32.totalorder 2, %s19
    // Predicated region
    $region77: #{transformer_encoder_forward.3} parent=5 // pred_check
      %p1130 = pneg %p1129
    $region78: #{transformer_encoder_forward.3} parent=5 // pred_check_branch
      %1132 = sbr.rel (%p1130) target = $region80
    $region79: #{transformer_encoder_forward.3} parent=5 // pred_region
      %s1133 = ssub.s32 %s19, 2
      // Predicated region
      $region81: #{transformer_encoder_forward.3} parent=79 // pred_check
        %p1134 = pneg %p331
      $region82: #{transformer_encoder_forward.3} parent=79 // pred_check_branch
        %1136 = sbr.rel (%p1134) target = $region84
      $region83: #{transformer_encoder_forward.3} parent=79 // pred_region
        %p1137 = scmp.lt.s32.totalorder %s25, 1
        %s1138 = scalar_select %p1137, %s25, 1
        %s1139 = smul.addr %s1138, 8
        %s1140 = scalar_lea.vmem %s13, %s1139
      $region84: #{transformer_encoder_forward.3} parent=79 // pred_fallthru
        _
    $region80: #{transformer_encoder_forward.3} parent=5 // pred_fallthru
      _
  $region6: #{transformer_encoder_forward.3} parent=0 // loop_footer
    %s23 = sadd.s32 1, %s19
  $region7: #{transformer_encoder_forward.3} parent=0 // loop_footer_branch
    %18 = sbr.rel target = $region3
  $region8: #{transformer_encoder_forward.3} parent=0 // loop_exit
    _

// kernel: transformer_encoder_forward.4
$region0: #{transformer_encoder_forward.4}
  #allocation0 [shape = 'u32[]', space=smem, size = 0x4, offset = 0x4, fixed_abs, tag = 'smem constant byte address 0x4 - core index']
  #allocation1 [shape = 'u32[144,128]{1,0:T(1,128)}', space=vmem, size = 0x12000, scoped, tag = 'internal scratch']
  %s0 = inlined_call_operand.vmem [shape: f32[16,32], index: 0, kind: input, shape index: {}]
  %s1 = inlined_call_operand.vmem [shape: bf16[32,32], index: 1, kind: input, shape index: {}]
  %s2 = inlined_call_operand.vmem [shape: f32[1,32], index: 2, kind: input, shape index: {}]
  %s3 = inlined_call_operand.vmem [shape: bf16[32,32], index: 3, kind: input, shape index: {}]
  %s4 = inlined_call_operand.vmem [shape: f32[1,32], index: 4, kind: input, shape index: {}]
  %s5 = inlined_call_operand.vmem [shape: bf16[32,32], index: 5, kind: input, shape index: {}]
  %s6 = inlined_call_operand.vmem [shape: f32[1,32], index: 6, kind: input, shape index: {}]
  %s7 = inlined_call_operand.vmem [shape: bf16[32,32], index: 7, kind: input, shape index: {}]
  %s8 = inlined_call_operand.vmem [shape: f32[1,32], index: 8, kind: input, shape index: {}]
  %s9 = inlined_call_operand.vmem [shape: bf16[32,2048], index: 9, kind: input, shape index: {}]
  %s10 = inlined_call_operand.vmem [shape: f32[1,2048], index: 10, kind: input, shape index: {}]
  %s11 = inlined_call_operand.vmem [shape: bf16[2048,32], index: 11, kind: input, shape index: {}]
  %s12 = inlined_call_operand.vmem [shape: f32[1,32], index: 12, kind: input, shape index: {}]
  %s13 = inlined_call_operand.vmem [shape: f32[1,32], index: 13, kind: input, shape index: {}]
  %s14 = inlined_call_operand.vmem [shape: f32[1,32], index: 14, kind: input, shape index: {}]
  %s15 = inlined_call_operand.vmem [shape: f32[1,32], index: 15, kind: input, shape index: {}]
  %s16 = inlined_call_operand.vmem [shape: f32[1,32], index: 16, kind: input, shape index: {}]
  %s17 = inlined_call_operand.vmem [shape: f32[16,32], index: 17, kind: output, shape index: {}]
  %s18 = sld [smem:[#allocation0]]
  $region78: #{transformer_encoder_forward.4} parent=0
    _
  %s20 = ssub.s32 1, %s18
  %s21 = scalar_select 0, %s20, %s18
  // Predicated region
  $region2: #{transformer_encoder_forward.4} parent=0 // pred_check
    _
  $region3: #{transformer_encoder_forward.4} parent=0 // pred_check_branch
    %23 = sbr.rel (0) target = $region5
  $region4: #{transformer_encoder_forward.4} parent=0 // pred_region
    _
  $region5: #{transformer_encoder_forward.4} parent=0 // pred_fallthru
    _
  // Predicated region
  $region6: #{transformer_encoder_forward.4} parent=0 // pred_check
    _
  $region7: #{transformer_encoder_forward.4} parent=0 // pred_check_branch
    %25 = sbr.rel (0) target = $region9
  $region8: #{transformer_encoder_forward.4} parent=0 // pred_region
    _
  $region9: #{transformer_encoder_forward.4} parent=0 // pred_fallthru
    _
  // Predicated region
  $region10: #{transformer_encoder_forward.4} parent=0 // pred_check
    _
  $region11: #{transformer_encoder_forward.4} parent=0 // pred_check_branch
    %27 = sbr.rel (0) target = $region13
  $region12: #{transformer_encoder_forward.4} parent=0 // pred_region
    _
  $region13: #{transformer_encoder_forward.4} parent=0 // pred_fallthru
    _
  // Predicated region
  $region14: #{transformer_encoder_forward.4} parent=0 // pred_check
    _
  $region15: #{transformer_encoder_forward.4} parent=0 // pred_check_branch
    %29 = sbr.rel (0) target = $region17
  $region16: #{transformer_encoder_forward.4} parent=0 // pred_region
    _
  $region17: #{transformer_encoder_forward.4} parent=0 // pred_fallthru
    _
  // Predicated region
  $region18: #{transformer_encoder_forward.4} parent=0 // pred_check
    _
  $region19: #{transformer_encoder_forward.4} parent=0 // pred_check_branch
    %31 = sbr.rel (0) target = $region21
  $region20: #{transformer_encoder_forward.4} parent=0 // pred_region
    _
  $region21: #{transformer_encoder_forward.4} parent=0 // pred_fallthru
    _
  // Predicated region
  $region22: #{transformer_encoder_forward.4} parent=0 // pred_check
    _
  $region23: #{transformer_encoder_forward.4} parent=0 // pred_check_branch
    %33 = sbr.rel (0) target = $region25
  $region24: #{transformer_encoder_forward.4} parent=0 // pred_region
    _
  $region25: #{transformer_encoder_forward.4} parent=0 // pred_fallthru
    _
  // Predicated region
  $region26: #{transformer_encoder_forward.4} parent=0 // pred_check
    _
  $region27: #{transformer_encoder_forward.4} parent=0 // pred_check_branch
    %35 = sbr.rel (0) target = $region29
  $region28: #{transformer_encoder_forward.4} parent=0 // pred_region
    _
  $region29: #{transformer_encoder_forward.4} parent=0 // pred_fallthru
    _
  // Predicated region
  $region30: #{transformer_encoder_forward.4} parent=0 // pred_check
    _
  $region31: #{transformer_encoder_forward.4} parent=0 // pred_check_branch
    %37 = sbr.rel (0) target = $region33
  $region32: #{transformer_encoder_forward.4} parent=0 // pred_region
    _
  $region33: #{transformer_encoder_forward.4} parent=0 // pred_fallthru
    _
  // Predicated region
  $region34: #{transformer_encoder_forward.4} parent=0 // pred_check
    _
  $region35: #{transformer_encoder_forward.4} parent=0 // pred_check_branch
    %39 = sbr.rel (0) target = $region37
  $region36: #{transformer_encoder_forward.4} parent=0 // pred_region
    _
  $region37: #{transformer_encoder_forward.4} parent=0 // pred_fallthru
    _
  // Predicated region
  $region38: #{transformer_encoder_forward.4} parent=0 // pred_check
    _
  $region39: #{transformer_encoder_forward.4} parent=0 // pred_check_branch
    %41 = sbr.rel (0) target = $region41
  $region40: #{transformer_encoder_forward.4} parent=0 // pred_region
    _
  $region41: #{transformer_encoder_forward.4} parent=0 // pred_fallthru
    _
  // Predicated region
  $region42: #{transformer_encoder_forward.4} parent=0 // pred_check
    _
  $region43: #{transformer_encoder_forward.4} parent=0 // pred_check_branch
    %43 = sbr.rel (0) target = $region45
  $region44: #{transformer_encoder_forward.4} parent=0 // pred_region
    _
  $region45: #{transformer_encoder_forward.4} parent=0 // pred_fallthru
    _
  // Predicated region
  $region46: #{transformer_encoder_forward.4} parent=0 // pred_check
    _
  $region47: #{transformer_encoder_forward.4} parent=0 // pred_check_branch
    %45 = sbr.rel (0) target = $region49
  $region48: #{transformer_encoder_forward.4} parent=0 // pred_region
    _
  $region49: #{transformer_encoder_forward.4} parent=0 // pred_fallthru
    _
  // Predicated region
  $region50: #{transformer_encoder_forward.4} parent=0 // pred_check
    _
  $region51: #{transformer_encoder_forward.4} parent=0 // pred_check_branch
    %47 = sbr.rel (0) target = $region53
  $region52: #{transformer_encoder_forward.4} parent=0 // pred_region
    _
  $region53: #{transformer_encoder_forward.4} parent=0 // pred_fallthru
    _
  // Predicated region
  $region54: #{transformer_encoder_forward.4} parent=0 // pred_check
    _
  $region55: #{transformer_encoder_forward.4} parent=0 // pred_check_branch
    %49 = sbr.rel (0) target = $region57
  $region56: #{transformer_encoder_forward.4} parent=0 // pred_region
    _
  $region57: #{transformer_encoder_forward.4} parent=0 // pred_fallthru
    _
  // Predicated region
  $region58: #{transformer_encoder_forward.4} parent=0 // pred_check
    _
  $region59: #{transformer_encoder_forward.4} parent=0 // pred_check_branch
    %51 = sbr.rel (0) target = $region61
  $region60: #{transformer_encoder_forward.4} parent=0 // pred_region
    _
  $region61: #{transformer_encoder_forward.4} parent=0 // pred_fallthru
    _
  // Predicated region
  $region62: #{transformer_encoder_forward.4} parent=0 // pred_check
    _
  $region63: #{transformer_encoder_forward.4} parent=0 // pred_check_branch
    %53 = sbr.rel (0) target = $region65
  $region64: #{transformer_encoder_forward.4} parent=0 // pred_region
    _
  $region65: #{transformer_encoder_forward.4} parent=0 // pred_fallthru
    _
  // Predicated region
  $region66: #{transformer_encoder_forward.4} parent=0 // pred_check
    _
  $region67: #{transformer_encoder_forward.4} parent=0 // pred_check_branch
    %55 = sbr.rel (0) target = $region69
  $region68: #{transformer_encoder_forward.4} parent=0 // pred_region
    _
  $region69: #{transformer_encoder_forward.4} parent=0 // pred_fallthru
    _
  %v57 = vld [vmem:[%s0] sm:$0xff]
  %v58 = vld [vmem:[%s0 + $0x8] sm:$0xff]
  %v59 = vpack.c.bf16 %v58, %v57
  %v60 = vld [vmem:[%s1] sm:$0xf]
  %v61 = vld [vmem:[%s1 + $0x4] sm:$0xf]
  %v62 = vld [vmem:[%s1 + $0x8] sm:$0xf]
  %v63 = vld [vmem:[%s1 + $0xc] sm:$0xf]
  %v64 = vld [vmem:[%s2] sm:$0x1]
  %v66 = vlaneseq
  %v67 = vshrl.u32 %v66, 7
  %v68 = vsub.s32 0, %v67
  %v69 = vrot.slane %v64, %v68
  %v75 = vunpack.c.l.b16 %v60
  %v76 = vunpack.c.l.b16 %v61
  %v77 = vunpack.c.l.b16 %v62
  %v78 = vunpack.c.l.b16 %v63
  %v79 = vpack.c.b16 %v76, %v75
  %v80 = vpack.c.b16 %v78, %v77
  %vm83 = vcmask 261120
  %v85 = vsel %vm83, %v59, 0
  %87 = vmatprep.subr.bf16.mxu0 0
  %88 = vmatpush1.bf16.msra.mxu0 0
  %89 = vmatprep.subr.bf16.mxu0 0
  %90 = vmatpush1.bf16.msra.mxu0 0
  %91 = vmatprep.subr.bf16.mxu0 0
  %92 = vmatpush1.bf16.msra.mxu0 0
  %93 = vmatprep.subr.bf16.mxu0 0
  %94 = vmatpush1.bf16.msra.mxu0 0
  %95 = vmatprep.subr.bf16.mxu0 0
  %96 = vmatpush1.bf16.msra.mxu0 0
  %97 = vmatprep.subr.bf16.mxu0 0
  %98 = vmatpush1.bf16.msra.mxu0 0
  %99 = vmatprep.subr.bf16.mxu0 0
  %100 = vmatpush1.bf16.msra.mxu0 %v80
  %101 = vmatprep.subr.bf16.mxu0 0
  %102 = vmatpush1.bf16.msra.mxu0 %v79
  %103 = vmatprep.subr.bf16.mxu0 0
  %104 = vmatpush2.bf16.msra.mxu0 0
  %105 = vmatprep.subr.bf16.mxu0 0
  %106 = vmatpush2.bf16.msra.mxu0 0
  %107 = vmatprep.subr.bf16.mxu0 0
  %108 = vmatpush2.bf16.msra.mxu0 0
  %109 = vmatprep.subr.bf16.mxu0 0
  %110 = vmatpush2.bf16.msra.mxu0 0
  %111 = vmatprep.subr.bf16.mxu0 0
  %112 = vmatpush2.bf16.msra.mxu0 0
  %113 = vmatprep.subr.bf16.mxu0 0
  %114 = vmatpush2.bf16.msra.mxu0 0
  %115 = vmatprep.subr.bf16.mxu0 0
  %116 = vmatpush2.bf16.msra.mxu0 0
  %117 = vmatprep.subr.bf16.mxu0 0
  %118 = vmatpush2.bf16.msra.mxu0 0
  %119 = vmatprep.mubr.bf16.mxu0 0
  %120 = vmatmul.mubr.bf16.gmra.mxu0 %v85
  %v121 = vpop.f32.mrf.mxu0
  %v122 = vadd.f32 %v69, %v121
  %v123 = vpop.f32.mrf.mxu0
  %v124 = vpop.f32.mrf.mxu0
  %v125 = vadd.f32 %v69, %v124
  %v126 = vpop.f32.mrf.mxu0
  %127 = vdwg.mxu0
  %v128 = vmul.f32 %v122, 0.35355338
  %v129 = vmul.f32 %v125, 0.35355338
  %v130 = vld [vmem:[%s3] sm:$0xf]
  %v131 = vld [vmem:[%s3 + $0x4] sm:$0xf]
  %v132 = vld [vmem:[%s3 + $0x8] sm:$0xf]
  %v133 = vld [vmem:[%s3 + $0xc] sm:$0xf]
  %v134 = vld [vmem:[%s4] sm:$0x1]
  %v136 = vlaneseq
  %v137 = vshrl.u32 %v136, 7
  %v138 = vsub.s32 0, %v137
  %v139 = vrot.slane %v134, %v138
  %v145 = vunpack.c.l.b16 %v130
  %v146 = vunpack.c.l.b16 %v131
  %v147 = vunpack.c.l.b16 %v132
  %v148 = vunpack.c.l.b16 %v133
  %v149 = vpack.c.b16 %v146, %v145
  %v150 = vpack.c.b16 %v148, %v147
  %153 = vmatprep.subr.bf16.mxu0 0
  %154 = vmatpush1.bf16.msra.mxu0 0
  %155 = vmatprep.subr.bf16.mxu0 0
  %156 = vmatpush1.bf16.msra.mxu0 0
  %157 = vmatprep.subr.bf16.mxu0 0
  %158 = vmatpush1.bf16.msra.mxu0 0
  %159 = vmatprep.subr.bf16.mxu0 0
  %160 = vmatpush1.bf16.msra.mxu0 0
  %161 = vmatprep.subr.bf16.mxu0 0
  %162 = vmatpush1.bf16.msra.mxu0 0
  %163 = vmatprep.subr.bf16.mxu0 0
  %164 = vmatpush1.bf16.msra.mxu0 0
  %165 = vmatprep.subr.bf16.mxu0 0
  %166 = vmatpush1.bf16.msra.mxu0 %v150
  %167 = vmatprep.subr.bf16.mxu0 0
  %168 = vmatpush1.bf16.msra.mxu0 %v149
  %169 = vmatprep.subr.bf16.mxu0 0
  %170 = vmatpush2.bf16.msra.mxu0 0
  %171 = vmatprep.subr.bf16.mxu0 0
  %172 = vmatpush2.bf16.msra.mxu0 0
  %173 = vmatprep.subr.bf16.mxu0 0
  %174 = vmatpush2.bf16.msra.mxu0 0
  %175 = vmatprep.subr.bf16.mxu0 0
  %176 = vmatpush2.bf16.msra.mxu0 0
  %177 = vmatprep.subr.bf16.mxu0 0
  %178 = vmatpush2.bf16.msra.mxu0 0
  %179 = vmatprep.subr.bf16.mxu0 0
  %180 = vmatpush2.bf16.msra.mxu0 0
  %181 = vmatprep.subr.bf16.mxu0 0
  %182 = vmatpush2.bf16.msra.mxu0 0
  %183 = vmatprep.subr.bf16.mxu0 0
  %184 = vmatpush2.bf16.msra.mxu0 0
  %185 = vmatprep.mubr.bf16.mxu0 0
  %186 = vmatmul.mubr.bf16.gmra.mxu0 %v85
  %v187 = vpop.f32.mrf.mxu0
  %v188 = vadd.f32 %v139, %v187
  %v189 = vpop.f32.mrf.mxu0
  %v190 = vpop.f32.mrf.mxu0
  %v191 = vadd.f32 %v139, %v190
  %v192 = vpop.f32.mrf.mxu0
  %193 = vdwg.mxu0
  %v194 = vld [vmem:[%s5] sm:$0xf]
  %v195 = vld [vmem:[%s5 + $0x4] sm:$0xf]
  %v196 = vld [vmem:[%s5 + $0x8] sm:$0xf]
  %v197 = vld [vmem:[%s5 + $0xc] sm:$0xf]
  %v198 = vld [vmem:[%s6] sm:$0x1]
  %v200 = vlaneseq
  %v201 = vshrl.u32 %v200, 7
  %v202 = vsub.s32 0, %v201
  %v203 = vrot.slane %v198, %v202
  %v209 = vunpack.c.l.b16 %v194
  %v210 = vunpack.c.l.b16 %v195
  %v211 = vunpack.c.l.b16 %v196
  %v212 = vunpack.c.l.b16 %v197
  %v213 = vpack.c.b16 %v210, %v209
  %v214 = vpack.c.b16 %v212, %v211
  %217 = vmatprep.subr.bf16.mxu0 0
  %218 = vmatpush1.bf16.msra.mxu0 0
  %219 = vmatprep.subr.bf16.mxu0 0
  %220 = vmatpush1.bf16.msra.mxu0 0
  %221 = vmatprep.subr.bf16.mxu0 0
  %222 = vmatpush1.bf16.msra.mxu0 0
  %223 = vmatprep.subr.bf16.mxu0 0
  %224 = vmatpush1.bf16.msra.mxu0 0
  %225 = vmatprep.subr.bf16.mxu0 0
  %226 = vmatpush1.bf16.msra.mxu0 0
  %227 = vmatprep.subr.bf16.mxu0 0
  %228 = vmatpush1.bf16.msra.mxu0 0
  %229 = vmatprep.subr.bf16.mxu0 0
  %230 = vmatpush1.bf16.msra.mxu0 %v214
  %231 = vmatprep.subr.bf16.mxu0 0
  %232 = vmatpush1.bf16.msra.mxu0 %v213
  %233 = vmatprep.subr.bf16.mxu0 0
  %234 = vmatpush2.bf16.msra.mxu0 0
  %235 = vmatprep.subr.bf16.mxu0 0
  %236 = vmatpush2.bf16.msra.mxu0 0
  %237 = vmatprep.subr.bf16.mxu0 0
  %238 = vmatpush2.bf16.msra.mxu0 0
  %239 = vmatprep.subr.bf16.mxu0 0
  %240 = vmatpush2.bf16.msra.mxu0 0
  %241 = vmatprep.subr.bf16.mxu0 0
  %242 = vmatpush2.bf16.msra.mxu0 0
  %243 = vmatprep.subr.bf16.mxu0 0
  %244 = vmatpush2.bf16.msra.mxu0 0
  %245 = vmatprep.subr.bf16.mxu0 0
  %246 = vmatpush2.bf16.msra.mxu0 0
  %247 = vmatprep.subr.bf16.mxu0 0
  %248 = vmatpush2.bf16.msra.mxu0 0
  %249 = vmatprep.mubr.bf16.mxu0 0
  %250 = vmatmul.mubr.bf16.gmra.mxu0 %v85
  %v251 = vpop.f32.mrf.mxu0
  %v252 = vadd.f32 %v203, %v251
  %v253 = vpop.f32.mrf.mxu0
  %v254 = vpop.f32.mrf.mxu0
  %v255 = vadd.f32 %v203, %v254
  %v256 = vpop.f32.mrf.mxu0
  %257 = vdwg.mxu0
  %v258 = vpack.c.bf16 %v191, %v188
  %v259 = vlaneseq
  %v260 = vshrl.u32 %v259, 7
  %v261 = vadd.s32 %v260, 8
  %v262 = vlaneseq
  %v263 = vand.u32 %v262, 127
  %vm264 = vcmp.lt.s32.totalorder %v260, 0
  %v265 = vsub.s32 0, %v260
  %v266 = vsel %vm264, %v265, %v260
  %v267 = vshrl.u32 %v266, 3
  %v268 = vand.u32 %v266, 7
  %v269 = vsub.s32 0, %v268
  %v270 = vsel %vm264, %v269, %v268
  %vm271 = vcmp.lt.s32.totalorder %v261, 0
  %v272 = vsub.s32 0, %v261
  %v273 = vsel %vm271, %v272, %v261
  %v274 = vshrl.u32 %v273, 3
  %v275 = vand.u32 %v273, 7
  %v276 = vsub.s32 0, %v275
  %v277 = vsel %vm271, %v276, %v275
  %vm278 = vcmp.ne.s32.totalorder %v270, 0
  %vm279 = vcmp.ne.s32.totalorder %v277, 0
  %vm280 = vcmp.lt.s32.totalorder %v270, 0
  %vm281 = vcmp.lt.s32.totalorder %v277, 0
  %vm282 = vmand %vm280, %vm278
  %vm283 = vmand %vm281, %vm279
  %v284 = vadd.s32 %v270, 8
  %v285 = vadd.s32 %v277, 8
  %v286 = vsel %vm282, %v284, %v270
  %v287 = vsel %vm283, %v285, %v277
  %vm288 = vcmp.lt.s32.totalorder %v263, 0
  %v289 = vsub.s32 0, %v263
  %v290 = vsel %vm288, %v289, %v263
  %v291 = vshrl.u32 %v290, 3
  %v292 = vand.u32 %v290, 7
  %v293 = vsub.s32 0, %v292
  %v294 = vsel %vm288, %v293, %v292
  %vm295 = vcmp.ne.s32.totalorder %v294, 0
  %vm296 = vcmp.lt.s32.totalorder %v294, 0
  %vm297 = vmand %vm296, %vm295
  %v298 = vadd.s32 %v294, 8
  %v299 = vsel %vm297, %v298, %v294
  %vm300 = vcmp.eq.s32.totalorder %v286, %v299
  %vm301 = vcmp.eq.s32.totalorder %v287, %v299
  %vm302 = vcmp.ge.s32.totalorder %v263, 0
  %vm303 = vcmp.lt.s32.totalorder %v263, 8
  %vm304 = vmand %vm302, %vm303
  %v305 = vsel %vm304, 1, 0
  %vm306 = vcmp.eq.s32.totalorder %v305, 1
  %v307 = vsel %vm306, %v128, 0.0
  %v308 = vsel %vm306, %v129, 0.0
  %v309 = vpack.c.bf16 %v308, %v307
  %v311 = vsel %vm83, %v309, 0
  %v314 = vsel %vm83, %v258, 0
  %316 = vmatprep.subr.bf16.mxu0 0
  %317 = vmatpush1.bf16.xpose.msra.mxu0 0
  %318 = vmatprep.subr.bf16.mxu0 0
  %319 = vmatpush1.bf16.xpose.msra.mxu0 0
  %320 = vmatprep.subr.bf16.mxu0 0
  %321 = vmatpush1.bf16.xpose.msra.mxu0 0
  %322 = vmatprep.subr.bf16.mxu0 0
  %323 = vmatpush1.bf16.xpose.msra.mxu0 0
  %324 = vmatprep.subr.bf16.mxu0 0
  %325 = vmatpush1.bf16.xpose.msra.mxu0 0
  %326 = vmatprep.subr.bf16.mxu0 0
  %327 = vmatpush1.bf16.xpose.msra.mxu0 0
  %328 = vmatprep.subr.bf16.mxu0 0
  %329 = vmatpush1.bf16.xpose.msra.mxu0 0
  %330 = vmatprep.subr.bf16.mxu0 0
  %331 = vmatpush1.bf16.xpose.msra.mxu0 %v314
  %332 = vmatprep.subr.bf16.mxu0 0
  %333 = vmatpush2.bf16.xpose.msra.mxu0 0
  %334 = vmatprep.subr.bf16.mxu0 0
  %335 = vmatpush2.bf16.xpose.msra.mxu0 0
  %336 = vmatprep.subr.bf16.mxu0 0
  %337 = vmatpush2.bf16.xpose.msra.mxu0 0
  %338 = vmatprep.subr.bf16.mxu0 0
  %339 = vmatpush2.bf16.xpose.msra.mxu0 0
  %340 = vmatprep.subr.bf16.mxu0 0
  %341 = vmatpush2.bf16.xpose.msra.mxu0 0
  %342 = vmatprep.subr.bf16.mxu0 0
  %343 = vmatpush2.bf16.xpose.msra.mxu0 0
  %344 = vmatprep.subr.bf16.mxu0 0
  %345 = vmatpush2.bf16.xpose.msra.mxu0 0
  %346 = vmatprep.subr.bf16.mxu0 0
  %347 = vmatpush2.bf16.xpose.msra.mxu0 0
  %348 = vmatprep.mubr.bf16.mxu0 0
  %349 = vmatmul.mubr.bf16.gmra.mxu0 %v311
  %v350 = vpop.f32.mrf.mxu0
  %v351 = vadd.f32 0.0, %v350
  %v352 = vpop.f32.mrf.mxu0
  %v353 = vpop.f32.mrf.mxu0
  %v354 = vadd.f32 0.0, %v353
  %v355 = vpop.f32.mrf.mxu0
  %356 = vdwg.mxu0
  %v357 = vsel %vm300, %v351, -1e+30
  %v358 = vsel %vm301, %v354, -1e+30
  %vm359 = vcmask 130048
  %v360 = vsel %vm359, %v357, -inf
  %361 = vmax.xlane.f32.xlu0 %v360
  %v362 = vpop.xlane.xlu0 %361
  %v363 = vsel %vm359, %v358, -inf
  %364 = vmax.xlane.f32.xlu0 %v363
  %v365 = vpop.xlane.xlu0 %364
  %v366 = vsub.f32 %v357, %v362
  %v367 = vsub.f32 %v358, %v365
  %v368 = vmul.f32 %v366, 1.442695
  %v369 = vpow.pop %v368
  %v370 = vmul.f32 %v367, 1.442695
  %v371 = vpow.pop %v370
  %v372 = vsel %vm359, %v369, 0.0
  %373 = vadd.xlane.f32.xlu0 %v372
  %v374 = vpop.xlane.xlu0 %373
  %v375 = vsel %vm359, %v371, 0.0
  %376 = vadd.xlane.f32.xlu0 %v375
  %v377 = vpop.xlane.xlu0 %376
  %v378 = vrcp.pop %v374
  %v379 = vrcp.pop %v377
  %v380 = vmul.f32 %v369, %v378
  %v381 = vmul.f32 %v371, %v379
  %v382 = vsel %vm306, %v252, 0.0
  %v383 = vsel %vm306, %v255, 0.0
  %v384 = vpack.c.bf16 %v383, %v382
  %v385 = vpack.c.bf16 %v381, %v380
  %vm386 = vcmp.ge.s32.totalorder %v263, 8
  %vm387 = vcmp.lt.s32.totalorder %v263, 16
  %vm388 = vmand %vm386, %vm387
  %v389 = vsel %vm388, 1, 0
  %vm390 = vcmp.eq.s32.totalorder %v389, 1
  %v391 = vsel %vm390, %v128, 0.0
  %v392 = vsel %vm390, %v129, 0.0
  %v393 = vpack.c.bf16 %v392, %v391
  %v395 = vsel %vm83, %v393, 0
  %397 = vmatprep.subr.bf16.mxu0 0
  %398 = vmatpush1.bf16.xpose.msra.mxu0 0
  %399 = vmatprep.subr.bf16.mxu0 0
  %400 = vmatpush1.bf16.xpose.msra.mxu0 0
  %401 = vmatprep.subr.bf16.mxu0 0
  %402 = vmatpush1.bf16.xpose.msra.mxu0 0
  %403 = vmatprep.subr.bf16.mxu0 0
  %404 = vmatpush1.bf16.xpose.msra.mxu0 0
  %405 = vmatprep.subr.bf16.mxu0 0
  %406 = vmatpush1.bf16.xpose.msra.mxu0 0
  %407 = vmatprep.subr.bf16.mxu0 0
  %408 = vmatpush1.bf16.xpose.msra.mxu0 0
  %409 = vmatprep.subr.bf16.mxu0 0
  %410 = vmatpush1.bf16.xpose.msra.mxu0 0
  %411 = vmatprep.subr.bf16.mxu0 0
  %412 = vmatpush1.bf16.xpose.msra.mxu0 %v314
  %413 = vmatprep.subr.bf16.mxu0 0
  %414 = vmatpush2.bf16.xpose.msra.mxu0 0
  %415 = vmatprep.subr.bf16.mxu0 0
  %416 = vmatpush2.bf16.xpose.msra.mxu0 0
  %417 = vmatprep.subr.bf16.mxu0 0
  %418 = vmatpush2.bf16.xpose.msra.mxu0 0
  %419 = vmatprep.subr.bf16.mxu0 0
  %420 = vmatpush2.bf16.xpose.msra.mxu0 0
  %421 = vmatprep.subr.bf16.mxu0 0
  %422 = vmatpush2.bf16.xpose.msra.mxu0 0
  %423 = vmatprep.subr.bf16.mxu0 0
  %424 = vmatpush2.bf16.xpose.msra.mxu0 0
  %425 = vmatprep.subr.bf16.mxu0 0
  %426 = vmatpush2.bf16.xpose.msra.mxu0 0
  %427 = vmatprep.subr.bf16.mxu0 0
  %428 = vmatpush2.bf16.xpose.msra.mxu0 0
  %429 = vmatprep.mubr.bf16.mxu0 0
  %430 = vmatmul.mubr.bf16.gmra.mxu0 %v395
  %v431 = vpop.f32.mrf.mxu0
  %v432 = vadd.f32 0.0, %v431
  %v433 = vpop.f32.mrf.mxu0
  %v434 = vpop.f32.mrf.mxu0
  %v435 = vadd.f32 0.0, %v434
  %v436 = vpop.f32.mrf.mxu0
  %437 = vdwg.mxu0
  %v438 = vsel %vm300, %v432, -1e+30
  %v439 = vsel %vm301, %v435, -1e+30
  %v440 = vsel %vm359, %v438, -inf
  %441 = vmax.xlane.f32.xlu0 %v440
  %v442 = vpop.xlane.xlu0 %441
  %v443 = vsel %vm359, %v439, -inf
  %444 = vmax.xlane.f32.xlu0 %v443
  %v445 = vpop.xlane.xlu0 %444
  %v446 = vsub.f32 %v438, %v442
  %v447 = vsub.f32 %v439, %v445
  %v448 = vmul.f32 %v446, 1.442695
  %v449 = vpow.pop %v448
  %v450 = vmul.f32 %v447, 1.442695
  %v451 = vpow.pop %v450
  %v452 = vsel %vm359, %v449, 0.0
  %453 = vadd.xlane.f32.xlu0 %v452
  %v454 = vpop.xlane.xlu0 %453
  %v455 = vsel %vm359, %v451, 0.0
  %456 = vadd.xlane.f32.xlu0 %v455
  %v457 = vpop.xlane.xlu0 %456
  %v458 = vrcp.pop %v454
  %v459 = vrcp.pop %v457
  %v460 = vmul.f32 %v449, %v458
  %v461 = vmul.f32 %v451, %v459
  %v462 = vsel %vm390, %v252, 0.0
  %v463 = vsel %vm390, %v255, 0.0
  %v464 = vpack.c.bf16 %v463, %v462
  %v465 = vpack.c.bf16 %v461, %v460
  %v467 = vsel %vm359, %v465, 0
  %469 = vmatprep.subr.bf16.mxu0 0
  %470 = vmatpush1.bf16.msra.mxu0 0
  %471 = vmatprep.subr.bf16.mxu0 0
  %472 = vmatpush1.bf16.msra.mxu0 0
  %473 = vmatprep.subr.bf16.mxu0 0
  %474 = vmatpush1.bf16.msra.mxu0 0
  %475 = vmatprep.subr.bf16.mxu0 0
  %476 = vmatpush1.bf16.msra.mxu0 0
  %477 = vmatprep.subr.bf16.mxu0 0
  %478 = vmatpush1.bf16.msra.mxu0 0
  %479 = vmatprep.subr.bf16.mxu0 0
  %480 = vmatpush1.bf16.msra.mxu0 0
  %481 = vmatprep.subr.bf16.mxu0 0
  %482 = vmatpush1.bf16.msra.mxu0 0
  %483 = vmatprep.subr.bf16.mxu0 0
  %484 = vmatpush1.bf16.msra.mxu0 %v464
  %485 = vmatprep.subr.bf16.mxu0 0
  %486 = vmatpush2.bf16.msra.mxu0 0
  %487 = vmatprep.subr.bf16.mxu0 0
  %488 = vmatpush2.bf16.msra.mxu0 0
  %489 = vmatprep.subr.bf16.mxu0 0
  %490 = vmatpush2.bf16.msra.mxu0 0
  %491 = vmatprep.subr.bf16.mxu0 0
  %492 = vmatpush2.bf16.msra.mxu0 0
  %493 = vmatprep.subr.bf16.mxu0 0
  %494 = vmatpush2.bf16.msra.mxu0 0
  %495 = vmatprep.subr.bf16.mxu0 0
  %496 = vmatpush2.bf16.msra.mxu0 0
  %497 = vmatprep.subr.bf16.mxu0 0
  %498 = vmatpush2.bf16.msra.mxu0 0
  %499 = vmatprep.subr.bf16.mxu0 0
  %500 = vmatpush2.bf16.msra.mxu0 0
  %501 = vmatprep.mubr.bf16.mxu0 0
  %502 = vmatmul.mubr.bf16.gmra.mxu0 %v467
  %v503 = vpop.f32.mrf.mxu0
  %v504 = vadd.f32 0.0, %v503
  %v505 = vpop.f32.mrf.mxu0
  %v506 = vpop.f32.mrf.mxu0
  %v507 = vadd.f32 0.0, %v506
  %v508 = vpop.f32.mrf.mxu0
  %509 = vdwg.mxu0
  %v511 = vsel %vm359, %v385, 0
  %513 = vmatprep.subr.bf16.mxu0 0
  %514 = vmatpush1.bf16.msra.mxu0 0
  %515 = vmatprep.subr.bf16.mxu0 0
  %516 = vmatpush1.bf16.msra.mxu0 0
  %517 = vmatprep.subr.bf16.mxu0 0
  %518 = vmatpush1.bf16.msra.mxu0 0
  %519 = vmatprep.subr.bf16.mxu0 0
  %520 = vmatpush1.bf16.msra.mxu0 0
  %521 = vmatprep.subr.bf16.mxu0 0
  %522 = vmatpush1.bf16.msra.mxu0 0
  %523 = vmatprep.subr.bf16.mxu0 0
  %524 = vmatpush1.bf16.msra.mxu0 0
  %525 = vmatprep.subr.bf16.mxu0 0
  %526 = vmatpush1.bf16.msra.mxu0 0
  %527 = vmatprep.subr.bf16.mxu0 0
  %528 = vmatpush1.bf16.msra.mxu0 %v384
  %529 = vmatprep.subr.bf16.mxu0 0
  %530 = vmatpush2.bf16.msra.mxu0 0
  %531 = vmatprep.subr.bf16.mxu0 0
  %532 = vmatpush2.bf16.msra.mxu0 0
  %533 = vmatprep.subr.bf16.mxu0 0
  %534 = vmatpush2.bf16.msra.mxu0 0
  %535 = vmatprep.subr.bf16.mxu0 0
  %536 = vmatpush2.bf16.msra.mxu0 0
  %537 = vmatprep.subr.bf16.mxu0 0
  %538 = vmatpush2.bf16.msra.mxu0 0
  %539 = vmatprep.subr.bf16.mxu0 0
  %540 = vmatpush2.bf16.msra.mxu0 0
  %541 = vmatprep.subr.bf16.mxu0 0
  %542 = vmatpush2.bf16.msra.mxu0 0
  %543 = vmatprep.subr.bf16.mxu0 0
  %544 = vmatpush2.bf16.msra.mxu0 0
  %545 = vmatprep.mubr.bf16.mxu0 0
  %546 = vmatmul.mubr.bf16.gmra.mxu0 %v511
  %v547 = vpop.f32.mrf.mxu0
  %v548 = vadd.f32 %v504, %v547
  %v549 = vpop.f32.mrf.mxu0
  %v550 = vpop.f32.mrf.mxu0
  %v551 = vadd.f32 %v507, %v550
  %v552 = vpop.f32.mrf.mxu0
  %553 = vdwg.mxu0
  %vm554 = vcmp.ge.s32.totalorder %v263, 16
  %vm555 = vcmp.lt.s32.totalorder %v263, 24
  %vm556 = vmand %vm554, %vm555
  %v557 = vsel %vm556, 1, 0
  %vm558 = vcmp.eq.s32.totalorder %v557, 1
  %v559 = vsel %vm558, %v128, 0.0
  %v560 = vsel %vm558, %v129, 0.0
  %v561 = vpack.c.bf16 %v560, %v559
  %v563 = vsel %vm83, %v561, 0
  %565 = vmatprep.subr.bf16.mxu0 0
  %566 = vmatpush1.bf16.xpose.msra.mxu0 0
  %567 = vmatprep.subr.bf16.mxu0 0
  %568 = vmatpush1.bf16.xpose.msra.mxu0 0
  %569 = vmatprep.subr.bf16.mxu0 0
  %570 = vmatpush1.bf16.xpose.msra.mxu0 0
  %571 = vmatprep.subr.bf16.mxu0 0
  %572 = vmatpush1.bf16.xpose.msra.mxu0 0
  %573 = vmatprep.subr.bf16.mxu0 0
  %574 = vmatpush1.bf16.xpose.msra.mxu0 0
  %575 = vmatprep.subr.bf16.mxu0 0
  %576 = vmatpush1.bf16.xpose.msra.mxu0 0
  %577 = vmatprep.subr.bf16.mxu0 0
  %578 = vmatpush1.bf16.xpose.msra.mxu0 0
  %579 = vmatprep.subr.bf16.mxu0 0
  %580 = vmatpush1.bf16.xpose.msra.mxu0 %v314
  %581 = vmatprep.subr.bf16.mxu0 0
  %582 = vmatpush2.bf16.xpose.msra.mxu0 0
  %583 = vmatprep.subr.bf16.mxu0 0
  %584 = vmatpush2.bf16.xpose.msra.mxu0 0
  %585 = vmatprep.subr.bf16.mxu0 0
  %586 = vmatpush2.bf16.xpose.msra.mxu0 0
  %587 = vmatprep.subr.bf16.mxu0 0
  %588 = vmatpush2.bf16.xpose.msra.mxu0 0
  %589 = vmatprep.subr.bf16.mxu0 0
  %590 = vmatpush2.bf16.xpose.msra.mxu0 0
  %591 = vmatprep.subr.bf16.mxu0 0
  %592 = vmatpush2.bf16.xpose.msra.mxu0 0
  %593 = vmatprep.subr.bf16.mxu0 0
  %594 = vmatpush2.bf16.xpose.msra.mxu0 0
  %595 = vmatprep.subr.bf16.mxu0 0
  %596 = vmatpush2.bf16.xpose.msra.mxu0 0
  %597 = vmatprep.mubr.bf16.mxu0 0
  %598 = vmatmul.mubr.bf16.gmra.mxu0 %v563
  %v599 = vpop.f32.mrf.mxu0
  %v600 = vadd.f32 0.0, %v599
  %v601 = vpop.f32.mrf.mxu0
  %v602 = vpop.f32.mrf.mxu0
  %v603 = vadd.f32 0.0, %v602
  %v604 = vpop.f32.mrf.mxu0
  %605 = vdwg.mxu0
  %v606 = vsel %vm300, %v600, -1e+30
  %v607 = vsel %vm301, %v603, -1e+30
  %v608 = vsel %vm359, %v606, -inf
  %609 = vmax.xlane.f32.xlu0 %v608
  %v610 = vpop.xlane.xlu0 %609
  %v611 = vsel %vm359, %v607, -inf
  %612 = vmax.xlane.f32.xlu0 %v611
  %v613 = vpop.xlane.xlu0 %612
  %v614 = vsub.f32 %v606, %v610
  %v615 = vsub.f32 %v607, %v613
  %v616 = vmul.f32 %v614, 1.442695
  %v617 = vpow.pop %v616
  %v618 = vmul.f32 %v615, 1.442695
  %v619 = vpow.pop %v618
  %v620 = vsel %vm359, %v617, 0.0
  %621 = vadd.xlane.f32.xlu0 %v620
  %v622 = vpop.xlane.xlu0 %621
  %v623 = vsel %vm359, %v619, 0.0
  %624 = vadd.xlane.f32.xlu0 %v623
  %v625 = vpop.xlane.xlu0 %624
  %v626 = vrcp.pop %v622
  %v627 = vrcp.pop %v625
  %v628 = vmul.f32 %v617, %v626
  %v629 = vmul.f32 %v619, %v627
  %v630 = vsel %vm558, %v252, 0.0
  %v631 = vsel %vm558, %v255, 0.0
  %v632 = vpack.c.bf16 %v631, %v630
  %v633 = vpack.c.bf16 %v629, %v628
  %v635 = vsel %vm359, %v633, 0
  %637 = vmatprep.subr.bf16.mxu0 0
  %638 = vmatpush1.bf16.msra.mxu0 0
  %639 = vmatprep.subr.bf16.mxu0 0
  %640 = vmatpush1.bf16.msra.mxu0 0
  %641 = vmatprep.subr.bf16.mxu0 0
  %642 = vmatpush1.bf16.msra.mxu0 0
  %643 = vmatprep.subr.bf16.mxu0 0
  %644 = vmatpush1.bf16.msra.mxu0 0
  %645 = vmatprep.subr.bf16.mxu0 0
  %646 = vmatpush1.bf16.msra.mxu0 0
  %647 = vmatprep.subr.bf16.mxu0 0
  %648 = vmatpush1.bf16.msra.mxu0 0
  %649 = vmatprep.subr.bf16.mxu0 0
  %650 = vmatpush1.bf16.msra.mxu0 0
  %651 = vmatprep.subr.bf16.mxu0 0
  %652 = vmatpush1.bf16.msra.mxu0 %v632
  %653 = vmatprep.subr.bf16.mxu0 0
  %654 = vmatpush2.bf16.msra.mxu0 0
  %655 = vmatprep.subr.bf16.mxu0 0
  %656 = vmatpush2.bf16.msra.mxu0 0
  %657 = vmatprep.subr.bf16.mxu0 0
  %658 = vmatpush2.bf16.msra.mxu0 0
  %659 = vmatprep.subr.bf16.mxu0 0
  %660 = vmatpush2.bf16.msra.mxu0 0
  %661 = vmatprep.subr.bf16.mxu0 0
  %662 = vmatpush2.bf16.msra.mxu0 0
  %663 = vmatprep.subr.bf16.mxu0 0
  %664 = vmatpush2.bf16.msra.mxu0 0
  %665 = vmatprep.subr.bf16.mxu0 0
  %666 = vmatpush2.bf16.msra.mxu0 0
  %667 = vmatprep.subr.bf16.mxu0 0
  %668 = vmatpush2.bf16.msra.mxu0 0
  %669 = vmatprep.mubr.bf16.mxu0 0
  %670 = vmatmul.mubr.bf16.gmra.mxu0 %v635
  %v671 = vpop.f32.mrf.mxu0
  %v672 = vadd.f32 0.0, %v671
  %v673 = vpop.f32.mrf.mxu0
  %v674 = vpop.f32.mrf.mxu0
  %v675 = vadd.f32 0.0, %v674
  %v676 = vpop.f32.mrf.mxu0
  %677 = vdwg.mxu0
  %v678 = vadd.f32 %v548, %v672
  %v679 = vadd.f32 %v551, %v675
  %vm680 = vcmp.ge.s32.totalorder %v263, 24
  %vm681 = vcmp.lt.s32.totalorder %v263, 32
  %vm682 = vmand %vm680, %vm681
  %v683 = vsel %vm682, 1, 0
  %vm684 = vcmp.eq.s32.totalorder %v683, 1
  %v685 = vsel %vm684, %v128, 0.0
  %v686 = vsel %vm684, %v129, 0.0
  %v687 = vpack.c.bf16 %v686, %v685
  %v689 = vsel %vm83, %v687, 0
  %691 = vmatprep.subr.bf16.mxu0 0
  %692 = vmatpush1.bf16.xpose.msra.mxu0 0
  %693 = vmatprep.subr.bf16.mxu0 0
  %694 = vmatpush1.bf16.xpose.msra.mxu0 0
  %695 = vmatprep.subr.bf16.mxu0 0
  %696 = vmatpush1.bf16.xpose.msra.mxu0 0
  %697 = vmatprep.subr.bf16.mxu0 0
  %698 = vmatpush1.bf16.xpose.msra.mxu0 0
  %699 = vmatprep.subr.bf16.mxu0 0
  %700 = vmatpush1.bf16.xpose.msra.mxu0 0
  %701 = vmatprep.subr.bf16.mxu0 0
  %702 = vmatpush1.bf16.xpose.msra.mxu0 0
  %703 = vmatprep.subr.bf16.mxu0 0
  %704 = vmatpush1.bf16.xpose.msra.mxu0 0
  %705 = vmatprep.subr.bf16.mxu0 0
  %706 = vmatpush1.bf16.xpose.msra.mxu0 %v314
  %707 = vmatprep.subr.bf16.mxu0 0
  %708 = vmatpush2.bf16.xpose.msra.mxu0 0
  %709 = vmatprep.subr.bf16.mxu0 0
  %710 = vmatpush2.bf16.xpose.msra.mxu0 0
  %711 = vmatprep.subr.bf16.mxu0 0
  %712 = vmatpush2.bf16.xpose.msra.mxu0 0
  %713 = vmatprep.subr.bf16.mxu0 0
  %714 = vmatpush2.bf16.xpose.msra.mxu0 0
  %715 = vmatprep.subr.bf16.mxu0 0
  %716 = vmatpush2.bf16.xpose.msra.mxu0 0
  %717 = vmatprep.subr.bf16.mxu0 0
  %718 = vmatpush2.bf16.xpose.msra.mxu0 0
  %719 = vmatprep.subr.bf16.mxu0 0
  %720 = vmatpush2.bf16.xpose.msra.mxu0 0
  %721 = vmatprep.subr.bf16.mxu0 0
  %722 = vmatpush2.bf16.xpose.msra.mxu0 0
  %723 = vmatprep.mubr.bf16.mxu0 0
  %724 = vmatmul.mubr.bf16.gmra.mxu0 %v689
  %v725 = vpop.f32.mrf.mxu0
  %v726 = vadd.f32 0.0, %v725
  %v727 = vpop.f32.mrf.mxu0
  %v728 = vpop.f32.mrf.mxu0
  %v729 = vadd.f32 0.0, %v728
  %v730 = vpop.f32.mrf.mxu0
  %731 = vdwg.mxu0
  %v732 = vsel %vm300, %v726, -1e+30
  %v733 = vsel %vm301, %v729, -1e+30
  %v734 = vsel %vm359, %v732, -inf
  %735 = vmax.xlane.f32.xlu0 %v734
  %v736 = vpop.xlane.xlu0 %735
  %v737 = vsel %vm359, %v733, -inf
  %738 = vmax.xlane.f32.xlu0 %v737
  %v739 = vpop.xlane.xlu0 %738
  %v740 = vsub.f32 %v732, %v736
  %v741 = vsub.f32 %v733, %v739
  %v742 = vmul.f32 %v740, 1.442695
  %v743 = vpow.pop %v742
  %v744 = vmul.f32 %v741, 1.442695
  %v745 = vpow.pop %v744
  %v746 = vsel %vm359, %v743, 0.0
  %747 = vadd.xlane.f32.xlu0 %v746
  %v748 = vpop.xlane.xlu0 %747
  %v749 = vsel %vm359, %v745, 0.0
  %750 = vadd.xlane.f32.xlu0 %v749
  %v751 = vpop.xlane.xlu0 %750
  %v752 = vrcp.pop %v748
  %v753 = vrcp.pop %v751
  %v754 = vmul.f32 %v743, %v752
  %v755 = vmul.f32 %v745, %v753
  %v756 = vsel %vm684, %v252, 0.0
  %v757 = vsel %vm684, %v255, 0.0
  %v758 = vpack.c.bf16 %v757, %v756
  %v759 = vpack.c.bf16 %v755, %v754
  %v761 = vsel %vm359, %v759, 0
  %763 = vmatprep.subr.bf16.mxu0 0
  %764 = vmatpush1.bf16.msra.mxu0 0
  %765 = vmatprep.subr.bf16.mxu0 0
  %766 = vmatpush1.bf16.msra.mxu0 0
  %767 = vmatprep.subr.bf16.mxu0 0
  %768 = vmatpush1.bf16.msra.mxu0 0
  %769 = vmatprep.subr.bf16.mxu0 0
  %770 = vmatpush1.bf16.msra.mxu0 0
  %771 = vmatprep.subr.bf16.mxu0 0
  %772 = vmatpush1.bf16.msra.mxu0 0
  %773 = vmatprep.subr.bf16.mxu0 0
  %774 = vmatpush1.bf16.msra.mxu0 0
  %775 = vmatprep.subr.bf16.mxu0 0
  %776 = vmatpush1.bf16.msra.mxu0 0
  %777 = vmatprep.subr.bf16.mxu0 0
  %778 = vmatpush1.bf16.msra.mxu0 %v758
  %779 = vmatprep.subr.bf16.mxu0 0
  %780 = vmatpush2.bf16.msra.mxu0 0
  %781 = vmatprep.subr.bf16.mxu0 0
  %782 = vmatpush2.bf16.msra.mxu0 0
  %783 = vmatprep.subr.bf16.mxu0 0
  %784 = vmatpush2.bf16.msra.mxu0 0
  %785 = vmatprep.subr.bf16.mxu0 0
  %786 = vmatpush2.bf16.msra.mxu0 0
  %787 = vmatprep.subr.bf16.mxu0 0
  %788 = vmatpush2.bf16.msra.mxu0 0
  %789 = vmatprep.subr.bf16.mxu0 0
  %790 = vmatpush2.bf16.msra.mxu0 0
  %791 = vmatprep.subr.bf16.mxu0 0
  %792 = vmatpush2.bf16.msra.mxu0 0
  %793 = vmatprep.subr.bf16.mxu0 0
  %794 = vmatpush2.bf16.msra.mxu0 0
  %795 = vmatprep.mubr.bf16.mxu0 0
  %796 = vmatmul.mubr.bf16.gmra.mxu0 %v761
  %v797 = vpop.f32.mrf.mxu0
  %v798 = vadd.f32 0.0, %v797
  %v799 = vpop.f32.mrf.mxu0
  %v800 = vpop.f32.mrf.mxu0
  %v801 = vadd.f32 0.0, %v800
  %v802 = vpop.f32.mrf.mxu0
  %803 = vdwg.mxu0
  %v804 = vadd.f32 %v678, %v798
  %v805 = vadd.f32 %v679, %v801
  %v806 = vpack.c.bf16 %v805, %v804
  %v807 = vld [vmem:[%s7] sm:$0xf]
  %v808 = vld [vmem:[%s7 + $0x4] sm:$0xf]
  %v809 = vld [vmem:[%s7 + $0x8] sm:$0xf]
  %v810 = vld [vmem:[%s7 + $0xc] sm:$0xf]
  %v811 = vld [vmem:[%s8] sm:$0x1]
  %v813 = vlaneseq
  %v814 = vshrl.u32 %v813, 7
  %v815 = vsub.s32 0, %v814
  %v816 = vrot.slane %v811, %v815
  %v822 = vunpack.c.l.b16 %v807
  %v823 = vunpack.c.l.b16 %v808
  %v824 = vunpack.c.l.b16 %v809
  %v825 = vunpack.c.l.b16 %v810
  %v826 = vpack.c.b16 %v823, %v822
  %v827 = vpack.c.b16 %v825, %v824
  %v831 = vsel %vm83, %v806, 0
  %833 = vmatprep.subr.bf16.mxu0 0
  %834 = vmatpush1.bf16.msra.mxu0 0
  %835 = vmatprep.subr.bf16.mxu0 0
  %836 = vmatpush1.bf16.msra.mxu0 0
  %837 = vmatprep.subr.bf16.mxu0 0
  %838 = vmatpush1.bf16.msra.mxu0 0
  %839 = vmatprep.subr.bf16.mxu0 0
  %840 = vmatpush1.bf16.msra.mxu0 0
  %841 = vmatprep.subr.bf16.mxu0 0
  %842 = vmatpush1.bf16.msra.mxu0 0
  %843 = vmatprep.subr.bf16.mxu0 0
  %844 = vmatpush1.bf16.msra.mxu0 0
  %845 = vmatprep.subr.bf16.mxu0 0
  %846 = vmatpush1.bf16.msra.mxu0 %v827
  %847 = vmatprep.subr.bf16.mxu0 0
  %848 = vmatpush1.bf16.msra.mxu0 %v826
  %849 = vmatprep.subr.bf16.mxu0 0
  %850 = vmatpush2.bf16.msra.mxu0 0
  %851 = vmatprep.subr.bf16.mxu0 0
  %852 = vmatpush2.bf16.msra.mxu0 0
  %853 = vmatprep.subr.bf16.mxu0 0
  %854 = vmatpush2.bf16.msra.mxu0 0
  %855 = vmatprep.subr.bf16.mxu0 0
  %856 = vmatpush2.bf16.msra.mxu0 0
  %857 = vmatprep.subr.bf16.mxu0 0
  %858 = vmatpush2.bf16.msra.mxu0 0
  %859 = vmatprep.subr.bf16.mxu0 0
  %860 = vmatpush2.bf16.msra.mxu0 0
  %861 = vmatprep.subr.bf16.mxu0 0
  %862 = vmatpush2.bf16.msra.mxu0 0
  %863 = vmatprep.subr.bf16.mxu0 0
  %864 = vmatpush2.bf16.msra.mxu0 0
  %865 = vmatprep.mubr.bf16.mxu0 0
  %866 = vmatmul.mubr.bf16.gmra.mxu0 %v831
  %v867 = vpop.f32.mrf.mxu0
  %v868 = vadd.f32 %v816, %v867
  %v869 = vpop.f32.mrf.mxu0
  %v870 = vpop.f32.mrf.mxu0
  %v871 = vadd.f32 %v816, %v870
  %v872 = vpop.f32.mrf.mxu0
  %873 = vdwg.mxu0
  %v874 = vadd.f32 %v57, %v868
  %v875 = vadd.f32 %v58, %v871
  %v876 = vsel %vm83, %v874, 0.0
  %877 = vadd.xlane.f32.xlu0 %v876
  %v878 = vpop.xlane.xlu0 %877
  %v879 = vsel %vm83, %v875, 0.0
  %880 = vadd.xlane.f32.xlu0 %v879
  %v881 = vpop.xlane.xlu0 %880
  %v882 = vrcp.pop 32.0
  %v883 = vmul.f32 %v878, %v882
  %v884 = vmul.f32 %v881, %v882
  %v885 = vsub.f32 %v874, %v883
  %v886 = vsub.f32 %v875, %v884
  %v887 = vmul.f32 %v885, %v885
  %v888 = vmul.f32 %v886, %v886
  %v889 = vsel %vm83, %v887, 0.0
  %890 = vadd.xlane.f32.xlu0 %v889
  %v891 = vpop.xlane.xlu0 %890
  %v892 = vsel %vm83, %v888, 0.0
  %893 = vadd.xlane.f32.xlu0 %v892
  %v894 = vpop.xlane.xlu0 %893
  %v895 = vmul.f32 %v891, %v882
  %v896 = vmul.f32 %v894, %v882
  %v897 = vadd.f32 %v895, 1e-05
  %v898 = vadd.f32 %v896, 1e-05
  %v899 = vrsqrt.pop %v897
  %v900 = vrsqrt.pop %v898
  %v901 = vmul.f32 %v885, %v899
  %v902 = vmul.f32 %v886, %v900
  %v903 = vld [vmem:[%s13] sm:$0x1]
  %v905 = vlaneseq
  %v906 = vshrl.u32 %v905, 7
  %v907 = vsub.s32 0, %v906
  %v908 = vrot.slane %v903, %v907
  %v910 = vmul.f32 %v901, %v908
  %v911 = vmul.f32 %v902, %v908
  %v912 = vld [vmem:[%s14] sm:$0x1]
  %v914 = vlaneseq
  %v915 = vshrl.u32 %v914, 7
  %v916 = vsub.s32 0, %v915
  %v917 = vrot.slane %v912, %v916
  %v919 = vadd.f32 %v910, %v917
  %v920 = vadd.f32 %v911, %v917
  %v921 = vpack.c.bf16 %v920, %v919
  %v922 = vld [vmem:[%s9] sm:$0xff]
  %v923 = vld [vmem:[%s9 + $0x8] sm:$0xff]
  %v924 = vld [vmem:[%s9 + $0x10] sm:$0xff]
  %v925 = vld [vmem:[%s9 + $0x18] sm:$0xff]
  %v926 = vld [vmem:[%s9 + $0x20] sm:$0xff]
  %v927 = vld [vmem:[%s9 + $0x28] sm:$0xff]
  %v928 = vld [vmem:[%s9 + $0x30] sm:$0xff]
  %v929 = vld [vmem:[%s9 + $0x38] sm:$0xff]
  %v930 = vld [vmem:[%s9 + $0x40] sm:$0xff]
  %v931 = vld [vmem:[%s9 + $0x48] sm:$0xff]
  %v932 = vld [vmem:[%s9 + $0x50] sm:$0xff]
  %v933 = vld [vmem:[%s9 + $0x58] sm:$0xff]
  %v934 = vld [vmem:[%s9 + $0x60] sm:$0xff]
  %v935 = vld [vmem:[%s9 + $0x68] sm:$0xff]
  %v936 = vld [vmem:[%s9 + $0x70] sm:$0xff]
  %v937 = vld [vmem:[%s9 + $0x78] sm:$0xff]
  %v938 = vld [vmem:[%s9 + $0x80] sm:$0xff]
  %v939 = vld [vmem:[%s9 + $0x88] sm:$0xff]
  %v940 = vld [vmem:[%s9 + $0x90] sm:$0xff]
  %v941 = vld [vmem:[%s9 + $0x98] sm:$0xff]
  %v942 = vld [vmem:[%s9 + $0xa0] sm:$0xff]
  %v943 = vld [vmem:[%s9 + $0xa8] sm:$0xff]
  %v944 = vld [vmem:[%s9 + $0xb0] sm:$0xff]
  %v945 = vld [vmem:[%s9 + $0xb8] sm:$0xff]
  %v946 = vld [vmem:[%s9 + $0xc0] sm:$0xff]
  %v947 = vld [vmem:[%s9 + $0xc8] sm:$0xff]
  %v948 = vld [vmem:[%s9 + $0xd0] sm:$0xff]
  %v949 = vld [vmem:[%s9 + $0xd8] sm:$0xff]
  %v950 = vld [vmem:[%s9 + $0xe0] sm:$0xff]
  %v951 = vld [vmem:[%s9 + $0xe8] sm:$0xff]
  %v952 = vld [vmem:[%s9 + $0xf0] sm:$0xff]
  %v953 = vld [vmem:[%s9 + $0xf8] sm:$0xff]
  %v954 = vld [vmem:[%s10] sm:$0xff]
  %v955 = vld [vmem:[%s10 + $0x8] sm:$0xff]
  %v958 = vlaneseq
  %v959 = vshrl.u32 %v958, 7
  %v960 = vsub.s32 0, %v959
  %v961 = vrot.slane %v954, %v960
  %v962 = vlaneseq
  %v963 = vshrl.u32 %v962, 7
  %v964 = vsub.s32 1, %v963
  %v965 = vrot.slane %v954, %v964
  %v966 = vlaneseq
  %v967 = vshrl.u32 %v966, 7
  %v968 = vsub.s32 2, %v967
  %v969 = vrot.slane %v954, %v968
  %v970 = vlaneseq
  %v971 = vshrl.u32 %v970, 7
  %v972 = vsub.s32 3, %v971
  %v973 = vrot.slane %v954, %v972
  %v974 = vlaneseq
  %v975 = vshrl.u32 %v974, 7
  %v976 = vsub.s32 4, %v975
  %v977 = vrot.slane %v954, %v976
  %v978 = vlaneseq
  %v979 = vshrl.u32 %v978, 7
  %v980 = vsub.s32 5, %v979
  %v981 = vrot.slane %v954, %v980
  %v982 = vlaneseq
  %v983 = vshrl.u32 %v982, 7
  %v984 = vsub.s32 6, %v983
  %v985 = vrot.slane %v954, %v984
  %v986 = vlaneseq
  %v987 = vshrl.u32 %v986, 7
  %v988 = vsub.s32 7, %v987
  %v989 = vrot.slane %v954, %v988
  %v990 = vlaneseq
  %v991 = vshrl.u32 %v990, 7
  %v992 = vsub.s32 0, %v991
  %v993 = vrot.slane %v955, %v992
  %v994 = vlaneseq
  %v995 = vshrl.u32 %v994, 7
  %v996 = vsub.s32 1, %v995
  %v997 = vrot.slane %v955, %v996
  %v998 = vlaneseq
  %v999 = vshrl.u32 %v998, 7
  %v1000 = vsub.s32 2, %v999
  %v1001 = vrot.slane %v955, %v1000
  %v1002 = vlaneseq
  %v1003 = vshrl.u32 %v1002, 7
  %v1004 = vsub.s32 3, %v1003
  %v1005 = vrot.slane %v955, %v1004
  %v1006 = vlaneseq
  %v1007 = vshrl.u32 %v1006, 7
  %v1008 = vsub.s32 4, %v1007
  %v1009 = vrot.slane %v955, %v1008
  %v1010 = vlaneseq
  %v1011 = vshrl.u32 %v1010, 7
  %v1012 = vsub.s32 5, %v1011
  %v1013 = vrot.slane %v955, %v1012
  %v1014 = vlaneseq
  %v1015 = vshrl.u32 %v1014, 7
  %v1016 = vsub.s32 6, %v1015
  %v1017 = vrot.slane %v955, %v1016
  %v1018 = vlaneseq
  %v1019 = vshrl.u32 %v1018, 7
  %v1020 = vsub.s32 7, %v1019
  %v1021 = vrot.slane %v955, %v1020
  %v1070 = vunpack.c.l.b16 %v922
  %v1071 = vunpack.c.h.b16 %v922
  %v1072 = vunpack.c.l.b16 %v923
  %v1073 = vunpack.c.h.b16 %v923
  %v1074 = vunpack.c.l.b16 %v924
  %v1075 = vunpack.c.h.b16 %v924
  %v1076 = vunpack.c.l.b16 %v925
  %v1077 = vunpack.c.h.b16 %v925
  %v1078 = vunpack.c.l.b16 %v926
  %v1079 = vunpack.c.h.b16 %v926
  %v1080 = vunpack.c.l.b16 %v927
  %v1081 = vunpack.c.h.b16 %v927
  %v1082 = vunpack.c.l.b16 %v928
  %v1083 = vunpack.c.h.b16 %v928
  %v1084 = vunpack.c.l.b16 %v929
  %v1085 = vunpack.c.h.b16 %v929
  %v1086 = vunpack.c.l.b16 %v930
  %v1087 = vunpack.c.h.b16 %v930
  %v1088 = vunpack.c.l.b16 %v931
  %v1089 = vunpack.c.h.b16 %v931
  %v1090 = vunpack.c.l.b16 %v932
  %v1091 = vunpack.c.h.b16 %v932
  %v1092 = vunpack.c.l.b16 %v933
  %v1093 = vunpack.c.h.b16 %v933
  %v1094 = vunpack.c.l.b16 %v934
  %v1095 = vunpack.c.h.b16 %v934
  %v1096 = vunpack.c.l.b16 %v935
  %v1097 = vunpack.c.h.b16 %v935
  %v1098 = vunpack.c.l.b16 %v936
  %v1099 = vunpack.c.h.b16 %v936
  %v1100 = vunpack.c.l.b16 %v937
  %v1101 = vunpack.c.h.b16 %v937
  %v1102 = vunpack.c.l.b16 %v938
  %v1103 = vunpack.c.h.b16 %v938
  %v1104 = vunpack.c.l.b16 %v939
  %v1105 = vunpack.c.h.b16 %v939
  %v1106 = vunpack.c.l.b16 %v940
  %v1107 = vunpack.c.h.b16 %v940
  %v1108 = vunpack.c.l.b16 %v941
  %v1109 = vunpack.c.h.b16 %v941
  %v1110 = vunpack.c.l.b16 %v942
  %v1111 = vunpack.c.h.b16 %v942
  %v1112 = vunpack.c.l.b16 %v943
  %v1113 = vunpack.c.h.b16 %v943
  %v1114 = vunpack.c.l.b16 %v944
  %v1115 = vunpack.c.h.b16 %v944
  %v1116 = vunpack.c.l.b16 %v945
  %v1117 = vunpack.c.h.b16 %v945
  %v1118 = vunpack.c.l.b16 %v946
  %v1119 = vunpack.c.h.b16 %v946
  %v1120 = vunpack.c.l.b16 %v947
  %v1121 = vunpack.c.h.b16 %v947
  %v1122 = vunpack.c.l.b16 %v948
  %v1123 = vunpack.c.h.b16 %v948
  %v1124 = vunpack.c.l.b16 %v949
  %v1125 = vunpack.c.h.b16 %v949
  %v1126 = vunpack.c.l.b16 %v950
  %v1127 = vunpack.c.h.b16 %v950
  %v1128 = vunpack.c.l.b16 %v951
  %v1129 = vunpack.c.h.b16 %v951
  %v1130 = vunpack.c.l.b16 %v952
  %v1131 = vunpack.c.h.b16 %v952
  %v1132 = vunpack.c.l.b16 %v953
  %v1133 = vunpack.c.h.b16 %v953
  %v1134 = vpack.c.b16 %v1086, %v1070
  %v1135 = vpack.c.b16 %v1087, %v1071
  %v1136 = vpack.c.b16 %v1088, %v1072
  %v1137 = vpack.c.b16 %v1089, %v1073
  %v1138 = vpack.c.b16 %v1090, %v1074
  %v1139 = vpack.c.b16 %v1091, %v1075
  %v1140 = vpack.c.b16 %v1092, %v1076
  %v1141 = vpack.c.b16 %v1093, %v1077
  %v1142 = vpack.c.b16 %v1094, %v1078
  %v1143 = vpack.c.b16 %v1095, %v1079
  %v1144 = vpack.c.b16 %v1096, %v1080
  %v1145 = vpack.c.b16 %v1097, %v1081
  %v1146 = vpack.c.b16 %v1098, %v1082
  %v1147 = vpack.c.b16 %v1099, %v1083
  %v1148 = vpack.c.b16 %v1100, %v1084
  %v1149 = vpack.c.b16 %v1101, %v1085
  %v1150 = vpack.c.b16 %v1118, %v1102
  %v1151 = vpack.c.b16 %v1119, %v1103
  %v1152 = vpack.c.b16 %v1120, %v1104
  %v1153 = vpack.c.b16 %v1121, %v1105
  %v1154 = vpack.c.b16 %v1122, %v1106
  %v1155 = vpack.c.b16 %v1123, %v1107
  %v1156 = vpack.c.b16 %v1124, %v1108
  %v1157 = vpack.c.b16 %v1125, %v1109
  %v1158 = vpack.c.b16 %v1126, %v1110
  %v1159 = vpack.c.b16 %v1127, %v1111
  %v1160 = vpack.c.b16 %v1128, %v1112
  %v1161 = vpack.c.b16 %v1129, %v1113
  %v1162 = vpack.c.b16 %v1130, %v1114
  %v1163 = vpack.c.b16 %v1131, %v1115
  %v1164 = vpack.c.b16 %v1132, %v1116
  %v1165 = vpack.c.b16 %v1133, %v1117
  %v1199 = vsel %vm83, %v921, 0
  %1201 = vmatprep.subr.bf16.mxu0 0
  %1202 = vmatpush1.bf16.msra.mxu0 0
  %1203 = vmatprep.subr.bf16.mxu0 0
  %1204 = vmatpush1.bf16.msra.mxu0 0
  %1205 = vmatprep.subr.bf16.mxu0 0
  %1206 = vmatpush1.bf16.msra.mxu0 0
  %1207 = vmatprep.subr.bf16.mxu0 0
  %1208 = vmatpush1.bf16.msra.mxu0 0
  %1209 = vmatprep.subr.bf16.mxu0 0
  %1210 = vmatpush1.bf16.msra.mxu0 0
  %1211 = vmatprep.subr.bf16.mxu0 0
  %1212 = vmatpush1.bf16.msra.mxu0 0
  %1213 = vmatprep.subr.bf16.mxu0 %v1151
  %1214 = vmatpush1.bf16.msra.mxu0 %v1150
  %1215 = vmatprep.subr.bf16.mxu0 %v1135
  %1216 = vmatpush1.bf16.msra.mxu0 %v1134
  %1217 = vmatprep.subr.bf16.mxu0 0
  %1218 = vmatpush2.bf16.msra.mxu0 0
  %1219 = vmatprep.subr.bf16.mxu0 0
  %1220 = vmatpush2.bf16.msra.mxu0 0
  %1221 = vmatprep.subr.bf16.mxu0 0
  %1222 = vmatpush2.bf16.msra.mxu0 0
  %1223 = vmatprep.subr.bf16.mxu0 0
  %1224 = vmatpush2.bf16.msra.mxu0 0
  %1225 = vmatprep.subr.bf16.mxu0 0
  %1226 = vmatpush2.bf16.msra.mxu0 0
  %1227 = vmatprep.subr.bf16.mxu0 0
  %1228 = vmatpush2.bf16.msra.mxu0 0
  %1229 = vmatprep.subr.bf16.mxu0 0
  %1230 = vmatpush2.bf16.msra.mxu0 0
  %1231 = vmatprep.subr.bf16.mxu0 0
  %1232 = vmatpush2.bf16.msra.mxu0 0
  %1233 = vmatprep.mubr.bf16.mxu0 0
  %1234 = vmatmul.mubr.bf16.gmra.mxu0 %v1199
  %v1235 = vpop.f32.mrf.mxu0
  %v1236 = vadd.f32 %v961, %v1235
  %v1237 = vpop.f32.mrf.mxu0
  %v1238 = vadd.f32 %v965, %v1237
  %v1239 = vpop.f32.mrf.mxu0
  %v1240 = vadd.f32 %v961, %v1239
  %v1241 = vpop.f32.mrf.mxu0
  %v1242 = vadd.f32 %v965, %v1241
  %1243 = vdwg.mxu0
  %1244 = vmatprep.subr.bf16.mxu0 0
  %1245 = vmatpush1.bf16.msra.mxu0 0
  %1246 = vmatprep.subr.bf16.mxu0 0
  %1247 = vmatpush1.bf16.msra.mxu0 0
  %1248 = vmatprep.subr.bf16.mxu0 0
  %1249 = vmatpush1.bf16.msra.mxu0 0
  %1250 = vmatprep.subr.bf16.mxu0 0
  %1251 = vmatpush1.bf16.msra.mxu0 0
  %1252 = vmatprep.subr.bf16.mxu0 0
  %1253 = vmatpush1.bf16.msra.mxu0 0
  %1254 = vmatprep.subr.bf16.mxu0 0
  %1255 = vmatpush1.bf16.msra.mxu0 0
  %1256 = vmatprep.subr.bf16.mxu0 %v1153
  %1257 = vmatpush1.bf16.msra.mxu0 %v1152
  %1258 = vmatprep.subr.bf16.mxu0 %v1137
  %1259 = vmatpush1.bf16.msra.mxu0 %v1136
  %1260 = vmatprep.subr.bf16.mxu0 0
  %1261 = vmatpush2.bf16.msra.mxu0 0
  %1262 = vmatprep.subr.bf16.mxu0 0
  %1263 = vmatpush2.bf16.msra.mxu0 0
  %1264 = vmatprep.subr.bf16.mxu0 0
  %1265 = vmatpush2.bf16.msra.mxu0 0
  %1266 = vmatprep.subr.bf16.mxu0 0
  %1267 = vmatpush2.bf16.msra.mxu0 0
  %1268 = vmatprep.subr.bf16.mxu0 0
  %1269 = vmatpush2.bf16.msra.mxu0 0
  %1270 = vmatprep.subr.bf16.mxu0 0
  %1271 = vmatpush2.bf16.msra.mxu0 0
  %1272 = vmatprep.subr.bf16.mxu0 0
  %1273 = vmatpush2.bf16.msra.mxu0 0
  %1274 = vmatprep.subr.bf16.mxu0 0
  %1275 = vmatpush2.bf16.msra.mxu0 0
  %1276 = vmatprep.mubr.bf16.mxu0 0
  %1277 = vmatmul.mubr.bf16.gmra.mxu0 %v1199
  %v1278 = vpop.f32.mrf.mxu0
  %v1279 = vadd.f32 %v969, %v1278
  %v1280 = vpop.f32.mrf.mxu0
  %v1281 = vadd.f32 %v973, %v1280
  %v1282 = vpop.f32.mrf.mxu0
  %v1283 = vadd.f32 %v969, %v1282
  %v1284 = vpop.f32.mrf.mxu0
  %v1285 = vadd.f32 %v973, %v1284
  %1286 = vdwg.mxu0
  %1287 = vmatprep.subr.bf16.mxu0 0
  %1288 = vmatpush1.bf16.msra.mxu0 0
  %1289 = vmatprep.subr.bf16.mxu0 0
  %1290 = vmatpush1.bf16.msra.mxu0 0
  %1291 = vmatprep.subr.bf16.mxu0 0
  %1292 = vmatpush1.bf16.msra.mxu0 0
  %1293 = vmatprep.subr.bf16.mxu0 0
  %1294 = vmatpush1.bf16.msra.mxu0 0
  %1295 = vmatprep.subr.bf16.mxu0 0
  %1296 = vmatpush1.bf16.msra.mxu0 0
  %1297 = vmatprep.subr.bf16.mxu0 0
  %1298 = vmatpush1.bf16.msra.mxu0 0
  %1299 = vmatprep.subr.bf16.mxu0 %v1155
  %1300 = vmatpush1.bf16.msra.mxu0 %v1154
  %1301 = vmatprep.subr.bf16.mxu0 %v1139
  %1302 = vmatpush1.bf16.msra.mxu0 %v1138
  %1303 = vmatprep.subr.bf16.mxu0 0
  %1304 = vmatpush2.bf16.msra.mxu0 0
  %1305 = vmatprep.subr.bf16.mxu0 0
  %1306 = vmatpush2.bf16.msra.mxu0 0
  %1307 = vmatprep.subr.bf16.mxu0 0
  %1308 = vmatpush2.bf16.msra.mxu0 0
  %1309 = vmatprep.subr.bf16.mxu0 0
  %1310 = vmatpush2.bf16.msra.mxu0 0
  %1311 = vmatprep.subr.bf16.mxu0 0
  %1312 = vmatpush2.bf16.msra.mxu0 0
  %1313 = vmatprep.subr.bf16.mxu0 0
  %1314 = vmatpush2.bf16.msra.mxu0 0
  %1315 = vmatprep.subr.bf16.mxu0 0
  %1316 = vmatpush2.bf16.msra.mxu0 0
  %1317 = vmatprep.subr.bf16.mxu0 0
  %1318 = vmatpush2.bf16.msra.mxu0 0
  %1319 = vmatprep.mubr.bf16.mxu0 0
  %1320 = vmatmul.mubr.bf16.gmra.mxu0 %v1199
  %v1321 = vpop.f32.mrf.mxu0
  %v1322 = vadd.f32 %v977, %v1321
  %v1323 = vpop.f32.mrf.mxu0
  %v1324 = vadd.f32 %v981, %v1323
  %v1325 = vpop.f32.mrf.mxu0
  %v1326 = vadd.f32 %v977, %v1325
  %v1327 = vpop.f32.mrf.mxu0
  %v1328 = vadd.f32 %v981, %v1327
  %1329 = vdwg.mxu0
  %1330 = vmatprep.subr.bf16.mxu0 0
  %1331 = vmatpush1.bf16.msra.mxu0 0
  %1332 = vmatprep.subr.bf16.mxu0 0
  %1333 = vmatpush1.bf16.msra.mxu0 0
  %1334 = vmatprep.subr.bf16.mxu0 0
  %1335 = vmatpush1.bf16.msra.mxu0 0
  %1336 = vmatprep.subr.bf16.mxu0 0
  %1337 = vmatpush1.bf16.msra.mxu0 0
  %1338 = vmatprep.subr.bf16.mxu0 0
  %1339 = vmatpush1.bf16.msra.mxu0 0
  %1340 = vmatprep.subr.bf16.mxu0 0
  %1341 = vmatpush1.bf16.msra.mxu0 0
  %1342 = vmatprep.subr.bf16.mxu0 %v1157
  %1343 = vmatpush1.bf16.msra.mxu0 %v1156
  %1344 = vmatprep.subr.bf16.mxu0 %v1141
  %1345 = vmatpush1.bf16.msra.mxu0 %v1140
  %1346 = vmatprep.subr.bf16.mxu0 0
  %1347 = vmatpush2.bf16.msra.mxu0 0
  %1348 = vmatprep.subr.bf16.mxu0 0
  %1349 = vmatpush2.bf16.msra.mxu0 0
  %1350 = vmatprep.subr.bf16.mxu0 0
  %1351 = vmatpush2.bf16.msra.mxu0 0
  %1352 = vmatprep.subr.bf16.mxu0 0
  %1353 = vmatpush2.bf16.msra.mxu0 0
  %1354 = vmatprep.subr.bf16.mxu0 0
  %1355 = vmatpush2.bf16.msra.mxu0 0
  %1356 = vmatprep.subr.bf16.mxu0 0
  %1357 = vmatpush2.bf16.msra.mxu0 0
  %1358 = vmatprep.subr.bf16.mxu0 0
  %1359 = vmatpush2.bf16.msra.mxu0 0
  %1360 = vmatprep.subr.bf16.mxu0 0
  %1361 = vmatpush2.bf16.msra.mxu0 0
  %1362 = vmatprep.mubr.bf16.mxu0 0
  %1363 = vmatmul.mubr.bf16.gmra.mxu0 %v1199
  %v1364 = vpop.f32.mrf.mxu0
  %v1365 = vadd.f32 %v985, %v1364
  %v1366 = vpop.f32.mrf.mxu0
  %v1367 = vadd.f32 %v989, %v1366
  %v1368 = vpop.f32.mrf.mxu0
  %v1369 = vadd.f32 %v985, %v1368
  %v1370 = vpop.f32.mrf.mxu0
  %v1371 = vadd.f32 %v989, %v1370
  %1372 = vdwg.mxu0
  %1373 = vmatprep.subr.bf16.mxu0 0
  %1374 = vmatpush1.bf16.msra.mxu0 0
  %1375 = vmatprep.subr.bf16.mxu0 0
  %1376 = vmatpush1.bf16.msra.mxu0 0
  %1377 = vmatprep.subr.bf16.mxu0 0
  %1378 = vmatpush1.bf16.msra.mxu0 0
  %1379 = vmatprep.subr.bf16.mxu0 0
  %1380 = vmatpush1.bf16.msra.mxu0 0
  %1381 = vmatprep.subr.bf16.mxu0 0
  %1382 = vmatpush1.bf16.msra.mxu0 0
  %1383 = vmatprep.subr.bf16.mxu0 0
  %1384 = vmatpush1.bf16.msra.mxu0 0
  %1385 = vmatprep.subr.bf16.mxu0 %v1159
  %1386 = vmatpush1.bf16.msra.mxu0 %v1158
  %1387 = vmatprep.subr.bf16.mxu0 %v1143
  %1388 = vmatpush1.bf16.msra.mxu0 %v1142
  %1389 = vmatprep.subr.bf16.mxu0 0
  %1390 = vmatpush2.bf16.msra.mxu0 0
  %1391 = vmatprep.subr.bf16.mxu0 0
  %1392 = vmatpush2.bf16.msra.mxu0 0
  %1393 = vmatprep.subr.bf16.mxu0 0
  %1394 = vmatpush2.bf16.msra.mxu0 0
  %1395 = vmatprep.subr.bf16.mxu0 0
  %1396 = vmatpush2.bf16.msra.mxu0 0
  %1397 = vmatprep.subr.bf16.mxu0 0
  %1398 = vmatpush2.bf16.msra.mxu0 0
  %1399 = vmatprep.subr.bf16.mxu0 0
  %1400 = vmatpush2.bf16.msra.mxu0 0
  %1401 = vmatprep.subr.bf16.mxu0 0
  %1402 = vmatpush2.bf16.msra.mxu0 0
  %1403 = vmatprep.subr.bf16.mxu0 0
  %1404 = vmatpush2.bf16.msra.mxu0 0
  %1405 = vmatprep.mubr.bf16.mxu0 0
  %1406 = vmatmul.mubr.bf16.gmra.mxu0 %v1199
  %v1407 = vpop.f32.mrf.mxu0
  %v1408 = vadd.f32 %v993, %v1407
  %v1409 = vpop.f32.mrf.mxu0
  %v1410 = vadd.f32 %v997, %v1409
  %v1411 = vpop.f32.mrf.mxu0
  %v1412 = vadd.f32 %v993, %v1411
  %v1413 = vpop.f32.mrf.mxu0
  %v1414 = vadd.f32 %v997, %v1413
  %1415 = vdwg.mxu0
  %1416 = vmatprep.subr.bf16.mxu0 0
  %1417 = vmatpush1.bf16.msra.mxu0 0
  %1418 = vmatprep.subr.bf16.mxu0 0
  %1419 = vmatpush1.bf16.msra.mxu0 0
  %1420 = vmatprep.subr.bf16.mxu0 0
  %1421 = vmatpush1.bf16.msra.mxu0 0
  %1422 = vmatprep.subr.bf16.mxu0 0
  %1423 = vmatpush1.bf16.msra.mxu0 0
  %1424 = vmatprep.subr.bf16.mxu0 0
  %1425 = vmatpush1.bf16.msra.mxu0 0
  %1426 = vmatprep.subr.bf16.mxu0 0
  %1427 = vmatpush1.bf16.msra.mxu0 0
  %1428 = vmatprep.subr.bf16.mxu0 %v1161
  %1429 = vmatpush1.bf16.msra.mxu0 %v1160
  %1430 = vmatprep.subr.bf16.mxu0 %v1145
  %1431 = vmatpush1.bf16.msra.mxu0 %v1144
  %1432 = vmatprep.subr.bf16.mxu0 0
  %1433 = vmatpush2.bf16.msra.mxu0 0
  %1434 = vmatprep.subr.bf16.mxu0 0
  %1435 = vmatpush2.bf16.msra.mxu0 0
  %1436 = vmatprep.subr.bf16.mxu0 0
  %1437 = vmatpush2.bf16.msra.mxu0 0
  %1438 = vmatprep.subr.bf16.mxu0 0
  %1439 = vmatpush2.bf16.msra.mxu0 0
  %1440 = vmatprep.subr.bf16.mxu0 0
  %1441 = vmatpush2.bf16.msra.mxu0 0
  %1442 = vmatprep.subr.bf16.mxu0 0
  %1443 = vmatpush2.bf16.msra.mxu0 0
  %1444 = vmatprep.subr.bf16.mxu0 0
  %1445 = vmatpush2.bf16.msra.mxu0 0
  %1446 = vmatprep.subr.bf16.mxu0 0
  %1447 = vmatpush2.bf16.msra.mxu0 0
  %1448 = vmatprep.mubr.bf16.mxu0 0
  %1449 = vmatmul.mubr.bf16.gmra.mxu0 %v1199
  %v1450 = vpop.f32.mrf.mxu0
  %v1451 = vadd.f32 %v1001, %v1450
  %v1452 = vpop.f32.mrf.mxu0
  %v1453 = vadd.f32 %v1005, %v1452
  %v1454 = vpop.f32.mrf.mxu0
  %v1455 = vadd.f32 %v1001, %v1454
  %v1456 = vpop.f32.mrf.mxu0
  %v1457 = vadd.f32 %v1005, %v1456
  %1458 = vdwg.mxu0
  %1459 = vmatprep.subr.bf16.mxu0 0
  %1460 = vmatpush1.bf16.msra.mxu0 0
  %1461 = vmatprep.subr.bf16.mxu0 0
  %1462 = vmatpush1.bf16.msra.mxu0 0
  %1463 = vmatprep.subr.bf16.mxu0 0
  %1464 = vmatpush1.bf16.msra.mxu0 0
  %1465 = vmatprep.subr.bf16.mxu0 0
  %1466 = vmatpush1.bf16.msra.mxu0 0
  %1467 = vmatprep.subr.bf16.mxu0 0
  %1468 = vmatpush1.bf16.msra.mxu0 0
  %1469 = vmatprep.subr.bf16.mxu0 0
  %1470 = vmatpush1.bf16.msra.mxu0 0
  %1471 = vmatprep.subr.bf16.mxu0 %v1163
  %1472 = vmatpush1.bf16.msra.mxu0 %v1162
  %1473 = vmatprep.subr.bf16.mxu0 %v1147
  %1474 = vmatpush1.bf16.msra.mxu0 %v1146
  %1475 = vmatprep.subr.bf16.mxu0 0
  %1476 = vmatpush2.bf16.msra.mxu0 0
  %1477 = vmatprep.subr.bf16.mxu0 0
  %1478 = vmatpush2.bf16.msra.mxu0 0
  %1479 = vmatprep.subr.bf16.mxu0 0
  %1480 = vmatpush2.bf16.msra.mxu0 0
  %1481 = vmatprep.subr.bf16.mxu0 0
  %1482 = vmatpush2.bf16.msra.mxu0 0
  %1483 = vmatprep.subr.bf16.mxu0 0
  %1484 = vmatpush2.bf16.msra.mxu0 0
  %1485 = vmatprep.subr.bf16.mxu0 0
  %1486 = vmatpush2.bf16.msra.mxu0 0
  %1487 = vmatprep.subr.bf16.mxu0 0
  %1488 = vmatpush2.bf16.msra.mxu0 0
  %1489 = vmatprep.subr.bf16.mxu0 0
  %1490 = vmatpush2.bf16.msra.mxu0 0
  %1491 = vmatprep.mubr.bf16.mxu0 0
  %1492 = vmatmul.mubr.bf16.gmra.mxu0 %v1199
  %v1493 = vpop.f32.mrf.mxu0
  %v1494 = vadd.f32 %v1009, %v1493
  %v1495 = vpop.f32.mrf.mxu0
  %v1496 = vadd.f32 %v1013, %v1495
  %v1497 = vpop.f32.mrf.mxu0
  %v1498 = vadd.f32 %v1009, %v1497
  %v1499 = vpop.f32.mrf.mxu0
  %v1500 = vadd.f32 %v1013, %v1499
  %1501 = vdwg.mxu0
  %1502 = vmatprep.subr.bf16.mxu0 0
  %1503 = vmatpush1.bf16.msra.mxu0 0
  %1504 = vmatprep.subr.bf16.mxu0 0
  %1505 = vmatpush1.bf16.msra.mxu0 0
  %1506 = vmatprep.subr.bf16.mxu0 0
  %1507 = vmatpush1.bf16.msra.mxu0 0
  %1508 = vmatprep.subr.bf16.mxu0 0
  %1509 = vmatpush1.bf16.msra.mxu0 0
  %1510 = vmatprep.subr.bf16.mxu0 0
  %1511 = vmatpush1.bf16.msra.mxu0 0
  %1512 = vmatprep.subr.bf16.mxu0 0
  %1513 = vmatpush1.bf16.msra.mxu0 0
  %1514 = vmatprep.subr.bf16.mxu0 %v1165
  %1515 = vmatpush1.bf16.msra.mxu0 %v1164
  %1516 = vmatprep.subr.bf16.mxu0 %v1149
  %1517 = vmatpush1.bf16.msra.mxu0 %v1148
  %1518 = vmatprep.subr.bf16.mxu0 0
  %1519 = vmatpush2.bf16.msra.mxu0 0
  %1520 = vmatprep.subr.bf16.mxu0 0
  %1521 = vmatpush2.bf16.msra.mxu0 0
  %1522 = vmatprep.subr.bf16.mxu0 0
  %1523 = vmatpush2.bf16.msra.mxu0 0
  %1524 = vmatprep.subr.bf16.mxu0 0
  %1525 = vmatpush2.bf16.msra.mxu0 0
  %1526 = vmatprep.subr.bf16.mxu0 0
  %1527 = vmatpush2.bf16.msra.mxu0 0
  %1528 = vmatprep.subr.bf16.mxu0 0
  %1529 = vmatpush2.bf16.msra.mxu0 0
  %1530 = vmatprep.subr.bf16.mxu0 0
  %1531 = vmatpush2.bf16.msra.mxu0 0
  %1532 = vmatprep.subr.bf16.mxu0 0
  %1533 = vmatpush2.bf16.msra.mxu0 0
  %1534 = vmatprep.mubr.bf16.mxu0 0
  %1535 = vmatmul.mubr.bf16.gmra.mxu0 %v1199
  %v1536 = vpop.f32.mrf.mxu0
  %v1537 = vadd.f32 %v1017, %v1536
  %v1538 = vpop.f32.mrf.mxu0
  %v1539 = vadd.f32 %v1021, %v1538
  %v1540 = vpop.f32.mrf.mxu0
  %v1541 = vadd.f32 %v1017, %v1540
  %v1542 = vpop.f32.mrf.mxu0
  %v1543 = vadd.f32 %v1021, %v1542
  %1544 = vdwg.mxu0
  %v1545 = vmax.f32 %v1236, 0.0
  %v1546 = vmax.f32 %v1238, 0.0
  %v1547 = vmax.f32 %v1279, 0.0
  %v1548 = vmax.f32 %v1281, 0.0
  %v1549 = vmax.f32 %v1322, 0.0
  %v1550 = vmax.f32 %v1324, 0.0
  %v1551 = vmax.f32 %v1365, 0.0
  %v1552 = vmax.f32 %v1367, 0.0
  %v1553 = vmax.f32 %v1408, 0.0
  %v1554 = vmax.f32 %v1410, 0.0
  %v1555 = vmax.f32 %v1451, 0.0
  %v1556 = vmax.f32 %v1453, 0.0
  %v1557 = vmax.f32 %v1494, 0.0
  %v1558 = vmax.f32 %v1496, 0.0
  %v1559 = vmax.f32 %v1537, 0.0
  %v1560 = vmax.f32 %v1539, 0.0
  %v1561 = vmax.f32 %v1240, 0.0
  %v1562 = vmax.f32 %v1242, 0.0
  %v1563 = vmax.f32 %v1283, 0.0
  %v1564 = vmax.f32 %v1285, 0.0
  %v1565 = vmax.f32 %v1326, 0.0
  %v1566 = vmax.f32 %v1328, 0.0
  %v1567 = vmax.f32 %v1369, 0.0
  %v1568 = vmax.f32 %v1371, 0.0
  %v1569 = vmax.f32 %v1412, 0.0
  %v1570 = vmax.f32 %v1414, 0.0
  %v1571 = vmax.f32 %v1455, 0.0
  %v1572 = vmax.f32 %v1457, 0.0
  %v1573 = vmax.f32 %v1498, 0.0
  %v1574 = vmax.f32 %v1500, 0.0
  %v1575 = vmax.f32 %v1541, 0.0
  %v1576 = vmax.f32 %v1543, 0.0
  %v1577 = vpack.c.bf16 %v1561, %v1545
  %v1578 = vpack.c.bf16 %v1562, %v1546
  %v1579 = vpack.c.bf16 %v1563, %v1547
  %v1580 = vpack.c.bf16 %v1564, %v1548
  %v1581 = vpack.c.bf16 %v1565, %v1549
  %v1582 = vpack.c.bf16 %v1566, %v1550
  %v1583 = vpack.c.bf16 %v1567, %v1551
  %v1584 = vpack.c.bf16 %v1568, %v1552
  %v1585 = vpack.c.bf16 %v1569, %v1553
  %v1586 = vpack.c.bf16 %v1570, %v1554
  %v1587 = vpack.c.bf16 %v1571, %v1555
  %v1588 = vpack.c.bf16 %v1572, %v1556
  %v1589 = vpack.c.bf16 %v1573, %v1557
  %v1590 = vpack.c.bf16 %v1574, %v1558
  %v1591 = vpack.c.bf16 %v1575, %v1559
  %v1592 = vpack.c.bf16 %v1576, %v1560
  %v1593 = vld [vmem:[%s11] sm:$0xf]
  %v1594 = vld [vmem:[%s11 + $0x4] sm:$0xf]
  %v1595 = vld [vmem:[%s11 + $0x8] sm:$0xf]
  %v1596 = vld [vmem:[%s11 + $0xc] sm:$0xf]
  %v1597 = vld [vmem:[%s11 + $0x10] sm:$0xf]
  %v1598 = vld [vmem:[%s11 + $0x14] sm:$0xf]
  %v1599 = vld [vmem:[%s11 + $0x18] sm:$0xf]
  %v1600 = vld [vmem:[%s11 + $0x1c] sm:$0xf]
  %v1601 = vld [vmem:[%s11 + $0x20] sm:$0xf]
  %v1602 = vld [vmem:[%s11 + $0x24] sm:$0xf]
  %v1603 = vld [vmem:[%s11 + $0x28] sm:$0xf]
  %v1604 = vld [vmem:[%s11 + $0x2c] sm:$0xf]
  %v1605 = vld [vmem:[%s11 + $0x30] sm:$0xf]
  %v1606 = vld [vmem:[%s11 + $0x34] sm:$0xf]
  %v1607 = vld [vmem:[%s11 + $0x38] sm:$0xf]
  %v1608 = vld [vmem:[%s11 + $0x3c] sm:$0xf]
  %v1609 = vld [vmem:[%s11 + $0x40] sm:$0xf]
  %v1610 = vld [vmem:[%s11 + $0x44] sm:$0xf]
  %v1611 = vld [vmem:[%s11 + $0x48] sm:$0xf]
  %v1612 = vld [vmem:[%s11 + $0x4c] sm:$0xf]
  %v1613 = vld [vmem:[%s11 + $0x50] sm:$0xf]
  %v1614 = vld [vmem:[%s11 + $0x54] sm:$0xf]
  %v1615 = vld [vmem:[%s11 + $0x58] sm:$0xf]
  %v1616 = vld [vmem:[%s11 + $0x5c] sm:$0xf]
  %v1617 = vld [vmem:[%s11 + $0x60] sm:$0xf]
  %v1618 = vld [vmem:[%s11 + $0x64] sm:$0xf]
  %v1619 = vld [vmem:[%s11 + $0x68] sm:$0xf]
  %v1620 = vld [vmem:[%s11 + $0x6c] sm:$0xf]
  %v1621 = vld [vmem:[%s11 + $0x70] sm:$0xf]
  %v1622 = vld [vmem:[%s11 + $0x74] sm:$0xf]
  %v1623 = vld [vmem:[%s11 + $0x78] sm:$0xf]
  %v1624 = vld [vmem:[%s11 + $0x7c] sm:$0xf]
  %v1625 = vld [vmem:[%s11 + $0x80] sm:$0xf]
  %v1626 = vld [vmem:[%s11 + $0x84] sm:$0xf]
  %v1627 = vld [vmem:[%s11 + $0x88] sm:$0xf]
  %v1628 = vld [vmem:[%s11 + $0x8c] sm:$0xf]
  %v1629 = vld [vmem:[%s11 + $0x90] sm:$0xf]
  %v1630 = vld [vmem:[%s11 + $0x94] sm:$0xf]
  %v1631 = vld [vmem:[%s11 + $0x98] sm:$0xf]
  %v1632 = vld [vmem:[%s11 + $0x9c] sm:$0xf]
  %v1633 = vld [vmem:[%s11 + $0xa0] sm:$0xf]
  %v1634 = vld [vmem:[%s11 + $0xa4] sm:$0xf]
  %v1635 = vld [vmem:[%s11 + $0xa8] sm:$0xf]
  %v1636 = vld [vmem:[%s11 + $0xac] sm:$0xf]
  %v1637 = vld [vmem:[%s11 + $0xb0] sm:$0xf]
  %v1638 = vld [vmem:[%s11 + $0xb4] sm:$0xf]
  %v1639 = vld [vmem:[%s11 + $0xb8] sm:$0xf]
  %v1640 = vld [vmem:[%s11 + $0xbc] sm:$0xf]
  %v1641 = vld [vmem:[%s11 + $0xc0] sm:$0xf]
  %v1642 = vld [vmem:[%s11 + $0xc4] sm:$0xf]
  %v1643 = vld [vmem:[%s11 + $0xc8] sm:$0xf]
  %v1644 = vld [vmem:[%s11 + $0xcc] sm:$0xf]
  %v1645 = vld [vmem:[%s11 + $0xd0] sm:$0xf]
  %v1646 = vld [vmem:[%s11 + $0xd4] sm:$0xf]
  %v1647 = vld [vmem:[%s11 + $0xd8] sm:$0xf]
  %v1648 = vld [vmem:[%s11 + $0xdc] sm:$0xf]
  %v1649 = vld [vmem:[%s11 + $0xe0] sm:$0xf]
  %v1650 = vld [vmem:[%s11 + $0xe4] sm:$0xf]
  %v1651 = vld [vmem:[%s11 + $0xe8] sm:$0xf]
  %v1652 = vld [vmem:[%s11 + $0xec] sm:$0xf]
  %v1653 = vld [vmem:[%s11 + $0xf0] sm:$0xf]
  %v1654 = vld [vmem:[%s11 + $0xf4] sm:$0xf]
  %v1655 = vld [vmem:[%s11 + $0xf8] sm:$0xf]
  %v1656 = vld [vmem:[%s11 + $0xfc] sm:$0xf]
  %v1657 = vld [vmem:[%s11 + $0x100] sm:$0xf]
  %v1658 = vld [vmem:[%s11 + $0x104] sm:$0xf]
  %v1659 = vld [vmem:[%s11 + $0x108] sm:$0xf]
  %v1660 = vld [vmem:[%s11 + $0x10c] sm:$0xf]
  %v1661 = vld [vmem:[%s11 + $0x110] sm:$0xf]
  %v1662 = vld [vmem:[%s11 + $0x114] sm:$0xf]
  %v1663 = vld [vmem:[%s11 + $0x118] sm:$0xf]
  %v1664 = vld [vmem:[%s11 + $0x11c] sm:$0xf]
  %v1665 = vld [vmem:[%s11 + $0x120] sm:$0xf]
  %v1666 = vld [vmem:[%s11 + $0x124] sm:$0xf]
  %v1667 = vld [vmem:[%s11 + $0x128] sm:$0xf]
  %v1668 = vld [vmem:[%s11 + $0x12c] sm:$0xf]
  %v1669 = vld [vmem:[%s11 + $0x130] sm:$0xf]
  %v1670 = vld [vmem:[%s11 + $0x134] sm:$0xf]
  %v1671 = vld [vmem:[%s11 + $0x138] sm:$0xf]
  %v1672 = vld [vmem:[%s11 + $0x13c] sm:$0xf]
  %v1673 = vld [vmem:[%s11 + $0x140] sm:$0xf]
  %v1674 = vld [vmem:[%s11 + $0x144] sm:$0xf]
  %v1675 = vld [vmem:[%s11 + $0x148] sm:$0xf]
  %v1676 = vld [vmem:[%s11 + $0x14c] sm:$0xf]
  %v1677 = vld [vmem:[%s11 + $0x150] sm:$0xf]
  %v1678 = vld [vmem:[%s11 + $0x154] sm:$0xf]
  %v1679 = vld [vmem:[%s11 + $0x158] sm:$0xf]
  %v1680 = vld [vmem:[%s11 + $0x15c] sm:$0xf]
  %v1681 = vld [vmem:[%s11 + $0x160] sm:$0xf]
  %v1682 = vld [vmem:[%s11 + $0x164] sm:$0xf]
  %v1683 = vld [vmem:[%s11 + $0x168] sm:$0xf]
  %v1684 = vld [vmem:[%s11 + $0x16c] sm:$0xf]
  %v1685 = vld [vmem:[%s11 + $0x170] sm:$0xf]
  %v1686 = vld [vmem:[%s11 + $0x174] sm:$0xf]
  %v1687 = vld [vmem:[%s11 + $0x178] sm:$0xf]
  %v1688 = vld [vmem:[%s11 + $0x17c] sm:$0xf]
  %v1689 = vld [vmem:[%s11 + $0x180] sm:$0xf]
  %v1690 = vld [vmem:[%s11 + $0x184] sm:$0xf]
  %v1691 = vld [vmem:[%s11 + $0x188] sm:$0xf]
  %v1692 = vld [vmem:[%s11 + $0x18c] sm:$0xf]
  %v1693 = vld [vmem:[%s11 + $0x190] sm:$0xf]
  %v1694 = vld [vmem:[%s11 + $0x194] sm:$0xf]
  %v1695 = vld [vmem:[%s11 + $0x198] sm:$0xf]
  %v1696 = vld [vmem:[%s11 + $0x19c] sm:$0xf]
  %v1697 = vld [vmem:[%s11 + $0x1a0] sm:$0xf]
  %v1698 = vld [vmem:[%s11 + $0x1a4] sm:$0xf]
  %v1699 = vld [vmem:[%s11 + $0x1a8] sm:$0xf]
  %v1700 = vld [vmem:[%s11 + $0x1ac] sm:$0xf]
  %v1701 = vld [vmem:[%s11 + $0x1b0] sm:$0xf]
  %v1702 = vld [vmem:[%s11 + $0x1b4] sm:$0xf]
  %v1703 = vld [vmem:[%s11 + $0x1b8] sm:$0xf]
  %v1704 = vld [vmem:[%s11 + $0x1bc] sm:$0xf]
  %v1705 = vld [vmem:[%s11 + $0x1c0] sm:$0xf]
  %v1706 = vld [vmem:[%s11 + $0x1c4] sm:$0xf]
  %v1707 = vld [vmem:[%s11 + $0x1c8] sm:$0xf]
  %v1708 = vld [vmem:[%s11 + $0x1cc] sm:$0xf]
  %v1709 = vld [vmem:[%s11 + $0x1d0] sm:$0xf]
  %v1710 = vld [vmem:[%s11 + $0x1d4] sm:$0xf]
  %v1711 = vld [vmem:[%s11 + $0x1d8] sm:$0xf]
  %v1712 = vld [vmem:[%s11 + $0x1dc] sm:$0xf]
  %v1713 = vld [vmem:[%s11 + $0x1e0] sm:$0xf]
  %v1714 = vld [vmem:[%s11 + $0x1e4] sm:$0xf]
  %v1715 = vld [vmem:[%s11 + $0x1e8] sm:$0xf]
  %v1716 = vld [vmem:[%s11 + $0x1ec] sm:$0xf]
  %v1717 = vld [vmem:[%s11 + $0x1f0] sm:$0xf]
  %v1718 = vld [vmem:[%s11 + $0x1f4] sm:$0xf]
  %v1719 = vld [vmem:[%s11 + $0x1f8] sm:$0xf]
  %v1720 = vld [vmem:[%s11 + $0x1fc] sm:$0xf]
  %v1721 = vld [vmem:[%s11 + $0x200] sm:$0xf]
  %v1722 = vld [vmem:[%s11 + $0x204] sm:$0xf]
  %v1723 = vld [vmem:[%s11 + $0x208] sm:$0xf]
  %v1724 = vld [vmem:[%s11 + $0x20c] sm:$0xf]
  %v1725 = vld [vmem:[%s11 + $0x210] sm:$0xf]
  %v1726 = vld [vmem:[%s11 + $0x214] sm:$0xf]
  %v1727 = vld [vmem:[%s11 + $0x218] sm:$0xf]
  %v1728 = vld [vmem:[%s11 + $0x21c] sm:$0xf]
  %v1729 = vld [vmem:[%s11 + $0x220] sm:$0xf]
  %v1730 = vld [vmem:[%s11 + $0x224] sm:$0xf]
  %v1731 = vld [vmem:[%s11 + $0x228] sm:$0xf]
  %v1732 = vld [vmem:[%s11 + $0x22c] sm:$0xf]
  %v1733 = vld [vmem:[%s11 + $0x230] sm:$0xf]
  %v1734 = vld [vmem:[%s11 + $0x234] sm:$0xf]
  %v1735 = vld [vmem:[%s11 + $0x238] sm:$0xf]
  %v1736 = vld [vmem:[%s11 + $0x23c] sm:$0xf]
  %v1737 = vld [vmem:[%s11 + $0x240] sm:$0xf]
  %v1738 = vld [vmem:[%s11 + $0x244] sm:$0xf]
  %v1739 = vld [vmem:[%s11 + $0x248] sm:$0xf]
  %v1740 = vld [vmem:[%s11 + $0x24c] sm:$0xf]
  %v1741 = vld [vmem:[%s11 + $0x250] sm:$0xf]
  %v1742 = vld [vmem:[%s11 + $0x254] sm:$0xf]
  %v1743 = vld [vmem:[%s11 + $0x258] sm:$0xf]
  %v1744 = vld [vmem:[%s11 + $0x25c] sm:$0xf]
  %v1745 = vld [vmem:[%s11 + $0x260] sm:$0xf]
  %v1746 = vld [vmem:[%s11 + $0x264] sm:$0xf]
  %v1747 = vld [vmem:[%s11 + $0x268] sm:$0xf]
  %v1748 = vld [vmem:[%s11 + $0x26c] sm:$0xf]
  %v1749 = vld [vmem:[%s11 + $0x270] sm:$0xf]
  %v1750 = vld [vmem:[%s11 + $0x274] sm:$0xf]
  %v1751 = vld [vmem:[%s11 + $0x278] sm:$0xf]
  %v1752 = vld [vmem:[%s11 + $0x27c] sm:$0xf]
  %v1753 = vld [vmem:[%s11 + $0x280] sm:$0xf]
  %v1754 = vld [vmem:[%s11 + $0x284] sm:$0xf]
  %v1755 = vld [vmem:[%s11 + $0x288] sm:$0xf]
  %v1756 = vld [vmem:[%s11 + $0x28c] sm:$0xf]
  %v1757 = vld [vmem:[%s11 + $0x290] sm:$0xf]
  %v1758 = vld [vmem:[%s11 + $0x294] sm:$0xf]
  %v1759 = vld [vmem:[%s11 + $0x298] sm:$0xf]
  %v1760 = vld [vmem:[%s11 + $0x29c] sm:$0xf]
  %v1761 = vld [vmem:[%s11 + $0x2a0] sm:$0xf]
  %v1762 = vld [vmem:[%s11 + $0x2a4] sm:$0xf]
  %v1763 = vld [vmem:[%s11 + $0x2a8] sm:$0xf]
  %v1764 = vld [vmem:[%s11 + $0x2ac] sm:$0xf]
  %v1765 = vld [vmem:[%s11 + $0x2b0] sm:$0xf]
  %v1766 = vld [vmem:[%s11 + $0x2b4] sm:$0xf]
  %v1767 = vld [vmem:[%s11 + $0x2b8] sm:$0xf]
  %v1768 = vld [vmem:[%s11 + $0x2bc] sm:$0xf]
  %v1769 = vld [vmem:[%s11 + $0x2c0] sm:$0xf]
  %v1770 = vld [vmem:[%s11 + $0x2c4] sm:$0xf]
  %v1771 = vld [vmem:[%s11 + $0x2c8] sm:$0xf]
  %v1772 = vld [vmem:[%s11 + $0x2cc] sm:$0xf]
  %v1773 = vld [vmem:[%s11 + $0x2d0] sm:$0xf]
  %v1774 = vld [vmem:[%s11 + $0x2d4] sm:$0xf]
  %v1775 = vld [vmem:[%s11 + $0x2d8] sm:$0xf]
  %v1776 = vld [vmem:[%s11 + $0x2dc] sm:$0xf]
  %v1777 = vld [vmem:[%s11 + $0x2e0] sm:$0xf]
  %v1778 = vld [vmem:[%s11 + $0x2e4] sm:$0xf]
  %v1779 = vld [vmem:[%s11 + $0x2e8] sm:$0xf]
  %v1780 = vld [vmem:[%s11 + $0x2ec] sm:$0xf]
  %v1781 = vld [vmem:[%s11 + $0x2f0] sm:$0xf]
  %v1782 = vld [vmem:[%s11 + $0x2f4] sm:$0xf]
  %v1783 = vld [vmem:[%s11 + $0x2f8] sm:$0xf]
  %v1784 = vld [vmem:[%s11 + $0x2fc] sm:$0xf]
  %v1785 = vld [vmem:[%s11 + $0x300] sm:$0xf]
  %v1786 = vld [vmem:[%s11 + $0x304] sm:$0xf]
  %v1787 = vld [vmem:[%s11 + $0x308] sm:$0xf]
  %v1788 = vld [vmem:[%s11 + $0x30c] sm:$0xf]
  %v1789 = vld [vmem:[%s11 + $0x310] sm:$0xf]
  %v1790 = vld [vmem:[%s11 + $0x314] sm:$0xf]
  %v1791 = vld [vmem:[%s11 + $0x318] sm:$0xf]
  %v1792 = vld [vmem:[%s11 + $0x31c] sm:$0xf]
  %v1793 = vld [vmem:[%s11 + $0x320] sm:$0xf]
  %v1794 = vld [vmem:[%s11 + $0x324] sm:$0xf]
  %v1795 = vld [vmem:[%s11 + $0x328] sm:$0xf]
  %v1796 = vld [vmem:[%s11 + $0x32c] sm:$0xf]
  %v1797 = vld [vmem:[%s11 + $0x330] sm:$0xf]
  %v1798 = vld [vmem:[%s11 + $0x334] sm:$0xf]
  %v1799 = vld [vmem:[%s11 + $0x338] sm:$0xf]
  %v1800 = vld [vmem:[%s11 + $0x33c] sm:$0xf]
  %v1801 = vld [vmem:[%s11 + $0x340] sm:$0xf]
  %v1802 = vld [vmem:[%s11 + $0x344] sm:$0xf]
  %v1803 = vld [vmem:[%s11 + $0x348] sm:$0xf]
  %v1804 = vld [vmem:[%s11 + $0x34c] sm:$0xf]
  %v1805 = vld [vmem:[%s11 + $0x350] sm:$0xf]
  %v1806 = vld [vmem:[%s11 + $0x354] sm:$0xf]
  %v1807 = vld [vmem:[%s11 + $0x358] sm:$0xf]
  %v1808 = vld [vmem:[%s11 + $0x35c] sm:$0xf]
  %v1809 = vld [vmem:[%s11 + $0x360] sm:$0xf]
  %v1810 = vld [vmem:[%s11 + $0x364] sm:$0xf]
  %v1811 = vld [vmem:[%s11 + $0x368] sm:$0xf]
  %v1812 = vld [vmem:[%s11 + $0x36c] sm:$0xf]
  %v1813 = vld [vmem:[%s11 + $0x370] sm:$0xf]
  %v1814 = vld [vmem:[%s11 + $0x374] sm:$0xf]
  %v1815 = vld [vmem:[%s11 + $0x378] sm:$0xf]
  %v1816 = vld [vmem:[%s11 + $0x37c] sm:$0xf]
  %v1817 = vld [vmem:[%s11 + $0x380] sm:$0xf]
  %v1818 = vld [vmem:[%s11 + $0x384] sm:$0xf]
  %v1819 = vld [vmem:[%s11 + $0x388] sm:$0xf]
  %v1820 = vld [vmem:[%s11 + $0x38c] sm:$0xf]
  %v1821 = vld [vmem:[%s11 + $0x390] sm:$0xf]
  %v1822 = vld [vmem:[%s11 + $0x394] sm:$0xf]
  %v1823 = vld [vmem:[%s11 + $0x398] sm:$0xf]
  %v1824 = vld [vmem:[%s11 + $0x39c] sm:$0xf]
  %v1825 = vld [vmem:[%s11 + $0x3a0] sm:$0xf]
  %v1826 = vld [vmem:[%s11 + $0x3a4] sm:$0xf]
  %v1827 = vld [vmem:[%s11 + $0x3a8] sm:$0xf]
  %v1828 = vld [vmem:[%s11 + $0x3ac] sm:$0xf]
  %v1829 = vld [vmem:[%s11 + $0x3b0] sm:$0xf]
  %v1830 = vld [vmem:[%s11 + $0x3b4] sm:$0xf]
  %v1831 = vld [vmem:[%s11 + $0x3b8] sm:$0xf]
  %v1832 = vld [vmem:[%s11 + $0x3bc] sm:$0xf]
  %v1833 = vld [vmem:[%s11 + $0x3c0] sm:$0xf]
  %v1834 = vld [vmem:[%s11 + $0x3c4] sm:$0xf]
  %v1835 = vld [vmem:[%s11 + $0x3c8] sm:$0xf]
  %v1836 = vld [vmem:[%s11 + $0x3cc] sm:$0xf]
  %v1837 = vld [vmem:[%s11 + $0x3d0] sm:$0xf]
  %v1838 = vld [vmem:[%s11 + $0x3d4] sm:$0xf]
  %v1839 = vld [vmem:[%s11 + $0x3d8] sm:$0xf]
  %v1840 = vld [vmem:[%s11 + $0x3dc] sm:$0xf]
  %v1841 = vld [vmem:[%s11 + $0x3e0] sm:$0xf]
  %v1842 = vld [vmem:[%s11 + $0x3e4] sm:$0xf]
  %v1843 = vld [vmem:[%s11 + $0x3e8] sm:$0xf]
  %v1844 = vld [vmem:[%s11 + $0x3ec] sm:$0xf]
  %v1845 = vld [vmem:[%s11 + $0x3f0] sm:$0xf]
  %v1846 = vld [vmem:[%s11 + $0x3f4] sm:$0xf]
  %v1847 = vld [vmem:[%s11 + $0x3f8] sm:$0xf]
  %v1848 = vld [vmem:[%s11 + $0x3fc] sm:$0xf]
  %v1849 = vld [vmem:[%s12] sm:$0x1]
  %v1851 = vlaneseq
  %v1852 = vshrl.u32 %v1851, 7
  %v1853 = vsub.s32 0, %v1852
  %v1854 = vrot.slane %v1849, %v1853
  %v2112 = vunpack.c.l.b16 %v1593
  %v2113 = vunpack.c.l.b16 %v1594
  %v2114 = vunpack.c.l.b16 %v1595
  %v2115 = vunpack.c.l.b16 %v1596
  %v2116 = vunpack.c.l.b16 %v1597
  %v2117 = vunpack.c.l.b16 %v1598
  %v2118 = vunpack.c.l.b16 %v1599
  %v2119 = vunpack.c.l.b16 %v1600
  %v2120 = vunpack.c.l.b16 %v1601
  %v2121 = vunpack.c.l.b16 %v1602
  %v2122 = vunpack.c.l.b16 %v1603
  %v2123 = vunpack.c.l.b16 %v1604
  %v2124 = vunpack.c.l.b16 %v1605
  %v2125 = vunpack.c.l.b16 %v1606
  %v2126 = vunpack.c.l.b16 %v1607
  %v2127 = vunpack.c.l.b16 %v1608
  %v2128 = vunpack.c.l.b16 %v1609
  %v2129 = vunpack.c.l.b16 %v1610
  %v2130 = vunpack.c.l.b16 %v1611
  %v2131 = vunpack.c.l.b16 %v1612
  %v2132 = vunpack.c.l.b16 %v1613
  %v2133 = vunpack.c.l.b16 %v1614
  %v2134 = vunpack.c.l.b16 %v1615
  %v2135 = vunpack.c.l.b16 %v1616
  %v2136 = vunpack.c.l.b16 %v1617
  %v2137 = vunpack.c.l.b16 %v1618
  %v2138 = vunpack.c.l.b16 %v1619
  %v2139 = vunpack.c.l.b16 %v1620
  %v2140 = vunpack.c.l.b16 %v1621
  %v2141 = vunpack.c.l.b16 %v1622
  %v2142 = vunpack.c.l.b16 %v1623
  %v2143 = vunpack.c.l.b16 %v1624
  %v2144 = vunpack.c.l.b16 %v1625
  %v2145 = vunpack.c.l.b16 %v1626
  %v2146 = vunpack.c.l.b16 %v1627
  %v2147 = vunpack.c.l.b16 %v1628
  %v2148 = vunpack.c.l.b16 %v1629
  %v2149 = vunpack.c.l.b16 %v1630
  %v2150 = vunpack.c.l.b16 %v1631
  %v2151 = vunpack.c.l.b16 %v1632
  %v2152 = vunpack.c.l.b16 %v1633
  %v2153 = vunpack.c.l.b16 %v1634
  %v2154 = vunpack.c.l.b16 %v1635
  %v2155 = vunpack.c.l.b16 %v1636
  %v2156 = vunpack.c.l.b16 %v1637
  %v2157 = vunpack.c.l.b16 %v1638
  %v2158 = vunpack.c.l.b16 %v1639
  %v2159 = vunpack.c.l.b16 %v1640
  %v2160 = vunpack.c.l.b16 %v1641
  %v2161 = vunpack.c.l.b16 %v1642
  %v2162 = vunpack.c.l.b16 %v1643
  %v2163 = vunpack.c.l.b16 %v1644
  %v2164 = vunpack.c.l.b16 %v1645
  %v2165 = vunpack.c.l.b16 %v1646
  %v2166 = vunpack.c.l.b16 %v1647
  %v2167 = vunpack.c.l.b16 %v1648
  %v2168 = vunpack.c.l.b16 %v1649
  %v2169 = vunpack.c.l.b16 %v1650
  %v2170 = vunpack.c.l.b16 %v1651
  %v2171 = vunpack.c.l.b16 %v1652
  %v2172 = vunpack.c.l.b16 %v1653
  %v2173 = vunpack.c.l.b16 %v1654
  %v2174 = vunpack.c.l.b16 %v1655
  %v2175 = vunpack.c.l.b16 %v1656
  %v2176 = vunpack.c.l.b16 %v1657
  %v2177 = vunpack.c.l.b16 %v1658
  %v2178 = vunpack.c.l.b16 %v1659
  %v2179 = vunpack.c.l.b16 %v1660
  %v2180 = vunpack.c.l.b16 %v1661
  %v2181 = vunpack.c.l.b16 %v1662
  %v2182 = vunpack.c.l.b16 %v1663
  %v2183 = vunpack.c.l.b16 %v1664
  %v2184 = vunpack.c.l.b16 %v1665
  %v2185 = vunpack.c.l.b16 %v1666
  %v2186 = vunpack.c.l.b16 %v1667
  %v2187 = vunpack.c.l.b16 %v1668
  %v2188 = vunpack.c.l.b16 %v1669
  %v2189 = vunpack.c.l.b16 %v1670
  %v2190 = vunpack.c.l.b16 %v1671
  %v2191 = vunpack.c.l.b16 %v1672
  %v2192 = vunpack.c.l.b16 %v1673
  %v2193 = vunpack.c.l.b16 %v1674
  %v2194 = vunpack.c.l.b16 %v1675
  %v2195 = vunpack.c.l.b16 %v1676
  %v2196 = vunpack.c.l.b16 %v1677
  %v2197 = vunpack.c.l.b16 %v1678
  %v2198 = vunpack.c.l.b16 %v1679
  %v2199 = vunpack.c.l.b16 %v1680
  %v2200 = vunpack.c.l.b16 %v1681
  %v2201 = vunpack.c.l.b16 %v1682
  %v2202 = vunpack.c.l.b16 %v1683
  %v2203 = vunpack.c.l.b16 %v1684
  %v2204 = vunpack.c.l.b16 %v1685
  %v2205 = vunpack.c.l.b16 %v1686
  %v2206 = vunpack.c.l.b16 %v1687
  %v2207 = vunpack.c.l.b16 %v1688
  %v2208 = vunpack.c.l.b16 %v1689
  %v2209 = vunpack.c.l.b16 %v1690
  %v2210 = vunpack.c.l.b16 %v1691
  %v2211 = vunpack.c.l.b16 %v1692
  %v2212 = vunpack.c.l.b16 %v1693
  %v2213 = vunpack.c.l.b16 %v1694
  %v2214 = vunpack.c.l.b16 %v1695
  %v2215 = vunpack.c.l.b16 %v1696
  %v2216 = vunpack.c.l.b16 %v1697
  %v2217 = vunpack.c.l.b16 %v1698
  %v2218 = vunpack.c.l.b16 %v1699
  %v2219 = vunpack.c.l.b16 %v1700
  %v2220 = vunpack.c.l.b16 %v1701
  %v2221 = vunpack.c.l.b16 %v1702
  %v2222 = vunpack.c.l.b16 %v1703
  %v2223 = vunpack.c.l.b16 %v1704
  %v2224 = vunpack.c.l.b16 %v1705
  %v2225 = vunpack.c.l.b16 %v1706
  %v2226 = vunpack.c.l.b16 %v1707
  %v2227 = vunpack.c.l.b16 %v1708
  %v2228 = vunpack.c.l.b16 %v1709
  %v2229 = vunpack.c.l.b16 %v1710
  %v2230 = vunpack.c.l.b16 %v1711
  %v2231 = vunpack.c.l.b16 %v1712
  %v2232 = vunpack.c.l.b16 %v1713
  %v2233 = vunpack.c.l.b16 %v1714
  %v2234 = vunpack.c.l.b16 %v1715
  %v2235 = vunpack.c.l.b16 %v1716
  %v2236 = vunpack.c.l.b16 %v1717
  %v2237 = vunpack.c.l.b16 %v1718
  %v2238 = vunpack.c.l.b16 %v1719
  %v2239 = vunpack.c.l.b16 %v1720
  %v2240 = vunpack.c.l.b16 %v1721
  %v2241 = vunpack.c.l.b16 %v1722
  %v2242 = vunpack.c.l.b16 %v1723
  %v2243 = vunpack.c.l.b16 %v1724
  %v2244 = vunpack.c.l.b16 %v1725
  %v2245 = vunpack.c.l.b16 %v1726
  %v2246 = vunpack.c.l.b16 %v1727
  %v2247 = vunpack.c.l.b16 %v1728
  %v2248 = vunpack.c.l.b16 %v1729
  %v2249 = vunpack.c.l.b16 %v1730
  %v2250 = vunpack.c.l.b16 %v1731
  %v2251 = vunpack.c.l.b16 %v1732
  %v2252 = vunpack.c.l.b16 %v1733
  %v2253 = vunpack.c.l.b16 %v1734
  %v2254 = vunpack.c.l.b16 %v1735
  %v2255 = vunpack.c.l.b16 %v1736
  %v2256 = vunpack.c.l.b16 %v1737
  %v2257 = vunpack.c.l.b16 %v1738
  %v2258 = vunpack.c.l.b16 %v1739
  %v2259 = vunpack.c.l.b16 %v1740
  %v2260 = vunpack.c.l.b16 %v1741
  %v2261 = vunpack.c.l.b16 %v1742
  %v2262 = vunpack.c.l.b16 %v1743
  %v2263 = vunpack.c.l.b16 %v1744
  %v2264 = vunpack.c.l.b16 %v1745
  %v2265 = vunpack.c.l.b16 %v1746
  %v2266 = vunpack.c.l.b16 %v1747
  %v2267 = vunpack.c.l.b16 %v1748
  %v2268 = vunpack.c.l.b16 %v1749
  %v2269 = vunpack.c.l.b16 %v1750
  %v2270 = vunpack.c.l.b16 %v1751
  %v2271 = vunpack.c.l.b16 %v1752
  %v2272 = vunpack.c.l.b16 %v1753
  %v2273 = vunpack.c.l.b16 %v1754
  %v2274 = vunpack.c.l.b16 %v1755
  %v2275 = vunpack.c.l.b16 %v1756
  %v2276 = vunpack.c.l.b16 %v1757
  %v2277 = vunpack.c.l.b16 %v1758
  %v2278 = vunpack.c.l.b16 %v1759
  %v2279 = vunpack.c.l.b16 %v1760
  %v2280 = vunpack.c.l.b16 %v1761
  %v2281 = vunpack.c.l.b16 %v1762
  %v2282 = vunpack.c.l.b16 %v1763
  %v2283 = vunpack.c.l.b16 %v1764
  %v2284 = vunpack.c.l.b16 %v1765
  %v2285 = vunpack.c.l.b16 %v1766
  %v2286 = vunpack.c.l.b16 %v1767
  %v2287 = vunpack.c.l.b16 %v1768
  %v2288 = vunpack.c.l.b16 %v1769
  %v2289 = vunpack.c.l.b16 %v1770
  %v2290 = vunpack.c.l.b16 %v1771
  %v2291 = vunpack.c.l.b16 %v1772
  %v2292 = vunpack.c.l.b16 %v1773
  %v2293 = vunpack.c.l.b16 %v1774
  %v2294 = vunpack.c.l.b16 %v1775
  %v2295 = vunpack.c.l.b16 %v1776
  %v2296 = vunpack.c.l.b16 %v1777
  %v2297 = vunpack.c.l.b16 %v1778
  %v2298 = vunpack.c.l.b16 %v1779
  %v2299 = vunpack.c.l.b16 %v1780
  %v2300 = vunpack.c.l.b16 %v1781
  %v2301 = vunpack.c.l.b16 %v1782
  %v2302 = vunpack.c.l.b16 %v1783
  %v2303 = vunpack.c.l.b16 %v1784
  %v2304 = vunpack.c.l.b16 %v1785
  %v2305 = vunpack.c.l.b16 %v1786
  %v2306 = vunpack.c.l.b16 %v1787
  %v2307 = vunpack.c.l.b16 %v1788
  %v2308 = vunpack.c.l.b16 %v1789
  %v2309 = vunpack.c.l.b16 %v1790
  %v2310 = vunpack.c.l.b16 %v1791
  %v2311 = vunpack.c.l.b16 %v1792
  %v2312 = vunpack.c.l.b16 %v1793
  %v2313 = vunpack.c.l.b16 %v1794
  %v2314 = vunpack.c.l.b16 %v1795
  %v2315 = vunpack.c.l.b16 %v1796
  %v2316 = vunpack.c.l.b16 %v1797
  %v2317 = vunpack.c.l.b16 %v1798
  %v2318 = vunpack.c.l.b16 %v1799
  %v2319 = vunpack.c.l.b16 %v1800
  %v2320 = vunpack.c.l.b16 %v1801
  %v2321 = vunpack.c.l.b16 %v1802
  %v2322 = vunpack.c.l.b16 %v1803
  %v2323 = vunpack.c.l.b16 %v1804
  %v2324 = vunpack.c.l.b16 %v1805
  %v2325 = vunpack.c.l.b16 %v1806
  %v2326 = vunpack.c.l.b16 %v1807
  %v2327 = vunpack.c.l.b16 %v1808
  %v2328 = vunpack.c.l.b16 %v1809
  %v2329 = vunpack.c.l.b16 %v1810
  %v2330 = vunpack.c.l.b16 %v1811
  %v2331 = vunpack.c.l.b16 %v1812
  %v2332 = vunpack.c.l.b16 %v1813
  %v2333 = vunpack.c.l.b16 %v1814
  %v2334 = vunpack.c.l.b16 %v1815
  %v2335 = vunpack.c.l.b16 %v1816
  %v2336 = vunpack.c.l.b16 %v1817
  %v2337 = vunpack.c.l.b16 %v1818
  %v2338 = vunpack.c.l.b16 %v1819
  %v2339 = vunpack.c.l.b16 %v1820
  %v2340 = vunpack.c.l.b16 %v1821
  %v2341 = vunpack.c.l.b16 %v1822
  %v2342 = vunpack.c.l.b16 %v1823
  %v2343 = vunpack.c.l.b16 %v1824
  %v2344 = vunpack.c.l.b16 %v1825
  %v2345 = vunpack.c.l.b16 %v1826
  %v2346 = vunpack.c.l.b16 %v1827
  %v2347 = vunpack.c.l.b16 %v1828
  %v2348 = vunpack.c.l.b16 %v1829
  %v2349 = vunpack.c.l.b16 %v1830
  %v2350 = vunpack.c.l.b16 %v1831
  %v2351 = vunpack.c.l.b16 %v1832
  %v2352 = vunpack.c.l.b16 %v1833
  %v2353 = vunpack.c.l.b16 %v1834
  %v2354 = vunpack.c.l.b16 %v1835
  %v2355 = vunpack.c.l.b16 %v1836
  %v2356 = vunpack.c.l.b16 %v1837
  %v2357 = vunpack.c.l.b16 %v1838
  %v2358 = vunpack.c.l.b16 %v1839
  %v2359 = vunpack.c.l.b16 %v1840
  %v2360 = vunpack.c.l.b16 %v1841
  %v2361 = vunpack.c.l.b16 %v1842
  %v2362 = vunpack.c.l.b16 %v1843
  %v2363 = vunpack.c.l.b16 %v1844
  %v2364 = vunpack.c.l.b16 %v1845
  %v2365 = vunpack.c.l.b16 %v1846
  %v2366 = vunpack.c.l.b16 %v1847
  %v2367 = vunpack.c.l.b16 %v1848
  %v2368 = vpack.c.b16 %v2113, %v2112
  %v2369 = vpack.c.b16 %v2115, %v2114
  %v2370 = vpack.c.b16 %v2117, %v2116
  %v2371 = vpack.c.b16 %v2119, %v2118
  %v2372 = vpack.c.b16 %v2121, %v2120
  %v2373 = vpack.c.b16 %v2123, %v2122
  %v2374 = vpack.c.b16 %v2125, %v2124
  %v2375 = vpack.c.b16 %v2127, %v2126
  %v2376 = vpack.c.b16 %v2129, %v2128
  %v2377 = vpack.c.b16 %v2131, %v2130
  %v2378 = vpack.c.b16 %v2133, %v2132
  %v2379 = vpack.c.b16 %v2135, %v2134
  %v2380 = vpack.c.b16 %v2137, %v2136
  %v2381 = vpack.c.b16 %v2139, %v2138
  %v2382 = vpack.c.b16 %v2141, %v2140
  %v2383 = vpack.c.b16 %v2143, %v2142
  %v2384 = vpack.c.b16 %v2145, %v2144
  %v2385 = vpack.c.b16 %v2147, %v2146
  %v2386 = vpack.c.b16 %v2149, %v2148
  %v2387 = vpack.c.b16 %v2151, %v2150
  %v2388 = vpack.c.b16 %v2153, %v2152
  %v2389 = vpack.c.b16 %v2155, %v2154
  %v2390 = vpack.c.b16 %v2157, %v2156
  %v2391 = vpack.c.b16 %v2159, %v2158
  %v2392 = vpack.c.b16 %v2161, %v2160
  %v2393 = vpack.c.b16 %v2163, %v2162
  %v2394 = vpack.c.b16 %v2165, %v2164
  %v2395 = vpack.c.b16 %v2167, %v2166
  %v2396 = vpack.c.b16 %v2169, %v2168
  %v2397 = vpack.c.b16 %v2171, %v2170
  %v2398 = vpack.c.b16 %v2173, %v2172
  %v2399 = vpack.c.b16 %v2175, %v2174
  %v2400 = vpack.c.b16 %v2177, %v2176
  %v2401 = vpack.c.b16 %v2179, %v2178
  %v2402 = vpack.c.b16 %v2181, %v2180
  %v2403 = vpack.c.b16 %v2183, %v2182
  %v2404 = vpack.c.b16 %v2185, %v2184
  %v2405 = vpack.c.b16 %v2187, %v2186
  %v2406 = vpack.c.b16 %v2189, %v2188
  %v2407 = vpack.c.b16 %v2191, %v2190
  %v2408 = vpack.c.b16 %v2193, %v2192
  %v2409 = vpack.c.b16 %v2195, %v2194
  %v2410 = vpack.c.b16 %v2197, %v2196
  %v2411 = vpack.c.b16 %v2199, %v2198
  %v2412 = vpack.c.b16 %v2201, %v2200
  %v2413 = vpack.c.b16 %v2203, %v2202
  %v2414 = vpack.c.b16 %v2205, %v2204
  %v2415 = vpack.c.b16 %v2207, %v2206
  %v2416 = vpack.c.b16 %v2209, %v2208
  %v2417 = vpack.c.b16 %v2211, %v2210
  %v2418 = vpack.c.b16 %v2213, %v2212
  %v2419 = vpack.c.b16 %v2215, %v2214
  %v2420 = vpack.c.b16 %v2217, %v2216
  %v2421 = vpack.c.b16 %v2219, %v2218
  %v2422 = vpack.c.b16 %v2221, %v2220
  %v2423 = vpack.c.b16 %v2223, %v2222
  %v2424 = vpack.c.b16 %v2225, %v2224
  %v2425 = vpack.c.b16 %v2227, %v2226
  %v2426 = vpack.c.b16 %v2229, %v2228
  %v2427 = vpack.c.b16 %v2231, %v2230
  %v2428 = vpack.c.b16 %v2233, %v2232
  %v2429 = vpack.c.b16 %v2235, %v2234
  %v2430 = vpack.c.b16 %v2237, %v2236
  %v2431 = vpack.c.b16 %v2239, %v2238
  %v2432 = vpack.c.b16 %v2241, %v2240
  %v2433 = vpack.c.b16 %v2243, %v2242
  %v2434 = vpack.c.b16 %v2245, %v2244
  %v2435 = vpack.c.b16 %v2247, %v2246
  %v2436 = vpack.c.b16 %v2249, %v2248
  %v2437 = vpack.c.b16 %v2251, %v2250
  %v2438 = vpack.c.b16 %v2253, %v2252
  %v2439 = vpack.c.b16 %v2255, %v2254
  %v2440 = vpack.c.b16 %v2257, %v2256
  %v2441 = vpack.c.b16 %v2259, %v2258
  %v2442 = vpack.c.b16 %v2261, %v2260
  %v2443 = vpack.c.b16 %v2263, %v2262
  %v2444 = vpack.c.b16 %v2265, %v2264
  %v2445 = vpack.c.b16 %v2267, %v2266
  %v2446 = vpack.c.b16 %v2269, %v2268
  %v2447 = vpack.c.b16 %v2271, %v2270
  %v2448 = vpack.c.b16 %v2273, %v2272
  %v2449 = vpack.c.b16 %v2275, %v2274
  %v2450 = vpack.c.b16 %v2277, %v2276
  %v2451 = vpack.c.b16 %v2279, %v2278
  %v2452 = vpack.c.b16 %v2281, %v2280
  %v2453 = vpack.c.b16 %v2283, %v2282
  %v2454 = vpack.c.b16 %v2285, %v2284
  %v2455 = vpack.c.b16 %v2287, %v2286
  %v2456 = vpack.c.b16 %v2289, %v2288
  %v2457 = vpack.c.b16 %v2291, %v2290
  %v2458 = vpack.c.b16 %v2293, %v2292
  %v2459 = vpack.c.b16 %v2295, %v2294
  %v2460 = vpack.c.b16 %v2297, %v2296
  %v2461 = vpack.c.b16 %v2299, %v2298
  %v2462 = vpack.c.b16 %v2301, %v2300
  %v2463 = vpack.c.b16 %v2303, %v2302
  %v2464 = vpack.c.b16 %v2305, %v2304
  %v2465 = vpack.c.b16 %v2307, %v2306
  %v2466 = vpack.c.b16 %v2309, %v2308
  %v2467 = vpack.c.b16 %v2311, %v2310
  %v2468 = vpack.c.b16 %v2313, %v2312
  %v2469 = vpack.c.b16 %v2315, %v2314
  %v2470 = vpack.c.b16 %v2317, %v2316
  %v2471 = vpack.c.b16 %v2319, %v2318
  %v2472 = vpack.c.b16 %v2321, %v2320
  %v2473 = vpack.c.b16 %v2323, %v2322
  %v2474 = vpack.c.b16 %v2325, %v2324
  %v2475 = vpack.c.b16 %v2327, %v2326
  %v2476 = vpack.c.b16 %v2329, %v2328
  %v2477 = vpack.c.b16 %v2331, %v2330
  %v2478 = vpack.c.b16 %v2333, %v2332
  %v2479 = vpack.c.b16 %v2335, %v2334
  %v2480 = vpack.c.b16 %v2337, %v2336
  %v2481 = vpack.c.b16 %v2339, %v2338
  %v2482 = vpack.c.b16 %v2341, %v2340
  %v2483 = vpack.c.b16 %v2343, %v2342
  %v2484 = vpack.c.b16 %v2345, %v2344
  %v2485 = vpack.c.b16 %v2347, %v2346
  %v2486 = vpack.c.b16 %v2349, %v2348
  %v2487 = vpack.c.b16 %v2351, %v2350
  %v2488 = vpack.c.b16 %v2353, %v2352
  %v2489 = vpack.c.b16 %v2355, %v2354
  %v2490 = vpack.c.b16 %v2357, %v2356
  %v2491 = vpack.c.b16 %v2359, %v2358
  %v2492 = vpack.c.b16 %v2361, %v2360
  %v2493 = vpack.c.b16 %v2363, %v2362
  %v2494 = vpack.c.b16 %v2365, %v2364
  %v2495 = vpack.c.b16 %v2367, %v2366
  %2624 = vmatprep.subr.bf16.mxu0 0
  %2625 = vmatpush1.bf16.msra.mxu0 %v2375
  %2626 = vmatprep.subr.bf16.mxu0 0
  %2627 = vmatpush1.bf16.msra.mxu0 %v2374
  %2628 = vmatprep.subr.bf16.mxu0 0
  %2629 = vmatpush1.bf16.msra.mxu0 %v2373
  %2630 = vmatprep.subr.bf16.mxu0 0
  %2631 = vmatpush1.bf16.msra.mxu0 %v2372
  %2632 = vmatprep.subr.bf16.mxu0 0
  %2633 = vmatpush1.bf16.msra.mxu0 %v2371
  %2634 = vmatprep.subr.bf16.mxu0 0
  %2635 = vmatpush1.bf16.msra.mxu0 %v2370
  %2636 = vmatprep.subr.bf16.mxu0 0
  %2637 = vmatpush1.bf16.msra.mxu0 %v2369
  %2638 = vmatprep.subr.bf16.mxu0 0
  %2639 = vmatpush1.bf16.msra.mxu0 %v2368
  %2640 = vmatprep.subr.bf16.mxu0 0
  %2641 = vmatpush2.bf16.msra.mxu0 %v2383
  %2642 = vmatprep.subr.bf16.mxu0 0
  %2643 = vmatpush2.bf16.msra.mxu0 %v2382
  %2644 = vmatprep.subr.bf16.mxu0 0
  %2645 = vmatpush2.bf16.msra.mxu0 %v2381
  %2646 = vmatprep.subr.bf16.mxu0 0
  %2647 = vmatpush2.bf16.msra.mxu0 %v2380
  %2648 = vmatprep.subr.bf16.mxu0 0
  %2649 = vmatpush2.bf16.msra.mxu0 %v2379
  %2650 = vmatprep.subr.bf16.mxu0 0
  %2651 = vmatpush2.bf16.msra.mxu0 %v2378
  %2652 = vmatprep.subr.bf16.mxu0 0
  %2653 = vmatpush2.bf16.msra.mxu0 %v2377
  %2654 = vmatprep.subr.bf16.mxu0 0
  %2655 = vmatpush2.bf16.msra.mxu0 %v2376
  %2656 = vmatprep.mubr.bf16.mxu0 %v1578
  %2657 = vmatmul.mubr.bf16.gmra.mxu0 %v1577
  %v2658 = vpop.f32.mrf.mxu0
  %v2659 = vadd.f32 %v1854, %v2658
  %v2660 = vpop.f32.mrf.mxu0
  %v2661 = vpop.f32.mrf.mxu0
  %v2662 = vadd.f32 %v1854, %v2661
  %v2663 = vpop.f32.mrf.mxu0
  %2664 = vdwg.mxu0
  %2665 = vmatprep.subr.bf16.mxu0 0
  %2666 = vmatpush1.bf16.msra.mxu0 %v2391
  %2667 = vmatprep.subr.bf16.mxu0 0
  %2668 = vmatpush1.bf16.msra.mxu0 %v2390
  %2669 = vmatprep.subr.bf16.mxu0 0
  %2670 = vmatpush1.bf16.msra.mxu0 %v2389
  %2671 = vmatprep.subr.bf16.mxu0 0
  %2672 = vmatpush1.bf16.msra.mxu0 %v2388
  %2673 = vmatprep.subr.bf16.mxu0 0
  %2674 = vmatpush1.bf16.msra.mxu0 %v2387
  %2675 = vmatprep.subr.bf16.mxu0 0
  %2676 = vmatpush1.bf16.msra.mxu0 %v2386
  %2677 = vmatprep.subr.bf16.mxu0 0
  %2678 = vmatpush1.bf16.msra.mxu0 %v2385
  %2679 = vmatprep.subr.bf16.mxu0 0
  %2680 = vmatpush1.bf16.msra.mxu0 %v2384
  %2681 = vmatprep.subr.bf16.mxu0 0
  %2682 = vmatpush2.bf16.msra.mxu0 %v2399
  %2683 = vmatprep.subr.bf16.mxu0 0
  %2684 = vmatpush2.bf16.msra.mxu0 %v2398
  %2685 = vmatprep.subr.bf16.mxu0 0
  %2686 = vmatpush2.bf16.msra.mxu0 %v2397
  %2687 = vmatprep.subr.bf16.mxu0 0
  %2688 = vmatpush2.bf16.msra.mxu0 %v2396
  %2689 = vmatprep.subr.bf16.mxu0 0
  %2690 = vmatpush2.bf16.msra.mxu0 %v2395
  %2691 = vmatprep.subr.bf16.mxu0 0
  %2692 = vmatpush2.bf16.msra.mxu0 %v2394
  %2693 = vmatprep.subr.bf16.mxu0 0
  %2694 = vmatpush2.bf16.msra.mxu0 %v2393
  %2695 = vmatprep.subr.bf16.mxu0 0
  %2696 = vmatpush2.bf16.msra.mxu0 %v2392
  %2697 = vmatprep.mubr.bf16.mxu0 %v1580
  %2698 = vmatmul.mubr.bf16.gmra.mxu0 %v1579
  %v2699 = vpop.f32.mrf.mxu0
  %v2700 = vadd.f32 %v2659, %v2699
  %v2701 = vpop.f32.mrf.mxu0
  %v2702 = vpop.f32.mrf.mxu0
  %v2703 = vadd.f32 %v2662, %v2702
  %v2704 = vpop.f32.mrf.mxu0
  %2705 = vdwg.mxu0
  %2706 = vmatprep.subr.bf16.mxu0 0
  %2707 = vmatpush1.bf16.msra.mxu0 %v2407
  %2708 = vmatprep.subr.bf16.mxu0 0
  %2709 = vmatpush1.bf16.msra.mxu0 %v2406
  %2710 = vmatprep.subr.bf16.mxu0 0
  %2711 = vmatpush1.bf16.msra.mxu0 %v2405
  %2712 = vmatprep.subr.bf16.mxu0 0
  %2713 = vmatpush1.bf16.msra.mxu0 %v2404
  %2714 = vmatprep.subr.bf16.mxu0 0
  %2715 = vmatpush1.bf16.msra.mxu0 %v2403
  %2716 = vmatprep.subr.bf16.mxu0 0
  %2717 = vmatpush1.bf16.msra.mxu0 %v2402
  %2718 = vmatprep.subr.bf16.mxu0 0
  %2719 = vmatpush1.bf16.msra.mxu0 %v2401
  %2720 = vmatprep.subr.bf16.mxu0 0
  %2721 = vmatpush1.bf16.msra.mxu0 %v2400
  %2722 = vmatprep.subr.bf16.mxu0 0
  %2723 = vmatpush2.bf16.msra.mxu0 %v2415
  %2724 = vmatprep.subr.bf16.mxu0 0
  %2725 = vmatpush2.bf16.msra.mxu0 %v2414
  %2726 = vmatprep.subr.bf16.mxu0 0
  %2727 = vmatpush2.bf16.msra.mxu0 %v2413
  %2728 = vmatprep.subr.bf16.mxu0 0
  %2729 = vmatpush2.bf16.msra.mxu0 %v2412
  %2730 = vmatprep.subr.bf16.mxu0 0
  %2731 = vmatpush2.bf16.msra.mxu0 %v2411
  %2732 = vmatprep.subr.bf16.mxu0 0
  %2733 = vmatpush2.bf16.msra.mxu0 %v2410
  %2734 = vmatprep.subr.bf16.mxu0 0
  %2735 = vmatpush2.bf16.msra.mxu0 %v2409
  %2736 = vmatprep.subr.bf16.mxu0 0
  %2737 = vmatpush2.bf16.msra.mxu0 %v2408
  %2738 = vmatprep.mubr.bf16.mxu0 %v1582
  %2739 = vmatmul.mubr.bf16.gmra.mxu0 %v1581
  %v2740 = vpop.f32.mrf.mxu0
  %v2741 = vadd.f32 %v2700, %v2740
  %v2742 = vpop.f32.mrf.mxu0
  %v2743 = vpop.f32.mrf.mxu0
  %v2744 = vadd.f32 %v2703, %v2743
  %v2745 = vpop.f32.mrf.mxu0
  %2746 = vdwg.mxu0
  %2747 = vmatprep.subr.bf16.mxu0 0
  %2748 = vmatpush1.bf16.msra.mxu0 %v2423
  %2749 = vmatprep.subr.bf16.mxu0 0
  %2750 = vmatpush1.bf16.msra.mxu0 %v2422
  %2751 = vmatprep.subr.bf16.mxu0 0
  %2752 = vmatpush1.bf16.msra.mxu0 %v2421
  %2753 = vmatprep.subr.bf16.mxu0 0
  %2754 = vmatpush1.bf16.msra.mxu0 %v2420
  %2755 = vmatprep.subr.bf16.mxu0 0
  %2756 = vmatpush1.bf16.msra.mxu0 %v2419
  %2757 = vmatprep.subr.bf16.mxu0 0
  %2758 = vmatpush1.bf16.msra.mxu0 %v2418
  %2759 = vmatprep.subr.bf16.mxu0 0
  %2760 = vmatpush1.bf16.msra.mxu0 %v2417
  %2761 = vmatprep.subr.bf16.mxu0 0
  %2762 = vmatpush1.bf16.msra.mxu0 %v2416
  %2763 = vmatprep.subr.bf16.mxu0 0
  %2764 = vmatpush2.bf16.msra.mxu0 %v2431
  %2765 = vmatprep.subr.bf16.mxu0 0
  %2766 = vmatpush2.bf16.msra.mxu0 %v2430
  %2767 = vmatprep.subr.bf16.mxu0 0
  %2768 = vmatpush2.bf16.msra.mxu0 %v2429
  %2769 = vmatprep.subr.bf16.mxu0 0
  %2770 = vmatpush2.bf16.msra.mxu0 %v2428
  %2771 = vmatprep.subr.bf16.mxu0 0
  %2772 = vmatpush2.bf16.msra.mxu0 %v2427
  %2773 = vmatprep.subr.bf16.mxu0 0
  %2774 = vmatpush2.bf16.msra.mxu0 %v2426
  %2775 = vmatprep.subr.bf16.mxu0 0
  %2776 = vmatpush2.bf16.msra.mxu0 %v2425
  %2777 = vmatprep.subr.bf16.mxu0 0
  %2778 = vmatpush2.bf16.msra.mxu0 %v2424
  %2779 = vmatprep.mubr.bf16.mxu0 %v1584
  %2780 = vmatmul.mubr.bf16.gmra.mxu0 %v1583
  %v2781 = vpop.f32.mrf.mxu0
  %v2782 = vadd.f32 %v2741, %v2781
  %v2783 = vpop.f32.mrf.mxu0
  %v2784 = vpop.f32.mrf.mxu0
  %v2785 = vadd.f32 %v2744, %v2784
  %v2786 = vpop.f32.mrf.mxu0
  %2787 = vdwg.mxu0
  %2788 = vmatprep.subr.bf16.mxu0 0
  %2789 = vmatpush1.bf16.msra.mxu0 %v2439
  %2790 = vmatprep.subr.bf16.mxu0 0
  %2791 = vmatpush1.bf16.msra.mxu0 %v2438
  %2792 = vmatprep.subr.bf16.mxu0 0
  %2793 = vmatpush1.bf16.msra.mxu0 %v2437
  %2794 = vmatprep.subr.bf16.mxu0 0
  %2795 = vmatpush1.bf16.msra.mxu0 %v2436
  %2796 = vmatprep.subr.bf16.mxu0 0
  %2797 = vmatpush1.bf16.msra.mxu0 %v2435
  %2798 = vmatprep.subr.bf16.mxu0 0
  %2799 = vmatpush1.bf16.msra.mxu0 %v2434
  %2800 = vmatprep.subr.bf16.mxu0 0
  %2801 = vmatpush1.bf16.msra.mxu0 %v2433
  %2802 = vmatprep.subr.bf16.mxu0 0
  %2803 = vmatpush1.bf16.msra.mxu0 %v2432
  %2804 = vmatprep.subr.bf16.mxu0 0
  %2805 = vmatpush2.bf16.msra.mxu0 %v2447
  %2806 = vmatprep.subr.bf16.mxu0 0
  %2807 = vmatpush2.bf16.msra.mxu0 %v2446
  %2808 = vmatprep.subr.bf16.mxu0 0
  %2809 = vmatpush2.bf16.msra.mxu0 %v2445
  %2810 = vmatprep.subr.bf16.mxu0 0
  %2811 = vmatpush2.bf16.msra.mxu0 %v2444
  %2812 = vmatprep.subr.bf16.mxu0 0
  %2813 = vmatpush2.bf16.msra.mxu0 %v2443
  %2814 = vmatprep.subr.bf16.mxu0 0
  %2815 = vmatpush2.bf16.msra.mxu0 %v2442
  %2816 = vmatprep.subr.bf16.mxu0 0
  %2817 = vmatpush2.bf16.msra.mxu0 %v2441
  %2818 = vmatprep.subr.bf16.mxu0 0
  %2819 = vmatpush2.bf16.msra.mxu0 %v2440
  %2820 = vmatprep.mubr.bf16.mxu0 %v1586
  %2821 = vmatmul.mubr.bf16.gmra.mxu0 %v1585
  %v2822 = vpop.f32.mrf.mxu0
  %v2823 = vadd.f32 %v2782, %v2822
  %v2824 = vpop.f32.mrf.mxu0
  %v2825 = vpop.f32.mrf.mxu0
  %v2826 = vadd.f32 %v2785, %v2825
  %v2827 = vpop.f32.mrf.mxu0
  %2828 = vdwg.mxu0
  %2829 = vmatprep.subr.bf16.mxu0 0
  %2830 = vmatpush1.bf16.msra.mxu0 %v2455
  %2831 = vmatprep.subr.bf16.mxu0 0
  %2832 = vmatpush1.bf16.msra.mxu0 %v2454
  %2833 = vmatprep.subr.bf16.mxu0 0
  %2834 = vmatpush1.bf16.msra.mxu0 %v2453
  %2835 = vmatprep.subr.bf16.mxu0 0
  %2836 = vmatpush1.bf16.msra.mxu0 %v2452
  %2837 = vmatprep.subr.bf16.mxu0 0
  %2838 = vmatpush1.bf16.msra.mxu0 %v2451
  %2839 = vmatprep.subr.bf16.mxu0 0
  %2840 = vmatpush1.bf16.msra.mxu0 %v2450
  %2841 = vmatprep.subr.bf16.mxu0 0
  %2842 = vmatpush1.bf16.msra.mxu0 %v2449
  %2843 = vmatprep.subr.bf16.mxu0 0
  %2844 = vmatpush1.bf16.msra.mxu0 %v2448
  %2845 = vmatprep.subr.bf16.mxu0 0
  %2846 = vmatpush2.bf16.msra.mxu0 %v2463
  %2847 = vmatprep.subr.bf16.mxu0 0
  %2848 = vmatpush2.bf16.msra.mxu0 %v2462
  %2849 = vmatprep.subr.bf16.mxu0 0
  %2850 = vmatpush2.bf16.msra.mxu0 %v2461
  %2851 = vmatprep.subr.bf16.mxu0 0
  %2852 = vmatpush2.bf16.msra.mxu0 %v2460
  %2853 = vmatprep.subr.bf16.mxu0 0
  %2854 = vmatpush2.bf16.msra.mxu0 %v2459
  %2855 = vmatprep.subr.bf16.mxu0 0
  %2856 = vmatpush2.bf16.msra.mxu0 %v2458
  %2857 = vmatprep.subr.bf16.mxu0 0
  %2858 = vmatpush2.bf16.msra.mxu0 %v2457
  %2859 = vmatprep.subr.bf16.mxu0 0
  %2860 = vmatpush2.bf16.msra.mxu0 %v2456
  %2861 = vmatprep.mubr.bf16.mxu0 %v1588
  %2862 = vmatmul.mubr.bf16.gmra.mxu0 %v1587
  %v2863 = vpop.f32.mrf.mxu0
  %v2864 = vadd.f32 %v2823, %v2863
  %v2865 = vpop.f32.mrf.mxu0
  %v2866 = vpop.f32.mrf.mxu0
  %v2867 = vadd.f32 %v2826, %v2866
  %v2868 = vpop.f32.mrf.mxu0
  %2869 = vdwg.mxu0
  %2870 = vmatprep.subr.bf16.mxu0 0
  %2871 = vmatpush1.bf16.msra.mxu0 %v2471
  %2872 = vmatprep.subr.bf16.mxu0 0
  %2873 = vmatpush1.bf16.msra.mxu0 %v2470
  %2874 = vmatprep.subr.bf16.mxu0 0
  %2875 = vmatpush1.bf16.msra.mxu0 %v2469
  %2876 = vmatprep.subr.bf16.mxu0 0
  %2877 = vmatpush1.bf16.msra.mxu0 %v2468
  %2878 = vmatprep.subr.bf16.mxu0 0
  %2879 = vmatpush1.bf16.msra.mxu0 %v2467
  %2880 = vmatprep.subr.bf16.mxu0 0
  %2881 = vmatpush1.bf16.msra.mxu0 %v2466
  %2882 = vmatprep.subr.bf16.mxu0 0
  %2883 = vmatpush1.bf16.msra.mxu0 %v2465
  %2884 = vmatprep.subr.bf16.mxu0 0
  %2885 = vmatpush1.bf16.msra.mxu0 %v2464
  %2886 = vmatprep.subr.bf16.mxu0 0
  %2887 = vmatpush2.bf16.msra.mxu0 %v2479
  %2888 = vmatprep.subr.bf16.mxu0 0
  %2889 = vmatpush2.bf16.msra.mxu0 %v2478
  %2890 = vmatprep.subr.bf16.mxu0 0
  %2891 = vmatpush2.bf16.msra.mxu0 %v2477
  %2892 = vmatprep.subr.bf16.mxu0 0
  %2893 = vmatpush2.bf16.msra.mxu0 %v2476
  %2894 = vmatprep.subr.bf16.mxu0 0
  %2895 = vmatpush2.bf16.msra.mxu0 %v2475
  %2896 = vmatprep.subr.bf16.mxu0 0
  %2897 = vmatpush2.bf16.msra.mxu0 %v2474
  %2898 = vmatprep.subr.bf16.mxu0 0
  %2899 = vmatpush2.bf16.msra.mxu0 %v2473
  %2900 = vmatprep.subr.bf16.mxu0 0
  %2901 = vmatpush2.bf16.msra.mxu0 %v2472
  %2902 = vmatprep.mubr.bf16.mxu0 %v1590
  %2903 = vmatmul.mubr.bf16.gmra.mxu0 %v1589
  %v2904 = vpop.f32.mrf.mxu0
  %v2905 = vadd.f32 %v2864, %v2904
  %v2906 = vpop.f32.mrf.mxu0
  %v2907 = vpop.f32.mrf.mxu0
  %v2908 = vadd.f32 %v2867, %v2907
  %v2909 = vpop.f32.mrf.mxu0
  %2910 = vdwg.mxu0
  %2911 = vmatprep.subr.bf16.mxu0 0
  %2912 = vmatpush1.bf16.msra.mxu0 %v2487
  %2913 = vmatprep.subr.bf16.mxu0 0
  %2914 = vmatpush1.bf16.msra.mxu0 %v2486
  %2915 = vmatprep.subr.bf16.mxu0 0
  %2916 = vmatpush1.bf16.msra.mxu0 %v2485
  %2917 = vmatprep.subr.bf16.mxu0 0
  %2918 = vmatpush1.bf16.msra.mxu0 %v2484
  %2919 = vmatprep.subr.bf16.mxu0 0
  %2920 = vmatpush1.bf16.msra.mxu0 %v2483
  %2921 = vmatprep.subr.bf16.mxu0 0
  %2922 = vmatpush1.bf16.msra.mxu0 %v2482
  %2923 = vmatprep.subr.bf16.mxu0 0
  %2924 = vmatpush1.bf16.msra.mxu0 %v2481
  %2925 = vmatprep.subr.bf16.mxu0 0
  %2926 = vmatpush1.bf16.msra.mxu0 %v2480
  %2927 = vmatprep.subr.bf16.mxu0 0
  %2928 = vmatpush2.bf16.msra.mxu0 %v2495
  %2929 = vmatprep.subr.bf16.mxu0 0
  %2930 = vmatpush2.bf16.msra.mxu0 %v2494
  %2931 = vmatprep.subr.bf16.mxu0 0
  %2932 = vmatpush2.bf16.msra.mxu0 %v2493
  %2933 = vmatprep.subr.bf16.mxu0 0
  %2934 = vmatpush2.bf16.msra.mxu0 %v2492
  %2935 = vmatprep.subr.bf16.mxu0 0
  %2936 = vmatpush2.bf16.msra.mxu0 %v2491
  %2937 = vmatprep.subr.bf16.mxu0 0
  %2938 = vmatpush2.bf16.msra.mxu0 %v2490
  %2939 = vmatprep.subr.bf16.mxu0 0
  %2940 = vmatpush2.bf16.msra.mxu0 %v2489
  %2941 = vmatprep.subr.bf16.mxu0 0
  %2942 = vmatpush2.bf16.msra.mxu0 %v2488
  %2943 = vmatprep.mubr.bf16.mxu0 %v1592
  %2944 = vmatmul.mubr.bf16.gmra.mxu0 %v1591
  %v2945 = vpop.f32.mrf.mxu0
  %v2946 = vadd.f32 %v2905, %v2945
  %v2947 = vpop.f32.mrf.mxu0
  %v2948 = vpop.f32.mrf.mxu0
  %v2949 = vadd.f32 %v2908, %v2948
  %v2950 = vpop.f32.mrf.mxu0
  %2951 = vdwg.mxu0
  %v2952 = vadd.f32 %v919, %v2946
  %v2953 = vadd.f32 %v920, %v2949
  %v2954 = vsel %vm83, %v2952, 0.0
  %2955 = vadd.xlane.f32.xlu0 %v2954
  %v2956 = vpop.xlane.xlu0 %2955
  %v2957 = vsel %vm83, %v2953, 0.0
  %2958 = vadd.xlane.f32.xlu0 %v2957
  %v2959 = vpop.xlane.xlu0 %2958
  %v2960 = vmul.f32 %v2956, %v882
  %v2961 = vmul.f32 %v2959, %v882
  %v2962 = vsub.f32 %v2952, %v2960
  %v2963 = vsub.f32 %v2953, %v2961
  %v2964 = vmul.f32 %v2962, %v2962
  %v2965 = vmul.f32 %v2963, %v2963
  %v2966 = vsel %vm83, %v2964, 0.0
  %2967 = vadd.xlane.f32.xlu0 %v2966
  %v2968 = vpop.xlane.xlu0 %2967
  %v2969 = vsel %vm83, %v2965, 0.0
  %2970 = vadd.xlane.f32.xlu0 %v2969
  %v2971 = vpop.xlane.xlu0 %2970
  %v2972 = vmul.f32 %v2968, %v882
  %v2973 = vmul.f32 %v2971, %v882
  %v2974 = vadd.f32 %v2972, 1e-05
  %v2975 = vadd.f32 %v2973, 1e-05
  %v2976 = vrsqrt.pop %v2974
  %v2977 = vrsqrt.pop %v2975
  %v2978 = vmul.f32 %v2962, %v2976
  %v2979 = vmul.f32 %v2963, %v2977
  %v2980 = vld [vmem:[%s15] sm:$0x1]
  %v2982 = vlaneseq
  %v2983 = vshrl.u32 %v2982, 7
  %v2984 = vsub.s32 0, %v2983
  %v2985 = vrot.slane %v2980, %v2984
  %v2987 = vmul.f32 %v2978, %v2985
  %v2988 = vmul.f32 %v2979, %v2985
  %v2989 = vld [vmem:[%s16] sm:$0x1]
  %v2991 = vlaneseq
  %v2992 = vshrl.u32 %v2991, 7
  %v2993 = vsub.s32 0, %v2992
  %v2994 = vrot.slane %v2989, %v2993
  %v2996 = vadd.f32 %v2987, %v2994
  %v2997 = vadd.f32 %v2988, %v2994
  %2998 = vst.msk [vmem:[%s17] sm:$0xff] %vm83, %v2996
  %2999 = vst.msk [vmem:[%s17 + $0x8] sm:$0xff] %vm83, %v2997
  // Predicated region
  $region70: #{transformer_encoder_forward.4} parent=0 // pred_check
    _
  $region71: #{transformer_encoder_forward.4} parent=0 // pred_check_branch
    %3001 = sbr.rel (0) target = $region73
  $region72: #{transformer_encoder_forward.4} parent=0 // pred_region
    _
  $region73: #{transformer_encoder_forward.4} parent=0 // pred_fallthru
    _
  // Predicated region
  $region74: #{transformer_encoder_forward.4} parent=0 // pred_check
    _
  $region75: #{transformer_encoder_forward.4} parent=0 // pred_check_branch
    %3003 = sbr.rel (0) target = $region77
  $region76: #{transformer_encoder_forward.4} parent=0 // pred_region
    _
  $region77: #{transformer_encoder_forward.4} parent=0 // pred_fallthru
    _

</llo_original>
